<compile_context>
chip_gen: v5e
topology: v5e:2x2
jax: 0.10.0
libtpu: 0.0.40
codegen_flags: <defaults>
</compile_context>

<pallas_src>
import jax
import jax.numpy as jnp
from jax import lax
from jax.experimental import pallas as pl
from jax.experimental.pallas import tpu as pltpu
import numpy as np

KERNEL_SIZE = 5
DILATION = 2
PAD = DILATION * (KERNEL_SIZE - 1) // 2   # = 4 ('same' padding, stride 1, split 4/4)
DEFAULT_BLOCK_BATCH = 32                  # batch rows per grid step


def pick_block_batch(n, target=DEFAULT_BLOCK_BATCH):
    """>=16 (bf16 sublane tile), <=target; for batches >32 keep >=2 grid steps
    so both v7x TensorCores get work via the 'parallel' grid axis."""
    half = max(16, 16 * ((n + 31) // 32))     # ~ceil(n/2) rounded up to 16
    return int(min(target, half))


# ----------------------------------------------------------------------------- #
# Pallas kernel: one batch block (NB rows) of the full Classifier forward pass.
# Activations are stacked on sublanes: row = channel * NB + sample.
# ----------------------------------------------------------------------------- #
def classifier_kernel(x_ref,
                      cw1_ref, cb1_ref, s1_ref,
                      cw2_ref, cb2_ref, s2_ref,
                      cw3_ref, cb3_ref, s3_ref,
                      fw1_ref, fb1_ref, fw2_ref, fb2_ref, fw3_ref, fb3_ref,
                      fw4_ref, fb4_ref, fw5_ref, fb5_ref, fw6_ref, fb6_ref,
                      out_ref, pad_ref, tap_ref, act_ref, flat_ref):
    f32, bf16 = jnp.float32, jnp.bfloat16
    NB = out_ref.shape[0]

    def dot(a, b):
        return jnp.dot(a, b, preferred_element_type=f32)

    conv_w = (cw1_ref, cw2_ref, cw3_ref)   # (Cout*NB, K*Cin*NB) bf16 block-diag
    conv_b = (cb1_ref, cb2_ref, cb3_ref)   # (Cout*NB, 1)        f32
    pools = (s1_ref, s2_ref, s3_ref)       # (L-2, Lo)           bf16 even-col select

    h = x_ref[...]                         # (NB, L1) f32   (in_channels == 1)

    # --- three [Conv1d('same', dilated) -> Tanh -> MaxPool1d(3,2)] blocks ----
    for li in range(3):
        w_ref, b_ref, s_ref = conv_w[li], conv_b[li], pools[li]
        rows_out = w_ref.shape[0]
        rows_in = w_ref.shape[1] // KERNEL_SIZE
        L = s_ref.shape[0] + 2
        Lo = s_ref.shape[1]

        # zero-padded layer input: zero ONLY the PAD-wide halo columns
        halo = jnp.zeros((rows_in, PAD), bf16)
        pad_ref[0:rows_in, 0:PAD] = halo
        pad_ref[0:rows_in, PAD + L:2 * PAD + L] = halo
        pad_ref[0:rows_in, PAD:PAD + L] = h.astype(bf16)

        # stack the 5 dilated tap slices into one contiguous matmul operand
        for t in range(KERNEL_SIZE):
            tap_ref[t * rows_in:(t + 1) * rows_in, 0:L] = \
                pad_ref[0:rows_in, t * DILATION:t * DILATION + L]

        # fused dilated conv: ONE matmul over all taps, then bias + tanh (f32)
        hc = jnp.tanh(dot(w_ref[...], tap_ref[0:KERNEL_SIZE * rows_in, 0:L])
                      + b_ref[...])                          # (rows_out, L)

        # MaxPool1d(3,2): running max over 3 shifted slices (VPU) + one
        # even-column down-select matmul.
        act_ref[0:rows_out, 0:L] = hc.astype(bf16)
        runmax = jnp.maximum(
            jnp.maximum(act_ref[0:rows_out, 0:L - 2],
                        act_ref[0:rows_out, 1:L - 1]),
            act_ref[0:rows_out, 2:L])                        # (rows_out, L-2)
        h = dot(runmax, s_ref[...])                          # (rows_out, Lo) f32

    # --- Flatten (PyTorch order c*L + l) into lane-aligned (NB, 16*32) -------
    c_final = conv_w[2].shape[0] // NB        # 16
    l_final = pools[2].shape[1]               # 30
    stride = flat_ref.shape[1] // c_final     # 32 (padded per-channel stride)
    flat_ref[...] = jnp.zeros_like(flat_ref)  # gap lanes must be zero
    hb = h.astype(bf16)
    for c in range(c_final):
        flat_ref[:, c * stride:c * stride + l_final] = hb[c * NB:(c + 1) * NB, :]

    # --- FC stack, batched: one matmul per Linear ------------------------------
    v = jnp.tanh(dot(flat_ref[...], fw1_ref[...]) + fb1_ref[...])
    for w_ref, b_ref in ((fw2_ref, fb2_ref), (fw3_ref, fb3_ref),
                         (fw4_ref, fb4_ref), (fw5_ref, fb5_ref)):
        v = jnp.tanh(dot(v.astype(bf16), w_ref[...]) + b_ref[...])
    logits = dot(v.astype(bf16), fw6_ref[...]) + fb6_ref[...]     # (NB, out)

    # --- Softmax(dim=-1); divide moved onto the EUP via approx reciprocal -----
    m = jnp.max(logits, axis=-1, keepdims=True)
    e = jnp.exp(logits - m)
    inv = pl.reciprocal(jnp.sum(e, axis=-1, keepdims=True), approx=True)
    out_ref[...] = (e * inv).astype(out_ref.dtype)


# ----------------------------------------------------------------------------- #
# Parameter init (deterministic, PyTorch-native shapes) + kernel-layout packing.
# ----------------------------------------------------------------------------- #
def init_torch_params(key, in_channels=1, output_size=6, flattened=480):
    hid = 4
    conv_specs = [(hid, in_channels), (2 * hid, hid), (4 * hid, 2 * hid)]
    fc_specs = [(256, flattened), (128, 256), (64, 128), (32, 64), (16, 32),
                (output_size, 16)]
    keys = jax.random.split(key, 2 * (len(conv_specs) + len(fc_specs)))
    params, ki = [], 0
    for (o, i) in conv_specs:
        bound = 1.0 / float(i * KERNEL_SIZE) ** 0.5
        params.append(jax.random.uniform(keys[ki], (o, i, KERNEL_SIZE), jnp.float32,
                                         -bound, bound)); ki += 1
        params.append(jax.random.uniform(keys[ki], (o,), jnp.float32,
                                         -bound, bound)); ki += 1
    for (o, i) in fc_specs:
        bound = 1.0 / float(i) ** 0.5
        params.append(jax.random.uniform(keys[ki], (o, i), jnp.float32,
                                         -bound, bound)); ki += 1
        params.append(jax.random.uniform(keys[ki], (o,), jnp.float32,
                                         -bound, bound)); ki += 1
    return params


def to_kernel_layout(torch_params, nb, window_length):
    """Pack PyTorch-shaped params into the batched, bf16 kernel layout."""
    cw1, cb1, cw2, cb2, cw3, cb3, *fc = torch_params
    bf16 = jnp.bfloat16
    eye = jnp.eye(nb, dtype=jnp.float32)

    def conv_block(w):   # (O,I,K) -> (O*nb, K*I*nb) block-diag, taps fused on K
        o, i, k = w.shape
        blk = jnp.einsum('oik,nm->onkim', w, eye).reshape(o * nb, k * i * nb)
        return blk.astype(bf16)

    def conv_bias(b):    # (O,) -> (O*nb, 1), row = o*nb + n
        return jnp.repeat(b, nb).reshape(-1, 1).astype(jnp.float32)

    def pool_mat(length):  # even-column down-select applied after the running max
        lo = (length - 3) // 2 + 1
        j = np.arange(length - 2)[:, None]
        i = np.arange(lo)[None, :]
        s = (j == 2 * i).astype(np.float32)
        return jnp.asarray(s, dtype=bf16), lo

    kp = []
    cur_len = window_length
    for w, b in ((cw1, cb1), (cw2, cb2), (cw3, cb3)):
        kp.append(conv_block(w))
        kp.append(conv_bias(b))
        s, cur_len = pool_mat(cur_len)
        kp.append(s)

    # FC1: pad per-channel flatten stride to a multiple of 32 lanes and insert
    # matching zero rows, so the kernel's flatten stores are lane-aligned.
    c_final = cw3.shape[0]                      # 16
    l_final = cur_len                           # 30 for window_length=250
    stride = ((l_final + 31) // 32) * 32        # 32
    w1t = jnp.transpose(fc[0])                  # (c_final*l_final, 256)
    w1p = jnp.pad(w1t.reshape(c_final, l_final, -1),
                  ((0, 0), (0, stride - l_final), (0, 0))
                  ).reshape(c_final * stride, -1)
    kp.append(w1p.astype(bf16))
    kp.append(fc[1].reshape(1, -1).astype(jnp.float32))
    for idx in range(2, len(fc), 2):
        kp.append(jnp.transpose(fc[idx]).astype(bf16))              # (in, out)
        kp.append(fc[idx + 1].reshape(1, -1).astype(jnp.float32))   # (1, out)
    return kp


# ----------------------------------------------------------------------------- #
# Wrapper calling pallas_call (grid over batch blocks, parallel semantics).
# ----------------------------------------------------------------------------- #
def classifier_forward(x, kernel_params, nb, output_size=6):
    n, c_in, l1 = x.shape
    assert c_in == 1, "kernel assumes in_channels == 1 (module default)"
    # TODO(synk): in_channels > 1 would need a (C_in*NB, L) input repack.
    assert kernel_params[0].shape[1] == KERNEL_SIZE * c_in * nb, \
        "kernel params were packed for a different batch block size"

    x2 = x[:, 0, :].astype(jnp.float32)                 # (N, L1)
    n_pad = ((n + nb - 1) // nb) * nb
    if n_pad != n:
        x2 = jnp.concatenate(
            [x2, jnp.zeros((n_pad - n, l1), x2.dtype)], axis=0)

    def const_map(ndim):
        return lambda i: (0,) * ndim

    in_specs = [pl.BlockSpec((nb, l1), lambda i: (i, 0))]
    for w in kernel_params:
        in_specs.append(pl.BlockSpec(w.shape, const_map(w.ndim)))

    cw3 = kernel_params[6]
    pad_rows = cw3.shape[1] // KERNEL_SIZE      # = 8 * nb (max Cin * nb)
    act_rows = cw3.shape[0]                     # = 16 * nb (max Cout * nb)
    flat_dim = kernel_params[9].shape[0]        # = 16 * 32 = 512

    out = pl.pallas_call(
        classifier_kernel,
        out_shape=jax.ShapeDtypeStruct((n_pad, output_size), jnp.float32),
        grid=(n_pad // nb,),
        in_specs=in_specs,
        out_specs=pl.BlockSpec((nb, output_size), lambda i: (i, 0)),
        scratch_shapes=[
            pltpu.VMEM((pad_rows, l1 + 2 * PAD), jnp.bfloat16),      # padded conv input
            pltpu.VMEM((KERNEL_SIZE * pad_rows, l1), jnp.bfloat16),  # stacked conv taps
            pltpu.VMEM((act_rows, l1), jnp.bfloat16),                # conv+tanh output
            pltpu.VMEM((nb, flat_dim), jnp.bfloat16),                # flattened FC input
        ],
        compiler_params=pltpu.CompilerParams(
            dimension_semantics=("parallel",)),
    )(x2, *kernel_params)
    return out[:n]


# ----------------------------------------------------------------------------- #
# Pure-JAX reference (independent implementation, PyTorch semantics, f32).
# ----------------------------------------------------------------------------- #
def reference_forward(x, tp):
    cw1, cb1, cw2, cb2, cw3, cb3, *fc = tp
    h = x
    for w, b in [(cw1, cb1), (cw2, cb2), (cw3, cb3)]:
        h = lax.conv_general_dilated(h, w, window_strides=(1,),
                                     padding=[(PAD, PAD)],
                                     rhs_dilation=(DILATION,),
                                     dimension_numbers=('NCH', 'OIH', 'NCH'))
        h = jnp.tanh(h + b[None, :, None])
        h = lax.reduce_window(h, -jnp.inf, lax.max,
                              (1, 1, 3), (1, 1, 2), 'VALID')
    h = h.reshape(h.shape[0], -1)
    for i in range(0, len(fc) - 2, 2):
        h = jnp.tanh(h @ fc[i].T + fc[i + 1])
    logits = h @ fc[-2].T + fc[-1]
    return jax.nn.softmax(logits, axis=-1)


# ----------------------------------------------------------------------------- #
if __name__ == "__main__":
    N, C_IN, WINDOW, OUT = 2, 1, 250, 6      # window_length=250 -> flattened=480
    key = jax.random.PRNGKey(0)
    kx, kw = jax.random.split(key)
    x = jax.random.normal(kx, (N, C_IN, WINDOW), jnp.float32)

    torch_params = init_torch_params(kw, in_channels=C_IN, output_size=OUT,
                                     flattened=480)
    nb = pick_block_batch(N)
    kernel_params = to_kernel_layout(torch_params, nb=nb, window_length=WINDOW)

    out = classifier_forward(x, kernel_params, nb=nb, output_size=OUT)
    out = jax.block_until_ready(out)

    ref = reference_forward(x, torch_params)
    np.testing.assert_allclose(np.asarray(out), np.asarray(ref),
                               rtol=2e-2, atol=2e-2)
    assert out.shape == (N, OUT)
    assert np.allclose(np.asarray(out).sum(axis=-1), 1.0, atol=5e-3)

    print("KERNEL_OK")
</pallas_src>

<mosaic_0001>
module attributes {stable_mosaic.version = 11 : i64} {
  func.func @classifier_kernel(%arg0: i32, %arg1: memref<16x250xf32, #tpu.memory_space<vmem>>, %arg2: memref<64x80xbf16, #tpu.memory_space<vmem>>, %arg3: memref<64x1xf32, #tpu.memory_space<vmem>>, %arg4: memref<248x124xbf16, #tpu.memory_space<vmem>>, %arg5: memref<128x320xbf16, #tpu.memory_space<vmem>>, %arg6: memref<128x1xf32, #tpu.memory_space<vmem>>, %arg7: memref<122x61xbf16, #tpu.memory_space<vmem>>, %arg8: memref<256x640xbf16, #tpu.memory_space<vmem>>, %arg9: memref<256x1xf32, #tpu.memory_space<vmem>>, %arg10: memref<59x30xbf16, #tpu.memory_space<vmem>>, %arg11: memref<512x256xbf16, #tpu.memory_space<vmem>>, %arg12: memref<1x256xf32, #tpu.memory_space<vmem>>, %arg13: memref<256x128xbf16, #tpu.memory_space<vmem>>, %arg14: memref<1x128xf32, #tpu.memory_space<vmem>>, %arg15: memref<128x64xbf16, #tpu.memory_space<vmem>>, %arg16: memref<1x64xf32, #tpu.memory_space<vmem>>, %arg17: memref<64x32xbf16, #tpu.memory_space<vmem>>, %arg18: memref<1x32xf32, #tpu.memory_space<vmem>>, %arg19: memref<32x16xbf16, #tpu.memory_space<vmem>>, %arg20: memref<1x16xf32, #tpu.memory_space<vmem>>, %arg21: memref<16x6xbf16, #tpu.memory_space<vmem>>, %arg22: memref<1x6xf32, #tpu.memory_space<vmem>>, %arg23: memref<16x6xf32, #tpu.memory_space<vmem>>, %arg24: memref<128x258xbf16, #tpu.memory_space<vmem>>, %arg25: memref<640x250xbf16, #tpu.memory_space<vmem>>, %arg26: memref<256x250xbf16, #tpu.memory_space<vmem>>, %arg27: memref<16x512xbf16, #tpu.memory_space<vmem>>) attributes {dimension_semantics = [#tpu.dimension_semantics<parallel>], iteration_bounds = array<i64: 1>, scalar_prefetch = 0 : i64, scratch_operands = 4 : i64, tpu.core_type = #tpu.core_type<tc>, window_params = [{transform_indices = @transform_0, window_bounds = array<i64: 16, 250>}, {pipeline_mode = #tpu.pipeline_mode<synchronous>, transform_indices = @transform_1, window_bounds = array<i64: 64, 80>}, {pipeline_mode = #tpu.pipeline_mode<synchronous>, transform_indices = @transform_2, window_bounds = array<i64: 64, 1>}, {pipeline_mode = #tpu.pipeline_mode<synchronous>, transform_indices = @transform_3, window_bounds = array<i64: 248, 124>}, {pipeline_mode = #tpu.pipeline_mode<synchronous>, transform_indices = @transform_4, window_bounds = array<i64: 128, 320>}, {pipeline_mode = #tpu.pipeline_mode<synchronous>, transform_indices = @transform_5, window_bounds = array<i64: 128, 1>}, {pipeline_mode = #tpu.pipeline_mode<synchronous>, transform_indices = @transform_6, window_bounds = array<i64: 122, 61>}, {pipeline_mode = #tpu.pipeline_mode<synchronous>, transform_indices = @transform_7, window_bounds = array<i64: 256, 640>}, {pipeline_mode = #tpu.pipeline_mode<synchronous>, transform_indices = @transform_8, window_bounds = array<i64: 256, 1>}, {pipeline_mode = #tpu.pipeline_mode<synchronous>, transform_indices = @transform_9, window_bounds = array<i64: 59, 30>}, {pipeline_mode = #tpu.pipeline_mode<synchronous>, transform_indices = @transform_10, window_bounds = array<i64: 512, 256>}, {pipeline_mode = #tpu.pipeline_mode<synchronous>, transform_indices = @transform_11, window_bounds = array<i64: 1, 256>}, {pipeline_mode = #tpu.pipeline_mode<synchronous>, transform_indices = @transform_12, window_bounds = array<i64: 256, 128>}, {pipeline_mode = #tpu.pipeline_mode<synchronous>, transform_indices = @transform_13, window_bounds = array<i64: 1, 128>}, {pipeline_mode = #tpu.pipeline_mode<synchronous>, transform_indices = @transform_14, window_bounds = array<i64: 128, 64>}, {pipeline_mode = #tpu.pipeline_mode<synchronous>, transform_indices = @transform_15, window_bounds = array<i64: 1, 64>}, {pipeline_mode = #tpu.pipeline_mode<synchronous>, transform_indices = @transform_16, window_bounds = array<i64: 64, 32>}, {pipeline_mode = #tpu.pipeline_mode<synchronous>, transform_indices = @transform_17, window_bounds = array<i64: 1, 32>}, {pipeline_mode = #tpu.pipeline_mode<synchronous>, transform_indices = @transform_18, window_bounds = array<i64: 32, 16>}, {pipeline_mode = #tpu.pipeline_mode<synchronous>, transform_indices = @transform_19, window_bounds = array<i64: 1, 16>}, {pipeline_mode = #tpu.pipeline_mode<synchronous>, transform_indices = @transform_20, window_bounds = array<i64: 16, 6>}, {pipeline_mode = #tpu.pipeline_mode<synchronous>, transform_indices = @transform_21, window_bounds = array<i64: 1, 6>}, {transform_indices = @transform_22, window_bounds = array<i64: 16, 6>}]} {
    %c0 = arith.constant 0 : index
    %c0_0 = arith.constant 0 : index
    %0 = vector.load %arg1[%c0, %c0_0] : memref<16x250xf32, #tpu.memory_space<vmem>>, vector<16x250xf32>
    %cst = arith.constant 0.000000e+00 : bf16
    %1 = vector.broadcast %cst : bf16 to vector<16x4xbf16>
    %c0_1 = arith.constant 0 : index
    %c0_2 = arith.constant 0 : index
    %2 = vector.load %arg24[%c0_1, %c0_2] : memref<128x258xbf16, #tpu.memory_space<vmem>>, vector<16x4xbf16>
    tpu.vector_store %arg24[%c0_1, %c0_2], %1 {strides = array<i32>} : memref<128x258xbf16, #tpu.memory_space<vmem>>, vector<16x4xbf16>,
    %c0_3 = arith.constant 0 : index
    %c254 = arith.constant 254 : index
    %3 = vector.load %arg24[%c0_3, %c254] : memref<128x258xbf16, #tpu.memory_space<vmem>>, vector<16x4xbf16>
    tpu.vector_store %arg24[%c0_3, %c254], %1 {strides = array<i32>} : memref<128x258xbf16, #tpu.memory_space<vmem>>, vector<16x4xbf16>,
    %4 = arith.truncf %0 : vector<16x250xf32> to vector<16x250xbf16>
    %c0_4 = arith.constant 0 : index
    %c4 = arith.constant 4 : index
    %5 = vector.load %arg24[%c0_4, %c4] : memref<128x258xbf16, #tpu.memory_space<vmem>>, vector<16x250xbf16>
    tpu.vector_store %arg24[%c0_4, %c4], %4 {strides = array<i32>} : memref<128x258xbf16, #tpu.memory_space<vmem>>, vector<16x250xbf16>,
    %c0_5 = arith.constant 0 : index
    %c0_6 = arith.constant 0 : index
    %6 = vector.load %arg24[%c0_5, %c0_6] : memref<128x258xbf16, #tpu.memory_space<vmem>>, vector<16x250xbf16>
    %c0_7 = arith.constant 0 : index
    %c0_8 = arith.constant 0 : index
    %7 = vector.load %arg25[%c0_7, %c0_8] : memref<640x250xbf16, #tpu.memory_space<vmem>>, vector<16x250xbf16>
    tpu.vector_store %arg25[%c0_7, %c0_8], %6 {strides = array<i32>} : memref<640x250xbf16, #tpu.memory_space<vmem>>, vector<16x250xbf16>,
    %c0_9 = arith.constant 0 : index
    %c2 = arith.constant 2 : index
    %8 = vector.load %arg24[%c0_9, %c2] : memref<128x258xbf16, #tpu.memory_space<vmem>>, vector<16x250xbf16>
    %c16 = arith.constant 16 : index
    %c0_10 = arith.constant 0 : index
    %9 = vector.load %arg25[%c16, %c0_10] : memref<640x250xbf16, #tpu.memory_space<vmem>>, vector<16x250xbf16>
    tpu.vector_store %arg25[%c16, %c0_10], %8 {strides = array<i32>} : memref<640x250xbf16, #tpu.memory_space<vmem>>, vector<16x250xbf16>,
    %c0_11 = arith.constant 0 : index
    %c4_12 = arith.constant 4 : index
    %10 = vector.load %arg24[%c0_11, %c4_12] : memref<128x258xbf16, #tpu.memory_space<vmem>>, vector<16x250xbf16>
    %c32 = arith.constant 32 : index
    %c0_13 = arith.constant 0 : index
    %11 = vector.load %arg25[%c32, %c0_13] : memref<640x250xbf16, #tpu.memory_space<vmem>>, vector<16x250xbf16>
    tpu.vector_store %arg25[%c32, %c0_13], %10 {strides = array<i32>} : memref<640x250xbf16, #tpu.memory_space<vmem>>, vector<16x250xbf16>,
    %c0_14 = arith.constant 0 : index
    %c6 = arith.constant 6 : index
    %12 = vector.load %arg24[%c0_14, %c6] : memref<128x258xbf16, #tpu.memory_space<vmem>>, vector<16x250xbf16>
    %c48 = arith.constant 48 : index
    %c0_15 = arith.constant 0 : index
    %13 = vector.load %arg25[%c48, %c0_15] : memref<640x250xbf16, #tpu.memory_space<vmem>>, vector<16x250xbf16>
    tpu.vector_store %arg25[%c48, %c0_15], %12 {strides = array<i32>} : memref<640x250xbf16, #tpu.memory_space<vmem>>, vector<16x250xbf16>,
    %c0_16 = arith.constant 0 : index
    %c8 = arith.constant 8 : index
    %14 = vector.load %arg24[%c0_16, %c8] : memref<128x258xbf16, #tpu.memory_space<vmem>>, vector<16x250xbf16>
    %c64 = arith.constant 64 : index
    %c0_17 = arith.constant 0 : index
    %15 = vector.load %arg25[%c64, %c0_17] : memref<640x250xbf16, #tpu.memory_space<vmem>>, vector<16x250xbf16>
    tpu.vector_store %arg25[%c64, %c0_17], %14 {strides = array<i32>} : memref<640x250xbf16, #tpu.memory_space<vmem>>, vector<16x250xbf16>,
    %c0_18 = arith.constant 0 : index
    %c0_19 = arith.constant 0 : index
    %16 = vector.load %arg2[%c0_18, %c0_19] : memref<64x80xbf16, #tpu.memory_space<vmem>>, vector<64x80xbf16>
    %c0_20 = arith.constant 0 : index
    %c0_21 = arith.constant 0 : index
    %17 = vector.load %arg25[%c0_20, %c0_21] : memref<640x250xbf16, #tpu.memory_space<vmem>>, vector<80x250xbf16>
    %cst_22 = arith.constant dense<0.000000e+00> : vector<64x250xf32>
    %18 = tpu.matmul %16, %17, %cst_22 {dimension_numbers = #tpu.dot_dimension_numbers<[1], [0], [0], [1], [0, 0, 1, 1], [], []>} : vector<64x80xbf16>, vector<80x250xbf16>, vector<64x250xf32> -> vector<64x250xf32>
    %c0_23 = arith.constant 0 : index
    %c0_24 = arith.constant 0 : index
    %19 = vector.load %arg3[%c0_23, %c0_24] : memref<64x1xf32, #tpu.memory_space<vmem>>, vector<64x1xf32>
    %20 = vector.broadcast %19 : vector<64x1xf32> to vector<64x250xf32>
    %21 = arith.addf %18, %20 : vector<64x250xf32>
    %22 = math.tanh %21 : vector<64x250xf32>
    %23 = arith.truncf %22 : vector<64x250xf32> to vector<64x250xbf16>
    %c0_25 = arith.constant 0 : index
    %c0_26 = arith.constant 0 : index
    %24 = vector.load %arg26[%c0_25, %c0_26] : memref<256x250xbf16, #tpu.memory_space<vmem>>, vector<64x250xbf16>
    tpu.vector_store %arg26[%c0_25, %c0_26], %23 {strides = array<i32>} : memref<256x250xbf16, #tpu.memory_space<vmem>>, vector<64x250xbf16>,
    %c0_27 = arith.constant 0 : index
    %c0_28 = arith.constant 0 : index
    %25 = vector.load %arg26[%c0_27, %c0_28] : memref<256x250xbf16, #tpu.memory_space<vmem>>, vector<64x248xbf16>
    %c0_29 = arith.constant 0 : index
    %c1 = arith.constant 1 : index
    %26 = vector.load %arg26[%c0_29, %c1] : memref<256x250xbf16, #tpu.memory_space<vmem>>, vector<64x248xbf16>
    %27 = arith.maximumf %25, %26 : vector<64x248xbf16>
    %c0_30 = arith.constant 0 : index
    %c2_31 = arith.constant 2 : index
    %28 = vector.load %arg26[%c0_30, %c2_31] : memref<256x250xbf16, #tpu.memory_space<vmem>>, vector<64x248xbf16>
    %29 = arith.maximumf %27, %28 : vector<64x248xbf16>
    %c0_32 = arith.constant 0 : index
    %c0_33 = arith.constant 0 : index
    %30 = vector.load %arg4[%c0_32, %c0_33] : memref<248x124xbf16, #tpu.memory_space<vmem>>, vector<248x124xbf16>
    %cst_34 = arith.constant dense<0.000000e+00> : vector<64x124xf32>
    %31 = tpu.matmul %29, %30, %cst_34 {dimension_numbers = #tpu.dot_dimension_numbers<[1], [0], [0], [1], [0, 0, 1, 1], [], []>} : vector<64x248xbf16>, vector<248x124xbf16>, vector<64x124xf32> -> vector<64x124xf32>
    %cst_35 = arith.constant 0.000000e+00 : bf16
    %32 = vector.broadcast %cst_35 : bf16 to vector<64x4xbf16>
    %c0_36 = arith.constant 0 : index
    %c0_37 = arith.constant 0 : index
    %33 = vector.load %arg24[%c0_36, %c0_37] : memref<128x258xbf16, #tpu.memory_space<vmem>>, vector<64x4xbf16>
    tpu.vector_store %arg24[%c0_36, %c0_37], %32 {strides = array<i32>} : memref<128x258xbf16, #tpu.memory_space<vmem>>, vector<64x4xbf16>,
    %c0_38 = arith.constant 0 : index
    %c128 = arith.constant 128 : index
    %34 = vector.load %arg24[%c0_38, %c128] : memref<128x258xbf16, #tpu.memory_space<vmem>>, vector<64x4xbf16>
    tpu.vector_store %arg24[%c0_38, %c128], %32 {strides = array<i32>} : memref<128x258xbf16, #tpu.memory_space<vmem>>, vector<64x4xbf16>,
    %35 = arith.truncf %31 : vector<64x124xf32> to vector<64x124xbf16>
    %c0_39 = arith.constant 0 : index
    %c4_40 = arith.constant 4 : index
    %36 = vector.load %arg24[%c0_39, %c4_40] : memref<128x258xbf16, #tpu.memory_space<vmem>>, vector<64x124xbf16>
    tpu.vector_store %arg24[%c0_39, %c4_40], %35 {strides = array<i32>} : memref<128x258xbf16, #tpu.memory_space<vmem>>, vector<64x124xbf16>,
    %c0_41 = arith.constant 0 : index
    %c0_42 = arith.constant 0 : index
    %37 = vector.load %arg24[%c0_41, %c0_42] : memref<128x258xbf16, #tpu.memory_space<vmem>>, vector<64x124xbf16>
    %c0_43 = arith.constant 0 : index
    %c0_44 = arith.constant 0 : index
    %38 = vector.load %arg25[%c0_43, %c0_44] : memref<640x250xbf16, #tpu.memory_space<vmem>>, vector<64x124xbf16>
    tpu.vector_store %arg25[%c0_43, %c0_44], %37 {strides = array<i32>} : memref<640x250xbf16, #tpu.memory_space<vmem>>, vector<64x124xbf16>,
    %c0_45 = arith.constant 0 : index
    %c2_46 = arith.constant 2 : index
    %39 = vector.load %arg24[%c0_45, %c2_46] : memref<128x258xbf16, #tpu.memory_space<vmem>>, vector<64x124xbf16>
    %c64_47 = arith.constant 64 : index
    %c0_48 = arith.constant 0 : index
    %40 = vector.load %arg25[%c64_47, %c0_48] : memref<640x250xbf16, #tpu.memory_space<vmem>>, vector<64x124xbf16>
    tpu.vector_store %arg25[%c64_47, %c0_48], %39 {strides = array<i32>} : memref<640x250xbf16, #tpu.memory_space<vmem>>, vector<64x124xbf16>,
    %c0_49 = arith.constant 0 : index
    %c4_50 = arith.constant 4 : index
    %41 = vector.load %arg24[%c0_49, %c4_50] : memref<128x258xbf16, #tpu.memory_space<vmem>>, vector<64x124xbf16>
    %c128_51 = arith.constant 128 : index
    %c0_52 = arith.constant 0 : index
    %42 = vector.load %arg25[%c128_51, %c0_52] : memref<640x250xbf16, #tpu.memory_space<vmem>>, vector<64x124xbf16>
    tpu.vector_store %arg25[%c128_51, %c0_52], %41 {strides = array<i32>} : memref<640x250xbf16, #tpu.memory_space<vmem>>, vector<64x124xbf16>,
    %c0_53 = arith.constant 0 : index
    %c6_54 = arith.constant 6 : index
    %43 = vector.load %arg24[%c0_53, %c6_54] : memref<128x258xbf16, #tpu.memory_space<vmem>>, vector<64x124xbf16>
    %c192 = arith.constant 192 : index
    %c0_55 = arith.constant 0 : index
    %44 = vector.load %arg25[%c192, %c0_55] : memref<640x250xbf16, #tpu.memory_space<vmem>>, vector<64x124xbf16>
    tpu.vector_store %arg25[%c192, %c0_55], %43 {strides = array<i32>} : memref<640x250xbf16, #tpu.memory_space<vmem>>, vector<64x124xbf16>,
    %c0_56 = arith.constant 0 : index
    %c8_57 = arith.constant 8 : index
    %45 = vector.load %arg24[%c0_56, %c8_57] : memref<128x258xbf16, #tpu.memory_space<vmem>>, vector<64x124xbf16>
    %c256 = arith.constant 256 : index
    %c0_58 = arith.constant 0 : index
    %46 = vector.load %arg25[%c256, %c0_58] : memref<640x250xbf16, #tpu.memory_space<vmem>>, vector<64x124xbf16>
    tpu.vector_store %arg25[%c256, %c0_58], %45 {strides = array<i32>} : memref<640x250xbf16, #tpu.memory_space<vmem>>, vector<64x124xbf16>,
    %c0_59 = arith.constant 0 : index
    %c0_60 = arith.constant 0 : index
    %47 = vector.load %arg5[%c0_59, %c0_60] : memref<128x320xbf16, #tpu.memory_space<vmem>>, vector<128x320xbf16>
    %c0_61 = arith.constant 0 : index
    %c0_62 = arith.constant 0 : index
    %48 = vector.load %arg25[%c0_61, %c0_62] : memref<640x250xbf16, #tpu.memory_space<vmem>>, vector<320x124xbf16>
    %cst_63 = arith.constant dense<0.000000e+00> : vector<128x124xf32>
    %49 = tpu.matmul %47, %48, %cst_63 {dimension_numbers = #tpu.dot_dimension_numbers<[1], [0], [0], [1], [0, 0, 1, 1], [], []>} : vector<128x320xbf16>, vector<320x124xbf16>, vector<128x124xf32> -> vector<128x124xf32>
    %c0_64 = arith.constant 0 : index
    %c0_65 = arith.constant 0 : index
    %50 = vector.load %arg6[%c0_64, %c0_65] : memref<128x1xf32, #tpu.memory_space<vmem>>, vector<128x1xf32>
    %51 = vector.broadcast %50 : vector<128x1xf32> to vector<128x124xf32>
    %52 = arith.addf %49, %51 : vector<128x124xf32>
    %53 = math.tanh %52 : vector<128x124xf32>
    %54 = arith.truncf %53 : vector<128x124xf32> to vector<128x124xbf16>
    %c0_66 = arith.constant 0 : index
    %c0_67 = arith.constant 0 : index
    %55 = vector.load %arg26[%c0_66, %c0_67] : memref<256x250xbf16, #tpu.memory_space<vmem>>, vector<128x124xbf16>
    tpu.vector_store %arg26[%c0_66, %c0_67], %54 {strides = array<i32>} : memref<256x250xbf16, #tpu.memory_space<vmem>>, vector<128x124xbf16>,
    %c0_68 = arith.constant 0 : index
    %c0_69 = arith.constant 0 : index
    %56 = vector.load %arg26[%c0_68, %c0_69] : memref<256x250xbf16, #tpu.memory_space<vmem>>, vector<128x122xbf16>
    %c0_70 = arith.constant 0 : index
    %c1_71 = arith.constant 1 : index
    %57 = vector.load %arg26[%c0_70, %c1_71] : memref<256x250xbf16, #tpu.memory_space<vmem>>, vector<128x122xbf16>
    %58 = arith.maximumf %56, %57 : vector<128x122xbf16>
    %c0_72 = arith.constant 0 : index
    %c2_73 = arith.constant 2 : index
    %59 = vector.load %arg26[%c0_72, %c2_73] : memref<256x250xbf16, #tpu.memory_space<vmem>>, vector<128x122xbf16>
    %60 = arith.maximumf %58, %59 : vector<128x122xbf16>
    %c0_74 = arith.constant 0 : index
    %c0_75 = arith.constant 0 : index
    %61 = vector.load %arg7[%c0_74, %c0_75] : memref<122x61xbf16, #tpu.memory_space<vmem>>, vector<122x61xbf16>
    %cst_76 = arith.constant dense<0.000000e+00> : vector<128x61xf32>
    %62 = tpu.matmul %60, %61, %cst_76 {dimension_numbers = #tpu.dot_dimension_numbers<[1], [0], [0], [1], [0, 0, 1, 1], [], []>} : vector<128x122xbf16>, vector<122x61xbf16>, vector<128x61xf32> -> vector<128x61xf32>
    %cst_77 = arith.constant 0.000000e+00 : bf16
    %63 = vector.broadcast %cst_77 : bf16 to vector<128x4xbf16>
    %c0_78 = arith.constant 0 : index
    %c0_79 = arith.constant 0 : index
    %64 = vector.load %arg24[%c0_78, %c0_79] : memref<128x258xbf16, #tpu.memory_space<vmem>>, vector<128x4xbf16>
    tpu.vector_store %arg24[%c0_78, %c0_79], %63 {strides = array<i32>} : memref<128x258xbf16, #tpu.memory_space<vmem>>, vector<128x4xbf16>,
    %c0_80 = arith.constant 0 : index
    %c65 = arith.constant 65 : index
    %65 = vector.load %arg24[%c0_80, %c65] : memref<128x258xbf16, #tpu.memory_space<vmem>>, vector<128x4xbf16>
    tpu.vector_store %arg24[%c0_80, %c65], %63 {strides = array<i32>} : memref<128x258xbf16, #tpu.memory_space<vmem>>, vector<128x4xbf16>,
    %66 = arith.truncf %62 : vector<128x61xf32> to vector<128x61xbf16>
    %c0_81 = arith.constant 0 : index
    %c4_82 = arith.constant 4 : index
    %67 = vector.load %arg24[%c0_81, %c4_82] : memref<128x258xbf16, #tpu.memory_space<vmem>>, vector<128x61xbf16>
    tpu.vector_store %arg24[%c0_81, %c4_82], %66 {strides = array<i32>} : memref<128x258xbf16, #tpu.memory_space<vmem>>, vector<128x61xbf16>,
    %c0_83 = arith.constant 0 : index
    %c0_84 = arith.constant 0 : index
    %68 = vector.load %arg24[%c0_83, %c0_84] : memref<128x258xbf16, #tpu.memory_space<vmem>>, vector<128x61xbf16>
    %c0_85 = arith.constant 0 : index
    %c0_86 = arith.constant 0 : index
    %69 = vector.load %arg25[%c0_85, %c0_86] : memref<640x250xbf16, #tpu.memory_space<vmem>>, vector<128x61xbf16>
    tpu.vector_store %arg25[%c0_85, %c0_86], %68 {strides = array<i32>} : memref<640x250xbf16, #tpu.memory_space<vmem>>, vector<128x61xbf16>,
    %c0_87 = arith.constant 0 : index
    %c2_88 = arith.constant 2 : index
    %70 = vector.load %arg24[%c0_87, %c2_88] : memref<128x258xbf16, #tpu.memory_space<vmem>>, vector<128x61xbf16>
    %c128_89 = arith.constant 128 : index
    %c0_90 = arith.constant 0 : index
    %71 = vector.load %arg25[%c128_89, %c0_90] : memref<640x250xbf16, #tpu.memory_space<vmem>>, vector<128x61xbf16>
    tpu.vector_store %arg25[%c128_89, %c0_90], %70 {strides = array<i32>} : memref<640x250xbf16, #tpu.memory_space<vmem>>, vector<128x61xbf16>,
    %c0_91 = arith.constant 0 : index
    %c4_92 = arith.constant 4 : index
    %72 = vector.load %arg24[%c0_91, %c4_92] : memref<128x258xbf16, #tpu.memory_space<vmem>>, vector<128x61xbf16>
    %c256_93 = arith.constant 256 : index
    %c0_94 = arith.constant 0 : index
    %73 = vector.load %arg25[%c256_93, %c0_94] : memref<640x250xbf16, #tpu.memory_space<vmem>>, vector<128x61xbf16>
    tpu.vector_store %arg25[%c256_93, %c0_94], %72 {strides = array<i32>} : memref<640x250xbf16, #tpu.memory_space<vmem>>, vector<128x61xbf16>,
    %c0_95 = arith.constant 0 : index
    %c6_96 = arith.constant 6 : index
    %74 = vector.load %arg24[%c0_95, %c6_96] : memref<128x258xbf16, #tpu.memory_space<vmem>>, vector<128x61xbf16>
    %c384 = arith.constant 384 : index
    %c0_97 = arith.constant 0 : index
    %75 = vector.load %arg25[%c384, %c0_97] : memref<640x250xbf16, #tpu.memory_space<vmem>>, vector<128x61xbf16>
    tpu.vector_store %arg25[%c384, %c0_97], %74 {strides = array<i32>} : memref<640x250xbf16, #tpu.memory_space<vmem>>, vector<128x61xbf16>,
    %c0_98 = arith.constant 0 : index
    %c8_99 = arith.constant 8 : index
    %76 = vector.load %arg24[%c0_98, %c8_99] : memref<128x258xbf16, #tpu.memory_space<vmem>>, vector<128x61xbf16>
    %c512 = arith.constant 512 : index
    %c0_100 = arith.constant 0 : index
    %77 = vector.load %arg25[%c512, %c0_100] : memref<640x250xbf16, #tpu.memory_space<vmem>>, vector<128x61xbf16>
    tpu.vector_store %arg25[%c512, %c0_100], %76 {strides = array<i32>} : memref<640x250xbf16, #tpu.memory_space<vmem>>, vector<128x61xbf16>,
    %c0_101 = arith.constant 0 : index
    %c0_102 = arith.constant 0 : index
    %78 = vector.load %arg8[%c0_101, %c0_102] : memref<256x640xbf16, #tpu.memory_space<vmem>>, vector<256x640xbf16>
    %c0_103 = arith.constant 0 : index
    %c0_104 = arith.constant 0 : index
    %79 = vector.load %arg25[%c0_103, %c0_104] : memref<640x250xbf16, #tpu.memory_space<vmem>>, vector<640x61xbf16>
    %cst_105 = arith.constant dense<0.000000e+00> : vector<256x61xf32>
    %80 = tpu.matmul %78, %79, %cst_105 {dimension_numbers = #tpu.dot_dimension_numbers<[1], [0], [0], [1], [0, 0, 1, 1], [], []>} : vector<256x640xbf16>, vector<640x61xbf16>, vector<256x61xf32> -> vector<256x61xf32>
    %c0_106 = arith.constant 0 : index
    %c0_107 = arith.constant 0 : index
    %81 = vector.load %arg9[%c0_106, %c0_107] : memref<256x1xf32, #tpu.memory_space<vmem>>, vector<256x1xf32>
    %82 = vector.broadcast %81 : vector<256x1xf32> to vector<256x61xf32>
    %83 = arith.addf %80, %82 : vector<256x61xf32>
    %84 = math.tanh %83 : vector<256x61xf32>
    %85 = arith.truncf %84 : vector<256x61xf32> to vector<256x61xbf16>
    %c0_108 = arith.constant 0 : index
    %c0_109 = arith.constant 0 : index
    %86 = vector.load %arg26[%c0_108, %c0_109] : memref<256x250xbf16, #tpu.memory_space<vmem>>, vector<256x61xbf16>
    tpu.vector_store %arg26[%c0_108, %c0_109], %85 {strides = array<i32>} : memref<256x250xbf16, #tpu.memory_space<vmem>>, vector<256x61xbf16>,
    %c0_110 = arith.constant 0 : index
    %c0_111 = arith.constant 0 : index
    %87 = vector.load %arg26[%c0_110, %c0_111] : memref<256x250xbf16, #tpu.memory_space<vmem>>, vector<256x59xbf16>
    %c0_112 = arith.constant 0 : index
    %c1_113 = arith.constant 1 : index
    %88 = vector.load %arg26[%c0_112, %c1_113] : memref<256x250xbf16, #tpu.memory_space<vmem>>, vector<256x59xbf16>
    %89 = arith.maximumf %87, %88 : vector<256x59xbf16>
    %c0_114 = arith.constant 0 : index
    %c2_115 = arith.constant 2 : index
    %90 = vector.load %arg26[%c0_114, %c2_115] : memref<256x250xbf16, #tpu.memory_space<vmem>>, vector<256x59xbf16>
    %91 = arith.maximumf %89, %90 : vector<256x59xbf16>
    %c0_116 = arith.constant 0 : index
    %c0_117 = arith.constant 0 : index
    %92 = vector.load %arg10[%c0_116, %c0_117] : memref<59x30xbf16, #tpu.memory_space<vmem>>, vector<59x30xbf16>
    %cst_118 = arith.constant dense<0.000000e+00> : vector<256x30xf32>
    %93 = tpu.matmul %91, %92, %cst_118 {dimension_numbers = #tpu.dot_dimension_numbers<[1], [0], [0], [1], [0, 0, 1, 1], [], []>} : vector<256x59xbf16>, vector<59x30xbf16>, vector<256x30xf32> -> vector<256x30xf32>
    %cst_119 = arith.constant 0.000000e+00 : bf16
    %94 = vector.broadcast %cst_119 : bf16 to vector<16x512xbf16>
    %c0_120 = arith.constant 0 : index
    %c0_121 = arith.constant 0 : index
    %95 = vector.load %arg27[%c0_120, %c0_121] : memref<16x512xbf16, #tpu.memory_space<vmem>>, vector<16x512xbf16>
    tpu.vector_store %arg27[%c0_120, %c0_121], %94 {strides = array<i32>} : memref<16x512xbf16, #tpu.memory_space<vmem>>, vector<16x512xbf16>,
    %96 = arith.truncf %93 : vector<256x30xf32> to vector<256x30xbf16>
    %97 = vector.extract_strided_slice %96 {offsets = [0, 0], sizes = [16, 30], strides = [1, 1]} : vector<256x30xbf16> to vector<16x30xbf16>
    %c0_122 = arith.constant 0 : index
    %c0_123 = arith.constant 0 : index
    %98 = vector.load %arg27[%c0_122, %c0_123] : memref<16x512xbf16, #tpu.memory_space<vmem>>, vector<16x30xbf16>
    tpu.vector_store %arg27[%c0_122, %c0_123], %97 {strides = array<i32>} : memref<16x512xbf16, #tpu.memory_space<vmem>>, vector<16x30xbf16>,
    %99 = vector.extract_strided_slice %96 {offsets = [16, 0], sizes = [16, 30], strides = [1, 1]} : vector<256x30xbf16> to vector<16x30xbf16>
    %c0_124 = arith.constant 0 : index
    %c32_125 = arith.constant 32 : index
    %100 = vector.load %arg27[%c0_124, %c32_125] : memref<16x512xbf16, #tpu.memory_space<vmem>>, vector<16x30xbf16>
    tpu.vector_store %arg27[%c0_124, %c32_125], %99 {strides = array<i32>} : memref<16x512xbf16, #tpu.memory_space<vmem>>, vector<16x30xbf16>,
    %101 = vector.extract_strided_slice %96 {offsets = [32, 0], sizes = [16, 30], strides = [1, 1]} : vector<256x30xbf16> to vector<16x30xbf16>
    %c0_126 = arith.constant 0 : index
    %c64_127 = arith.constant 64 : index
    %102 = vector.load %arg27[%c0_126, %c64_127] : memref<16x512xbf16, #tpu.memory_space<vmem>>, vector<16x30xbf16>
    tpu.vector_store %arg27[%c0_126, %c64_127], %101 {strides = array<i32>} : memref<16x512xbf16, #tpu.memory_space<vmem>>, vector<16x30xbf16>,
    %103 = vector.extract_strided_slice %96 {offsets = [48, 0], sizes = [16, 30], strides = [1, 1]} : vector<256x30xbf16> to vector<16x30xbf16>
    %c0_128 = arith.constant 0 : index
    %c96 = arith.constant 96 : index
    %104 = vector.load %arg27[%c0_128, %c96] : memref<16x512xbf16, #tpu.memory_space<vmem>>, vector<16x30xbf16>
    tpu.vector_store %arg27[%c0_128, %c96], %103 {strides = array<i32>} : memref<16x512xbf16, #tpu.memory_space<vmem>>, vector<16x30xbf16>,
    %105 = vector.extract_strided_slice %96 {offsets = [64, 0], sizes = [16, 30], strides = [1, 1]} : vector<256x30xbf16> to vector<16x30xbf16>
    %c0_129 = arith.constant 0 : index
    %c128_130 = arith.constant 128 : index
    %106 = vector.load %arg27[%c0_129, %c128_130] : memref<16x512xbf16, #tpu.memory_space<vmem>>, vector<16x30xbf16>
    tpu.vector_store %arg27[%c0_129, %c128_130], %105 {strides = array<i32>} : memref<16x512xbf16, #tpu.memory_space<vmem>>, vector<16x30xbf16>,
    %107 = vector.extract_strided_slice %96 {offsets = [80, 0], sizes = [16, 30], strides = [1, 1]} : vector<256x30xbf16> to vector<16x30xbf16>
    %c0_131 = arith.constant 0 : index
    %c160 = arith.constant 160 : index
    %108 = vector.load %arg27[%c0_131, %c160] : memref<16x512xbf16, #tpu.memory_space<vmem>>, vector<16x30xbf16>
    tpu.vector_store %arg27[%c0_131, %c160], %107 {strides = array<i32>} : memref<16x512xbf16, #tpu.memory_space<vmem>>, vector<16x30xbf16>,
    %109 = vector.extract_strided_slice %96 {offsets = [96, 0], sizes = [16, 30], strides = [1, 1]} : vector<256x30xbf16> to vector<16x30xbf16>
    %c0_132 = arith.constant 0 : index
    %c192_133 = arith.constant 192 : index
    %110 = vector.load %arg27[%c0_132, %c192_133] : memref<16x512xbf16, #tpu.memory_space<vmem>>, vector<16x30xbf16>
    tpu.vector_store %arg27[%c0_132, %c192_133], %109 {strides = array<i32>} : memref<16x512xbf16, #tpu.memory_space<vmem>>, vector<16x30xbf16>,
    %111 = vector.extract_strided_slice %96 {offsets = [112, 0], sizes = [16, 30], strides = [1, 1]} : vector<256x30xbf16> to vector<16x30xbf16>
    %c0_134 = arith.constant 0 : index
    %c224 = arith.constant 224 : index
    %112 = vector.load %arg27[%c0_134, %c224] : memref<16x512xbf16, #tpu.memory_space<vmem>>, vector<16x30xbf16>
    tpu.vector_store %arg27[%c0_134, %c224], %111 {strides = array<i32>} : memref<16x512xbf16, #tpu.memory_space<vmem>>, vector<16x30xbf16>,
    %113 = vector.extract_strided_slice %96 {offsets = [128, 0], sizes = [16, 30], strides = [1, 1]} : vector<256x30xbf16> to vector<16x30xbf16>
    %c0_135 = arith.constant 0 : index
    %c256_136 = arith.constant 256 : index
    %114 = vector.load %arg27[%c0_135, %c256_136] : memref<16x512xbf16, #tpu.memory_space<vmem>>, vector<16x30xbf16>
    tpu.vector_store %arg27[%c0_135, %c256_136], %113 {strides = array<i32>} : memref<16x512xbf16, #tpu.memory_space<vmem>>, vector<16x30xbf16>,
    %115 = vector.extract_strided_slice %96 {offsets = [144, 0], sizes = [16, 30], strides = [1, 1]} : vector<256x30xbf16> to vector<16x30xbf16>
    %c0_137 = arith.constant 0 : index
    %c288 = arith.constant 288 : index
    %116 = vector.load %arg27[%c0_137, %c288] : memref<16x512xbf16, #tpu.memory_space<vmem>>, vector<16x30xbf16>
    tpu.vector_store %arg27[%c0_137, %c288], %115 {strides = array<i32>} : memref<16x512xbf16, #tpu.memory_space<vmem>>, vector<16x30xbf16>,
    %117 = vector.extract_strided_slice %96 {offsets = [160, 0], sizes = [16, 30], strides = [1, 1]} : vector<256x30xbf16> to vector<16x30xbf16>
    %c0_138 = arith.constant 0 : index
    %c320 = arith.constant 320 : index
    %118 = vector.load %arg27[%c0_138, %c320] : memref<16x512xbf16, #tpu.memory_space<vmem>>, vector<16x30xbf16>
    tpu.vector_store %arg27[%c0_138, %c320], %117 {strides = array<i32>} : memref<16x512xbf16, #tpu.memory_space<vmem>>, vector<16x30xbf16>,
    %119 = vector.extract_strided_slice %96 {offsets = [176, 0], sizes = [16, 30], strides = [1, 1]} : vector<256x30xbf16> to vector<16x30xbf16>
    %c0_139 = arith.constant 0 : index
    %c352 = arith.constant 352 : index
    %120 = vector.load %arg27[%c0_139, %c352] : memref<16x512xbf16, #tpu.memory_space<vmem>>, vector<16x30xbf16>
    tpu.vector_store %arg27[%c0_139, %c352], %119 {strides = array<i32>} : memref<16x512xbf16, #tpu.memory_space<vmem>>, vector<16x30xbf16>,
    %121 = vector.extract_strided_slice %96 {offsets = [192, 0], sizes = [16, 30], strides = [1, 1]} : vector<256x30xbf16> to vector<16x30xbf16>
    %c0_140 = arith.constant 0 : index
    %c384_141 = arith.constant 384 : index
    %122 = vector.load %arg27[%c0_140, %c384_141] : memref<16x512xbf16, #tpu.memory_space<vmem>>, vector<16x30xbf16>
    tpu.vector_store %arg27[%c0_140, %c384_141], %121 {strides = array<i32>} : memref<16x512xbf16, #tpu.memory_space<vmem>>, vector<16x30xbf16>,
    %123 = vector.extract_strided_slice %96 {offsets = [208, 0], sizes = [16, 30], strides = [1, 1]} : vector<256x30xbf16> to vector<16x30xbf16>
    %c0_142 = arith.constant 0 : index
    %c416 = arith.constant 416 : index
    %124 = vector.load %arg27[%c0_142, %c416] : memref<16x512xbf16, #tpu.memory_space<vmem>>, vector<16x30xbf16>
    tpu.vector_store %arg27[%c0_142, %c416], %123 {strides = array<i32>} : memref<16x512xbf16, #tpu.memory_space<vmem>>, vector<16x30xbf16>,
    %125 = vector.extract_strided_slice %96 {offsets = [224, 0], sizes = [16, 30], strides = [1, 1]} : vector<256x30xbf16> to vector<16x30xbf16>
    %c0_143 = arith.constant 0 : index
    %c448 = arith.constant 448 : index
    %126 = vector.load %arg27[%c0_143, %c448] : memref<16x512xbf16, #tpu.memory_space<vmem>>, vector<16x30xbf16>
    tpu.vector_store %arg27[%c0_143, %c448], %125 {strides = array<i32>} : memref<16x512xbf16, #tpu.memory_space<vmem>>, vector<16x30xbf16>,
    %127 = vector.extract_strided_slice %96 {offsets = [240, 0], sizes = [16, 30], strides = [1, 1]} : vector<256x30xbf16> to vector<16x30xbf16>
    %c0_144 = arith.constant 0 : index
    %c480 = arith.constant 480 : index
    %128 = vector.load %arg27[%c0_144, %c480] : memref<16x512xbf16, #tpu.memory_space<vmem>>, vector<16x30xbf16>
    tpu.vector_store %arg27[%c0_144, %c480], %127 {strides = array<i32>} : memref<16x512xbf16, #tpu.memory_space<vmem>>, vector<16x30xbf16>,
    %c0_145 = arith.constant 0 : index
    %c0_146 = arith.constant 0 : index
    %129 = vector.load %arg27[%c0_145, %c0_146] : memref<16x512xbf16, #tpu.memory_space<vmem>>, vector<16x512xbf16>
    %c0_147 = arith.constant 0 : index
    %c0_148 = arith.constant 0 : index
    %130 = vector.load %arg11[%c0_147, %c0_148] : memref<512x256xbf16, #tpu.memory_space<vmem>>, vector<512x256xbf16>
    %cst_149 = arith.constant dense<0.000000e+00> : vector<16x256xf32>
    %131 = tpu.matmul %129, %130, %cst_149 {dimension_numbers = #tpu.dot_dimension_numbers<[1], [0], [0], [1], [0, 0, 1, 1], [], []>} : vector<16x512xbf16>, vector<512x256xbf16>, vector<16x256xf32> -> vector<16x256xf32>
    %c0_150 = arith.constant 0 : index
    %c0_151 = arith.constant 0 : index
    %132 = vector.load %arg12[%c0_150, %c0_151] : memref<1x256xf32, #tpu.memory_space<vmem>>, vector<1x256xf32>
    %133 = vector.broadcast %132 : vector<1x256xf32> to vector<16x256xf32>
    %134 = arith.addf %131, %133 : vector<16x256xf32>
    %135 = math.tanh %134 : vector<16x256xf32>
    %136 = arith.truncf %135 : vector<16x256xf32> to vector<16x256xbf16>
    %c0_152 = arith.constant 0 : index
    %c0_153 = arith.constant 0 : index
    %137 = vector.load %arg13[%c0_152, %c0_153] : memref<256x128xbf16, #tpu.memory_space<vmem>>, vector<256x128xbf16>
    %cst_154 = arith.constant dense<0.000000e+00> : vector<16x128xf32>
    %138 = tpu.matmul %136, %137, %cst_154 {dimension_numbers = #tpu.dot_dimension_numbers<[1], [0], [0], [1], [0, 0, 1, 1], [], []>} : vector<16x256xbf16>, vector<256x128xbf16>, vector<16x128xf32> -> vector<16x128xf32>
    %c0_155 = arith.constant 0 : index
    %c0_156 = arith.constant 0 : index
    %139 = vector.load %arg14[%c0_155, %c0_156] : memref<1x128xf32, #tpu.memory_space<vmem>>, vector<1x128xf32>
    %140 = vector.broadcast %139 : vector<1x128xf32> to vector<16x128xf32>
    %141 = arith.addf %138, %140 : vector<16x128xf32>
    %142 = math.tanh %141 : vector<16x128xf32>
    %143 = arith.truncf %142 : vector<16x128xf32> to vector<16x128xbf16>
    %c0_157 = arith.constant 0 : index
    %c0_158 = arith.constant 0 : index
    %144 = vector.load %arg15[%c0_157, %c0_158] : memref<128x64xbf16, #tpu.memory_space<vmem>>, vector<128x64xbf16>
    %cst_159 = arith.constant dense<0.000000e+00> : vector<16x64xf32>
    %145 = tpu.matmul %143, %144, %cst_159 {dimension_numbers = #tpu.dot_dimension_numbers<[1], [0], [0], [1], [0, 0, 1, 1], [], []>} : vector<16x128xbf16>, vector<128x64xbf16>, vector<16x64xf32> -> vector<16x64xf32>
    %c0_160 = arith.constant 0 : index
    %c0_161 = arith.constant 0 : index
    %146 = vector.load %arg16[%c0_160, %c0_161] : memref<1x64xf32, #tpu.memory_space<vmem>>, vector<1x64xf32>
    %147 = vector.broadcast %146 : vector<1x64xf32> to vector<16x64xf32>
    %148 = arith.addf %145, %147 : vector<16x64xf32>
    %149 = math.tanh %148 : vector<16x64xf32>
    %150 = arith.truncf %149 : vector<16x64xf32> to vector<16x64xbf16>
    %c0_162 = arith.constant 0 : index
    %c0_163 = arith.constant 0 : index
    %151 = vector.load %arg17[%c0_162, %c0_163] : memref<64x32xbf16, #tpu.memory_space<vmem>>, vector<64x32xbf16>
    %cst_164 = arith.constant dense<0.000000e+00> : vector<16x32xf32>
    %152 = tpu.matmul %150, %151, %cst_164 {dimension_numbers = #tpu.dot_dimension_numbers<[1], [0], [0], [1], [0, 0, 1, 1], [], []>} : vector<16x64xbf16>, vector<64x32xbf16>, vector<16x32xf32> -> vector<16x32xf32>
    %c0_165 = arith.constant 0 : index
    %c0_166 = arith.constant 0 : index
    %153 = vector.load %arg18[%c0_165, %c0_166] : memref<1x32xf32, #tpu.memory_space<vmem>>, vector<1x32xf32>
    %154 = vector.broadcast %153 : vector<1x32xf32> to vector<16x32xf32>
    %155 = arith.addf %152, %154 : vector<16x32xf32>
    %156 = math.tanh %155 : vector<16x32xf32>
    %157 = arith.truncf %156 : vector<16x32xf32> to vector<16x32xbf16>
    %c0_167 = arith.constant 0 : index
    %c0_168 = arith.constant 0 : index
    %158 = vector.load %arg19[%c0_167, %c0_168] : memref<32x16xbf16, #tpu.memory_space<vmem>>, vector<32x16xbf16>
    %cst_169 = arith.constant dense<0.000000e+00> : vector<16x16xf32>
    %159 = tpu.matmul %157, %158, %cst_169 {dimension_numbers = #tpu.dot_dimension_numbers<[1], [0], [0], [1], [0, 0, 1, 1], [], []>} : vector<16x32xbf16>, vector<32x16xbf16>, vector<16x16xf32> -> vector<16x16xf32>
    %c0_170 = arith.constant 0 : index
    %c0_171 = arith.constant 0 : index
    %160 = vector.load %arg20[%c0_170, %c0_171] : memref<1x16xf32, #tpu.memory_space<vmem>>, vector<1x16xf32>
    %161 = vector.broadcast %160 : vector<1x16xf32> to vector<16x16xf32>
    %162 = arith.addf %159, %161 : vector<16x16xf32>
    %163 = math.tanh %162 : vector<16x16xf32>
    %164 = arith.truncf %163 : vector<16x16xf32> to vector<16x16xbf16>
    %c0_172 = arith.constant 0 : index
    %c0_173 = arith.constant 0 : index
    %165 = vector.load %arg21[%c0_172, %c0_173] : memref<16x6xbf16, #tpu.memory_space<vmem>>, vector<16x6xbf16>
    %cst_174 = arith.constant dense<0.000000e+00> : vector<16x6xf32>
    %166 = tpu.matmul %164, %165, %cst_174 {dimension_numbers = #tpu.dot_dimension_numbers<[1], [0], [0], [1], [0, 0, 1, 1], [], []>} : vector<16x16xbf16>, vector<16x6xbf16>, vector<16x6xf32> -> vector<16x6xf32>
    %c0_175 = arith.constant 0 : index
    %c0_176 = arith.constant 0 : index
    %167 = vector.load %arg22[%c0_175, %c0_176] : memref<1x6xf32, #tpu.memory_space<vmem>>, vector<1x6xf32>
    %168 = vector.broadcast %167 : vector<1x6xf32> to vector<16x6xf32>
    %169 = arith.addf %166, %168 : vector<16x6xf32>
    %cst_177 = arith.constant dense<0xFF800000> : vector<16xf32>
    %170 = vector.multi_reduction <maximumf>, %169, %cst_177 [1] : vector<16x6xf32> to vector<16xf32>
    %171 = vector.shape_cast %170 : vector<16xf32> to vector<16x1xf32>
    %172 = vector.broadcast %171 : vector<16x1xf32> to vector<16x6xf32>
    %173 = arith.subf %169, %172 : vector<16x6xf32>
    %174 = math.exp %173 : vector<16x6xf32>
    %cst_178 = arith.constant dense<0.000000e+00> : vector<16xf32>
    %175 = vector.multi_reduction <add>, %174, %cst_178 [1] : vector<16x6xf32> to vector<16xf32>
    %176 = vector.shape_cast %175 : vector<16xf32> to vector<16x1xf32>
    %177 = tpu.reciprocal %176 {approx = true} : vector<16x1xf32> -> vector<16x1xf32>
    %178 = vector.broadcast %177 : vector<16x1xf32> to vector<16x6xf32>
    %179 = arith.mulf %174, %178 : vector<16x6xf32>
    %c0_179 = arith.constant 0 : index
    %c0_180 = arith.constant 0 : index
    %180 = vector.load %arg23[%c0_179, %c0_180] : memref<16x6xf32, #tpu.memory_space<vmem>>, vector<16x6xf32>
    tpu.vector_store %arg23[%c0_179, %c0_180], %179 {strides = array<i32>} : memref<16x6xf32, #tpu.memory_space<vmem>>, vector<16x6xf32>,
    return
  }
  func.func @transform_0(%arg0: i32) -> (i32, i32) {
    %c0_i32 = arith.constant 0 : i32
    %c0_i32_0 = arith.constant 0 : i32
    return %arg0, %c0_i32 : i32, i32
  }
  func.func @transform_1(%arg0: i32) -> (i32, i32) {
    %c0_i32 = arith.constant 0 : i32
    %c0_i32_0 = arith.constant 0 : i32
    %c0_i32_1 = arith.constant 0 : i32
    return %c0_i32, %c0_i32_0 : i32, i32
  }
  func.func @transform_2(%arg0: i32) -> (i32, i32) {
    %c0_i32 = arith.constant 0 : i32
    %c0_i32_0 = arith.constant 0 : i32
    %c0_i32_1 = arith.constant 0 : i32
    return %c0_i32, %c0_i32_0 : i32, i32
  }
  func.func @transform_3(%arg0: i32) -> (i32, i32) {
    %c0_i32 = arith.constant 0 : i32
    %c0_i32_0 = arith.constant 0 : i32
    %c0_i32_1 = arith.constant 0 : i32
    return %c0_i32, %c0_i32_0 : i32, i32
  }
  func.func @transform_4(%arg0: i32) -> (i32, i32) {
    %c0_i32 = arith.constant 0 : i32
    %c0_i32_0 = arith.constant 0 : i32
    %c0_i32_1 = arith.constant 0 : i32
    return %c0_i32, %c0_i32_0 : i32, i32
  }
  func.func @transform_5(%arg0: i32) -> (i32, i32) {
    %c0_i32 = arith.constant 0 : i32
    %c0_i32_0 = arith.constant 0 : i32
    %c0_i32_1 = arith.constant 0 : i32
    return %c0_i32, %c0_i32_0 : i32, i32
  }
  func.func @transform_6(%arg0: i32) -> (i32, i32) {
    %c0_i32 = arith.constant 0 : i32
    %c0_i32_0 = arith.constant 0 : i32
    %c0_i32_1 = arith.constant 0 : i32
    return %c0_i32, %c0_i32_0 : i32, i32
  }
  func.func @transform_7(%arg0: i32) -> (i32, i32) {
    %c0_i32 = arith.constant 0 : i32
    %c0_i32_0 = arith.constant 0 : i32
    %c0_i32_1 = arith.constant 0 : i32
    return %c0_i32, %c0_i32_0 : i32, i32
  }
  func.func @transform_8(%arg0: i32) -> (i32, i32) {
    %c0_i32 = arith.constant 0 : i32
    %c0_i32_0 = arith.constant 0 : i32
    %c0_i32_1 = arith.constant 0 : i32
    return %c0_i32, %c0_i32_0 : i32, i32
  }
  func.func @transform_9(%arg0: i32) -> (i32, i32) {
    %c0_i32 = arith.constant 0 : i32
    %c0_i32_0 = arith.constant 0 : i32
    %c0_i32_1 = arith.constant 0 : i32
    return %c0_i32, %c0_i32_0 : i32, i32
  }
  func.func @transform_10(%arg0: i32) -> (i32, i32) {
    %c0_i32 = arith.constant 0 : i32
    %c0_i32_0 = arith.constant 0 : i32
    %c0_i32_1 = arith.constant 0 : i32
    return %c0_i32, %c0_i32_0 : i32, i32
  }
  func.func @transform_11(%arg0: i32) -> (i32, i32) {
    %c0_i32 = arith.constant 0 : i32
    %c0_i32_0 = arith.constant 0 : i32
    %c0_i32_1 = arith.constant 0 : i32
    return %c0_i32, %c0_i32_0 : i32, i32
  }
  func.func @transform_12(%arg0: i32) -> (i32, i32) {
    %c0_i32 = arith.constant 0 : i32
    %c0_i32_0 = arith.constant 0 : i32
    %c0_i32_1 = arith.constant 0 : i32
    return %c0_i32, %c0_i32_0 : i32, i32
  }
  func.func @transform_13(%arg0: i32) -> (i32, i32) {
    %c0_i32 = arith.constant 0 : i32
    %c0_i32_0 = arith.constant 0 : i32
    %c0_i32_1 = arith.constant 0 : i32
    return %c0_i32, %c0_i32_0 : i32, i32
  }
  func.func @transform_14(%arg0: i32) -> (i32, i32) {
    %c0_i32 = arith.constant 0 : i32
    %c0_i32_0 = arith.constant 0 : i32
    %c0_i32_1 = arith.constant 0 : i32
    return %c0_i32, %c0_i32_0 : i32, i32
  }
  func.func @transform_15(%arg0: i32) -> (i32, i32) {
    %c0_i32 = arith.constant 0 : i32
    %c0_i32_0 = arith.constant 0 : i32
    %c0_i32_1 = arith.constant 0 : i32
    return %c0_i32, %c0_i32_0 : i32, i32
  }
  func.func @transform_16(%arg0: i32) -> (i32, i32) {
    %c0_i32 = arith.constant 0 : i32
    %c0_i32_0 = arith.constant 0 : i32
    %c0_i32_1 = arith.constant 0 : i32
    return %c0_i32, %c0_i32_0 : i32, i32
  }
  func.func @transform_17(%arg0: i32) -> (i32, i32) {
    %c0_i32 = arith.constant 0 : i32
    %c0_i32_0 = arith.constant 0 : i32
    %c0_i32_1 = arith.constant 0 : i32
    return %c0_i32, %c0_i32_0 : i32, i32
  }
  func.func @transform_18(%arg0: i32) -> (i32, i32) {
    %c0_i32 = arith.constant 0 : i32
    %c0_i32_0 = arith.constant 0 : i32
    %c0_i32_1 = arith.constant 0 : i32
    return %c0_i32, %c0_i32_0 : i32, i32
  }
  func.func @transform_19(%arg0: i32) -> (i32, i32) {
    %c0_i32 = arith.constant 0 : i32
    %c0_i32_0 = arith.constant 0 : i32
    %c0_i32_1 = arith.constant 0 : i32
    return %c0_i32, %c0_i32_0 : i32, i32
  }
  func.func @transform_20(%arg0: i32) -> (i32, i32) {
    %c0_i32 = arith.constant 0 : i32
    %c0_i32_0 = arith.constant 0 : i32
    %c0_i32_1 = arith.constant 0 : i32
    return %c0_i32, %c0_i32_0 : i32, i32
  }
  func.func @transform_21(%arg0: i32) -> (i32, i32) {
    %c0_i32 = arith.constant 0 : i32
    %c0_i32_0 = arith.constant 0 : i32
    %c0_i32_1 = arith.constant 0 : i32
    return %c0_i32, %c0_i32_0 : i32, i32
  }
  func.func @transform_22(%arg0: i32) -> (i32, i32) {
    %c0_i32 = arith.constant 0 : i32
    %c0_i32_0 = arith.constant 0 : i32
    return %arg0, %c0_i32 : i32, i32
  }
}

</mosaic_0001>

<llo_original>
// kernel: tpu_custom_call.1
$region0: #{tpu_custom_call.1}
  #allocation0 [shape = 'u32[]', space=smem, size = 0x4, offset = 0x4, fixed_abs, tag = 'smem constant byte address 0x4 - core index']
  #allocation1 [shape = 'u32[72,128]{1,0:T(1,128)}', space=vmem, size = 0x9000, scoped, tag = 'internal scratch']
  #allocation2 [shape = 'bf16[128,258]{1,0:T(8,128)(2,1)}', space=vmem, size = 0x18000, scoped, tag = 'scratch operand']
  #allocation3 [shape = 'bf16[640,250]{1,0:T(8,128)(2,1)}', space=vmem, size = 0x50000, scoped, tag = 'scratch operand']
  #allocation4 [shape = 'bf16[256,250]{1,0:T(8,128)(2,1)}', space=vmem, size = 0x20000, scoped, tag = 'scratch operand']
  #allocation5 [shape = 'bf16[16,512]{1,0:T(8,128)(2,1)}', space=vmem, size = 0x4000, scoped, tag = 'scratch operand']
  %s0 = inlined_call_operand.vmem [shape: f32[16,250], index: 0, kind: input, shape index: {}]
  %s1 = inlined_call_operand.vmem [shape: bf16[64,80], index: 1, kind: input, shape index: {}]
  %s2 = inlined_call_operand.vmem [shape: f32[64,1], index: 2, kind: input, shape index: {}]
  %s3 = inlined_call_operand.vmem [shape: bf16[248,124], index: 3, kind: input, shape index: {}]
  %s4 = inlined_call_operand.vmem [shape: bf16[128,320], index: 4, kind: input, shape index: {}]
  %s5 = inlined_call_operand.vmem [shape: f32[128,1], index: 5, kind: input, shape index: {}]
  %s6 = inlined_call_operand.vmem [shape: bf16[122,61], index: 6, kind: input, shape index: {}]
  %s7 = inlined_call_operand.hbm [shape: bf16[256,640], index: 7, kind: input, shape index: {}]
  %s8 = inlined_call_operand.vmem [shape: f32[256,1], index: 8, kind: input, shape index: {}]
  %s9 = inlined_call_operand.vmem [shape: bf16[59,30], index: 9, kind: input, shape index: {}]
  %s10 = inlined_call_operand.vmem [shape: bf16[512,256], index: 10, kind: input, shape index: {}]
  %s11 = inlined_call_operand.vmem [shape: f32[1,256], index: 11, kind: input, shape index: {}]
  %s12 = inlined_call_operand.vmem [shape: bf16[256,128], index: 12, kind: input, shape index: {}]
  %s13 = inlined_call_operand.vmem [shape: f32[1,128], index: 13, kind: input, shape index: {}]
  %s14 = inlined_call_operand.vmem [shape: bf16[128,64], index: 14, kind: input, shape index: {}]
  %s15 = inlined_call_operand.vmem [shape: f32[1,64], index: 15, kind: input, shape index: {}]
  %s16 = inlined_call_operand.vmem [shape: bf16[64,32], index: 16, kind: input, shape index: {}]
  %s17 = inlined_call_operand.vmem [shape: f32[1,32], index: 17, kind: input, shape index: {}]
  %s18 = inlined_call_operand.vmem [shape: bf16[32,16], index: 18, kind: input, shape index: {}]
  %s19 = inlined_call_operand.vmem [shape: f32[1,16], index: 19, kind: input, shape index: {}]
  %s20 = inlined_call_operand.vmem [shape: bf16[16,6], index: 20, kind: input, shape index: {}]
  %s21 = inlined_call_operand.vmem [shape: f32[1,6], index: 21, kind: input, shape index: {}]
  %s22 = inlined_call_operand.vmem [shape: f32[16,6], index: 22, kind: output, shape index: {}]
  %s23 = sld [smem:[#allocation0]]
  $region102: #{tpu_custom_call.1} parent=0
    _
  %s25 = ssub.s32 1, %s23
  %s26 = scalar_select 0, %s25, %s23
  $region1: #{tpu_custom_call.1} parent=0
    #allocation6 [shape = 'u8[327680]{0}', space=vmem, size = 0x50000, scoped, tag = 'input window, operand 7, single buffered']
    #allocation7 [shape = 's32[1]{0}', space=sflag, size = 0x4, scoped, tag = 'scoped memory for tpu_custom_call.1']
    %27 = vsyncpa [#allocation7], 0
    // Predicated region
    $region2: #{tpu_custom_call.1} parent=1 // pred_check
      _
    $region3: #{tpu_custom_call.1} parent=1 // pred_check_branch
      %29 = sbr.rel (0) target = $region5
    $region4: #{tpu_custom_call.1} parent=1 // pred_region
      _
    $region5: #{tpu_custom_call.1} parent=1 // pred_fallthru
      _
    // Predicated region
    $region6: #{tpu_custom_call.1} parent=1 // pred_check
      _
    $region7: #{tpu_custom_call.1} parent=1 // pred_check_branch
      %31 = sbr.rel (0) target = $region9
    $region8: #{tpu_custom_call.1} parent=1 // pred_region
      _
    $region9: #{tpu_custom_call.1} parent=1 // pred_fallthru
      _
    // Predicated region
    $region10: #{tpu_custom_call.1} parent=1 // pred_check
      _
    $region11: #{tpu_custom_call.1} parent=1 // pred_check_branch
      %33 = sbr.rel (0) target = $region13
    $region12: #{tpu_custom_call.1} parent=1 // pred_region
      _
    $region13: #{tpu_custom_call.1} parent=1 // pred_fallthru
      _
    // Predicated region
    $region14: #{tpu_custom_call.1} parent=1 // pred_check
      _
    $region15: #{tpu_custom_call.1} parent=1 // pred_check_branch
      %35 = sbr.rel (0) target = $region17
    $region16: #{tpu_custom_call.1} parent=1 // pred_region
      _
    $region17: #{tpu_custom_call.1} parent=1 // pred_fallthru
      _
    // Predicated region
    $region18: #{tpu_custom_call.1} parent=1 // pred_check
      _
    $region19: #{tpu_custom_call.1} parent=1 // pred_check_branch
      %37 = sbr.rel (0) target = $region21
    $region20: #{tpu_custom_call.1} parent=1 // pred_region
      _
    $region21: #{tpu_custom_call.1} parent=1 // pred_fallthru
      _
    // Predicated region
    $region22: #{tpu_custom_call.1} parent=1 // pred_check
      _
    $region23: #{tpu_custom_call.1} parent=1 // pred_check_branch
      %39 = sbr.rel (0) target = $region25
    $region24: #{tpu_custom_call.1} parent=1 // pred_region
      _
    $region25: #{tpu_custom_call.1} parent=1 // pred_fallthru
      _
    // Predicated region
    $region26: #{tpu_custom_call.1} parent=1 // pred_check
      _
    $region27: #{tpu_custom_call.1} parent=1 // pred_check_branch
      %41 = sbr.rel (0) target = $region29
    $region28: #{tpu_custom_call.1} parent=1 // pred_region
      _
    $region29: #{tpu_custom_call.1} parent=1 // pred_fallthru
      _
    // Predicated region
    $region30: #{tpu_custom_call.1} parent=1 // pred_check
      _
    $region31: #{tpu_custom_call.1} parent=1 // pred_check_branch
      %43 = sbr.rel (0) target = $region33
    $region32: #{tpu_custom_call.1} parent=1 // pred_region
      %45 = vsyncadd [#allocation7], 0
      %s46 = sshll.u32 %s7, 4
      %s47 = int_to_ptr.hbm [resolvable:$true] %s46
      %s48 = sshll.u32 [#allocation6], 4
      %s49 = int_to_ptr.vmem [resolvable:$true] %s48
      %54 = dma.hbm_to_vmem [thread:$0]  %s47, 10240, %s49, [#allocation7], 320, 320, 20
    $region33: #{tpu_custom_call.1} parent=1 // pred_fallthru
      _
    // Predicated region
    $region34: #{tpu_custom_call.1} parent=1 // pred_check
      _
    $region35: #{tpu_custom_call.1} parent=1 // pred_check_branch
      %56 = sbr.rel (0) target = $region37
    $region36: #{tpu_custom_call.1} parent=1 // pred_region
      _
    $region37: #{tpu_custom_call.1} parent=1 // pred_fallthru
      _
    // Predicated region
    $region38: #{tpu_custom_call.1} parent=1 // pred_check
      _
    $region39: #{tpu_custom_call.1} parent=1 // pred_check_branch
      %58 = sbr.rel (0) target = $region41
    $region40: #{tpu_custom_call.1} parent=1 // pred_region
      _
    $region41: #{tpu_custom_call.1} parent=1 // pred_fallthru
      _
    // Predicated region
    $region42: #{tpu_custom_call.1} parent=1 // pred_check
      _
    $region43: #{tpu_custom_call.1} parent=1 // pred_check_branch
      %60 = sbr.rel (0) target = $region45
    $region44: #{tpu_custom_call.1} parent=1 // pred_region
      _
    $region45: #{tpu_custom_call.1} parent=1 // pred_fallthru
      _
    // Predicated region
    $region46: #{tpu_custom_call.1} parent=1 // pred_check
      _
    $region47: #{tpu_custom_call.1} parent=1 // pred_check_branch
      %62 = sbr.rel (0) target = $region49
    $region48: #{tpu_custom_call.1} parent=1 // pred_region
      _
    $region49: #{tpu_custom_call.1} parent=1 // pred_fallthru
      _
    // Predicated region
    $region50: #{tpu_custom_call.1} parent=1 // pred_check
      _
    $region51: #{tpu_custom_call.1} parent=1 // pred_check_branch
      %64 = sbr.rel (0) target = $region53
    $region52: #{tpu_custom_call.1} parent=1 // pred_region
      _
    $region53: #{tpu_custom_call.1} parent=1 // pred_fallthru
      _
    // Predicated region
    $region54: #{tpu_custom_call.1} parent=1 // pred_check
      _
    $region55: #{tpu_custom_call.1} parent=1 // pred_check_branch
      %66 = sbr.rel (0) target = $region57
    $region56: #{tpu_custom_call.1} parent=1 // pred_region
      _
    $region57: #{tpu_custom_call.1} parent=1 // pred_fallthru
      _
    // Predicated region
    $region58: #{tpu_custom_call.1} parent=1 // pred_check
      _
    $region59: #{tpu_custom_call.1} parent=1 // pred_check_branch
      %68 = sbr.rel (0) target = $region61
    $region60: #{tpu_custom_call.1} parent=1 // pred_region
      _
    $region61: #{tpu_custom_call.1} parent=1 // pred_fallthru
      _
    // Predicated region
    $region62: #{tpu_custom_call.1} parent=1 // pred_check
      _
    $region63: #{tpu_custom_call.1} parent=1 // pred_check_branch
      %70 = sbr.rel (0) target = $region65
    $region64: #{tpu_custom_call.1} parent=1 // pred_region
      _
    $region65: #{tpu_custom_call.1} parent=1 // pred_fallthru
      _
    // Predicated region
    $region66: #{tpu_custom_call.1} parent=1 // pred_check
      _
    $region67: #{tpu_custom_call.1} parent=1 // pred_check_branch
      %72 = sbr.rel (0) target = $region69
    $region68: #{tpu_custom_call.1} parent=1 // pred_region
      _
    $region69: #{tpu_custom_call.1} parent=1 // pred_fallthru
      _
    // Predicated region
    $region70: #{tpu_custom_call.1} parent=1 // pred_check
      _
    $region71: #{tpu_custom_call.1} parent=1 // pred_check_branch
      %74 = sbr.rel (0) target = $region73
    $region72: #{tpu_custom_call.1} parent=1 // pred_region
      _
    $region73: #{tpu_custom_call.1} parent=1 // pred_fallthru
      _
    // Predicated region
    $region74: #{tpu_custom_call.1} parent=1 // pred_check
      _
    $region75: #{tpu_custom_call.1} parent=1 // pred_check_branch
      %76 = sbr.rel (0) target = $region77
    $region76: #{tpu_custom_call.1} parent=1 // pred_region
      _
    $region77: #{tpu_custom_call.1} parent=1 // pred_fallthru
      _
    // Predicated region
    $region78: #{tpu_custom_call.1} parent=1 // pred_check
      _
    $region79: #{tpu_custom_call.1} parent=1 // pred_check_branch
      %78 = sbr.rel (0) target = $region81
    $region80: #{tpu_custom_call.1} parent=1 // pred_region
      _
    $region81: #{tpu_custom_call.1} parent=1 // pred_fallthru
      _
    // Predicated region
    $region82: #{tpu_custom_call.1} parent=1 // pred_check
      _
    $region83: #{tpu_custom_call.1} parent=1 // pred_check_branch
      %80 = sbr.rel (0) target = $region85
    $region84: #{tpu_custom_call.1} parent=1 // pred_region
      _
    $region85: #{tpu_custom_call.1} parent=1 // pred_fallthru
      _
    // Predicated region
    $region86: #{tpu_custom_call.1} parent=1 // pred_check
      _
    $region87: #{tpu_custom_call.1} parent=1 // pred_check_branch
      %82 = sbr.rel (0) target = $region89
    $region88: #{tpu_custom_call.1} parent=1 // pred_region
      _
    $region89: #{tpu_custom_call.1} parent=1 // pred_fallthru
      _
    // Predicated region
    $region90: #{tpu_custom_call.1} parent=1 // pred_check
      _
    $region91: #{tpu_custom_call.1} parent=1 // pred_check_branch
      %84 = sbr.rel (0) target = $region93
    $region92: #{tpu_custom_call.1} parent=1 // pred_region
      %86 = dma.done [#allocation7], 10240
    $region93: #{tpu_custom_call.1} parent=1 // pred_fallthru
      _
    %v88 = vld [vmem:[%s0] sm:$0xff]
    %v89 = vld [vmem:[%s0 + $0x8] sm:$0xff]
    %v90 = vld [vmem:[%s0 + $0x10] sm:$0xff]
    %v91 = vld [vmem:[%s0 + $0x18] sm:$0xff]
    %vm92 = vcmask 27648
    %93 = vst.msk [vmem:[#allocation2] sm:$0xf] %vm92, 0
    %94 = vst.msk [vmem:[#allocation2 + $0xc] sm:$0xf] %vm92, 0
    %vm95 = vcmask 1044464
    %vm96 = vcmask 15364
    %vm97 = vmor %vm96, %vm95
    %98 = vst.msk [vmem:[#allocation2 + $0x4] sm:$0xff] %vm97, 0
    %99 = vst.msk [vmem:[#allocation2 + $0x10] sm:$0xff] %vm97, 0
    %v100 = vpack.c.bf16 %v89, %v88
    %v101 = vpack.c.bf16 %v91, %v90
    %104 = vrot.lane.b32.xlu0 %v100, 4
    %v105 = vpop.permute.xlu0 %104
    %106 = vrot.lane.b32.xlu0 %v101, 4
    %v107 = vpop.permute.xlu0 %106
    %v108 = vrot.slane %v105, 4
    %v109 = vrot.slane %v107, 4
    %vm110 = vcmask 31744
    %v111 = vsel %vm110, %v108, %v105
    %v112 = vsel %vm110, %v109, %v107
    %vm115 = vcmask 1043488
    %vm116 = vcmask 1031172
    %vm117 = vmor %vm116, %vm115
    %118 = vst.msk [vmem:[#allocation2] sm:$0xff] %vm117, %v111
    %119 = vst.msk [vmem:[#allocation2 + $0xc] sm:$0xff] %vm117, %v112
    %v120 = vld [vmem:[#allocation2] sm:$0xff]
    %v121 = vld [vmem:[#allocation2 + $0xc] sm:$0xff]
    %vm122 = vcmask 1043456
    %vm123 = vcmask 998404
    %vm124 = vmor %vm123, %vm122
    %125 = vst.msk [vmem:[#allocation3] sm:$0xff] %vm124, %v120
    %126 = vst.msk [vmem:[#allocation3 + $0x8] sm:$0xff] %vm124, %v121
    %v127 = vld [vmem:[#allocation2] sm:$0xff]
    %v128 = vld [vmem:[#allocation2 + $0xc] sm:$0xff]
    %131 = vrot.lane.b32.xlu0 %v127, 126
    %v132 = vpop.permute.xlu0 %131
    %133 = vrot.lane.b32.xlu0 %v128, 126
    %v134 = vpop.permute.xlu0 %133
    %v135 = vrot.slane %v132, 4
    %v136 = vrot.slane %v134, 4
    %vm137 = vcmask 1031168
    %v138 = vsel %vm137, %v132, %v135
    %v139 = vsel %vm137, %v134, %v136
    %142 = vst.msk [vmem:[#allocation3 + $0x10] sm:$0xff] %vm124, %v138
    %143 = vst.msk [vmem:[#allocation3 + $0x18] sm:$0xff] %vm124, %v139
    %v144 = vld [vmem:[#allocation2] sm:$0xff]
    %v145 = vld [vmem:[#allocation2 + $0xc] sm:$0xff]
    %148 = vrot.lane.b32.xlu0 %v144, 124
    %v149 = vpop.permute.xlu0 %148
    %150 = vrot.lane.b32.xlu0 %v145, 124
    %v151 = vpop.permute.xlu0 %150
    %v152 = vrot.slane %v149, 4
    %v153 = vrot.slane %v151, 4
    %vm154 = vcmask 1014784
    %v155 = vsel %vm154, %v149, %v152
    %v156 = vsel %vm154, %v151, %v153
    %159 = vst.msk [vmem:[#allocation3 + $0x20] sm:$0xff] %vm124, %v155
    %160 = vst.msk [vmem:[#allocation3 + $0x28] sm:$0xff] %vm124, %v156
    %v161 = vld [vmem:[#allocation2] sm:$0xff]
    %v162 = vld [vmem:[#allocation2 + $0xc] sm:$0xff]
    %165 = vrot.lane.b32.xlu0 %v161, 122
    %v166 = vpop.permute.xlu0 %165
    %167 = vrot.lane.b32.xlu0 %v162, 122
    %v168 = vpop.permute.xlu0 %167
    %v169 = vrot.slane %v166, 4
    %v170 = vrot.slane %v168, 4
    %vm171 = vcmask 998400
    %v172 = vsel %vm171, %v166, %v169
    %v173 = vsel %vm171, %v168, %v170
    %176 = vst.msk [vmem:[#allocation3 + $0x30] sm:$0xff] %vm124, %v172
    %177 = vst.msk [vmem:[#allocation3 + $0x38] sm:$0xff] %vm124, %v173
    %v178 = vld [vmem:[#allocation2] sm:$0xff]
    %v179 = vld [vmem:[#allocation2 + $0x8] sm:$0xf]
    %v180 = vld [vmem:[#allocation2 + $0xc] sm:$0xff]
    %v181 = vld [vmem:[#allocation2 + $0x14] sm:$0xf]
    %186 = vrot.lane.b32.xlu0 %v178, 120
    %v187 = vpop.permute.xlu0 %186
    %188 = vrot.lane.b32.xlu0 %v179, 120
    %v189 = vpop.permute.xlu0 %188
    %190 = vrot.lane.b32.xlu0 %v180, 120
    %v191 = vpop.permute.xlu0 %190
    %192 = vrot.lane.b32.xlu0 %v181, 120
    %v193 = vpop.permute.xlu0 %192
    %v194 = vrot.slane %v187, 4
    %v195 = vrot.slane %v189, 4
    %v196 = vrot.slane %v191, 4
    %v197 = vrot.slane %v193, 4
    %vm198 = vcmask 1043456
    %v199 = vsel %vm198, %v194, %v195
    %vm200 = vcmask 982016
    %v201 = vsel %vm200, %v187, %v199
    %v202 = vsel %vm198, %v196, %v197
    %v203 = vsel %vm200, %v191, %v202
    %206 = vst.msk [vmem:[#allocation3 + $0x40] sm:$0xff] %vm124, %v201
    %207 = vst.msk [vmem:[#allocation3 + $0x48] sm:$0xff] %vm124, %v203
    %v208 = vld [vmem:[%s1] sm:$0xf]
    %v209 = vld [vmem:[%s1 + $0x4] sm:$0xf]
    %v210 = vld [vmem:[%s1 + $0x8] sm:$0xf]
    %v211 = vld [vmem:[%s1 + $0xc] sm:$0xf]
    %v212 = vld [vmem:[%s1 + $0x10] sm:$0xf]
    %v213 = vld [vmem:[%s1 + $0x14] sm:$0xf]
    %v214 = vld [vmem:[%s1 + $0x18] sm:$0xf]
    %v215 = vld [vmem:[%s1 + $0x1c] sm:$0xf]
    %v216 = vld [vmem:[#allocation3] sm:$0xff]
    %v217 = vld [vmem:[#allocation3 + $0x8] sm:$0xff]
    %v218 = vld [vmem:[#allocation3 + $0x10] sm:$0xff]
    %v219 = vld [vmem:[#allocation3 + $0x18] sm:$0xff]
    %v220 = vld [vmem:[#allocation3 + $0x20] sm:$0xff]
    %v221 = vld [vmem:[#allocation3 + $0x28] sm:$0xff]
    %v222 = vld [vmem:[#allocation3 + $0x30] sm:$0xff]
    %v223 = vld [vmem:[#allocation3 + $0x38] sm:$0xff]
    %v224 = vld [vmem:[#allocation3 + $0x40] sm:$0xff]
    %v225 = vld [vmem:[#allocation3 + $0x48] sm:$0xff]
    %v226 = vld [vmem:[%s2] sm:$0xff]
    %v227 = vld [vmem:[%s2 + $0x8] sm:$0xff]
    %v228 = vld [vmem:[%s2 + $0x10] sm:$0xff]
    %v229 = vld [vmem:[%s2 + $0x18] sm:$0xff]
    %v230 = vld [vmem:[%s2 + $0x20] sm:$0xff]
    %v231 = vld [vmem:[%s2 + $0x28] sm:$0xff]
    %v232 = vld [vmem:[%s2 + $0x30] sm:$0xff]
    %v233 = vld [vmem:[%s2 + $0x38] sm:$0xff]
    %235 = vset.pattern.permute.xlu0 0
    %236 = vperm.xlu0 %235, %v226
    %v237 = vpop.permute.xlu0 %236
    %240 = vset.pattern.permute.xlu0 0
    %241 = vperm.xlu0 %240, %v227
    %v242 = vpop.permute.xlu0 %241
    %245 = vset.pattern.permute.xlu0 0
    %246 = vperm.xlu0 %245, %v228
    %v247 = vpop.permute.xlu0 %246
    %250 = vset.pattern.permute.xlu0 0
    %251 = vperm.xlu0 %250, %v229
    %v252 = vpop.permute.xlu0 %251
    %255 = vset.pattern.permute.xlu0 0
    %256 = vperm.xlu0 %255, %v230
    %v257 = vpop.permute.xlu0 %256
    %260 = vset.pattern.permute.xlu0 0
    %261 = vperm.xlu0 %260, %v231
    %v262 = vpop.permute.xlu0 %261
    %265 = vset.pattern.permute.xlu0 0
    %266 = vperm.xlu0 %265, %v232
    %v267 = vpop.permute.xlu0 %266
    %270 = vset.pattern.permute.xlu0 0
    %271 = vperm.xlu0 %270, %v233
    %v272 = vpop.permute.xlu0 %271
    %v282 = vunpack.c.l.b16 %v208
    %v283 = vunpack.c.l.b16 %v209
    %v284 = vunpack.c.l.b16 %v210
    %v285 = vunpack.c.l.b16 %v211
    %v286 = vunpack.c.l.b16 %v212
    %v287 = vunpack.c.l.b16 %v213
    %v288 = vunpack.c.l.b16 %v214
    %v289 = vunpack.c.l.b16 %v215
    %v290 = vpack.c.b16 %v283, %v282
    %v291 = vpack.c.b16 %v285, %v284
    %v292 = vpack.c.b16 %v287, %v286
    %v293 = vpack.c.b16 %v289, %v288
    %v304 = vunpack.c.l.b16 %v216
    %v305 = vunpack.c.h.b16 %v216
    %v306 = vunpack.c.l.b16 %v217
    %v307 = vunpack.c.h.b16 %v217
    %v308 = vunpack.c.l.b16 %v218
    %v309 = vunpack.c.h.b16 %v218
    %v310 = vunpack.c.l.b16 %v219
    %v311 = vunpack.c.h.b16 %v219
    %v312 = vunpack.c.l.b16 %v220
    %v313 = vunpack.c.h.b16 %v220
    %v314 = vunpack.c.l.b16 %v221
    %v315 = vunpack.c.h.b16 %v221
    %v316 = vunpack.c.l.b16 %v222
    %v317 = vunpack.c.h.b16 %v222
    %v318 = vunpack.c.l.b16 %v223
    %v319 = vunpack.c.h.b16 %v223
    %v320 = vunpack.c.l.b16 %v224
    %v321 = vunpack.c.h.b16 %v224
    %v322 = vunpack.c.l.b16 %v225
    %v323 = vunpack.c.h.b16 %v225
    %v324 = vpack.c.b16 %v306, %v304
    %v325 = vpack.c.b16 %v307, %v305
    %v326 = vpack.c.b16 %v310, %v308
    %v327 = vpack.c.b16 %v311, %v309
    %v328 = vpack.c.b16 %v314, %v312
    %v329 = vpack.c.b16 %v315, %v313
    %v330 = vpack.c.b16 %v318, %v316
    %v331 = vpack.c.b16 %v319, %v317
    %v332 = vpack.c.b16 %v322, %v320
    %v333 = vpack.c.b16 %v323, %v321
    %vm344 = vcmask 654336
    %v346 = vsel %vm344, %v290, 0
    %v349 = vsel %vm344, %v291, 0
    %v352 = vsel %vm344, %v292, 0
    %v355 = vsel %vm344, %v293, 0
    %357 = vmatpush.bf16.msra.mxu0 0
    %358 = vmatpush.bf16.msra.mxu0 0
    %359 = vmatpush.bf16.msra.mxu0 0
    %360 = vmatpush.bf16.msra.mxu0 %v332
    %361 = vmatpush.bf16.msra.mxu0 %v330
    %362 = vmatpush.bf16.msra.mxu0 %v328
    %363 = vmatpush.bf16.msra.mxu0 %v326
    %364 = vmatpush.bf16.msra.mxu0 %v324
    %365 = vmatmul.bf16.gmra.mxu0 %v346
    %v366 = vpop.f32.mrf.mxu0
    %v367 = vadd.f32 %v237, %v366
    %v368 = vpop.f32.mrf.mxu0
    %v369 = vadd.f32 %v242, %v368
    %370 = vmatmul.bf16.gmra.mxu0 %v349
    %v371 = vpop.f32.mrf.mxu0
    %v372 = vadd.f32 %v247, %v371
    %v373 = vpop.f32.mrf.mxu0
    %v374 = vadd.f32 %v252, %v373
    %375 = vmatmul.bf16.gmra.mxu0 %v352
    %v376 = vpop.f32.mrf.mxu0
    %v377 = vadd.f32 %v257, %v376
    %v378 = vpop.f32.mrf.mxu0
    %v379 = vadd.f32 %v262, %v378
    %380 = vmatmul.bf16.gmra.mxu0 %v355
    %v381 = vpop.f32.mrf.mxu0
    %v382 = vadd.f32 %v267, %v381
    %v383 = vpop.f32.mrf.mxu0
    %v384 = vadd.f32 %v272, %v383
    %385 = vdwg.mxu0
    %386 = vmatpush.bf16.msra.mxu0 0
    %387 = vmatpush.bf16.msra.mxu0 0
    %388 = vmatpush.bf16.msra.mxu0 0
    %389 = vmatpush.bf16.msra.mxu0 %v333
    %390 = vmatpush.bf16.msra.mxu0 %v331
    %391 = vmatpush.bf16.msra.mxu0 %v329
    %392 = vmatpush.bf16.msra.mxu0 %v327
    %393 = vmatpush.bf16.msra.mxu0 %v325
    %394 = vmatmul.bf16.gmra.mxu0 %v346
    %v395 = vpop.f32.mrf.mxu0
    %v396 = vadd.f32 %v237, %v395
    %v397 = vpop.f32.mrf.mxu0
    %v398 = vadd.f32 %v242, %v397
    %399 = vmatmul.bf16.gmra.mxu0 %v349
    %v400 = vpop.f32.mrf.mxu0
    %v401 = vadd.f32 %v247, %v400
    %v402 = vpop.f32.mrf.mxu0
    %v403 = vadd.f32 %v252, %v402
    %404 = vmatmul.bf16.gmra.mxu0 %v352
    %v405 = vpop.f32.mrf.mxu0
    %v406 = vadd.f32 %v257, %v405
    %v407 = vpop.f32.mrf.mxu0
    %v408 = vadd.f32 %v262, %v407
    %409 = vmatmul.bf16.gmra.mxu0 %v355
    %v410 = vpop.f32.mrf.mxu0
    %v411 = vadd.f32 %v267, %v410
    %v412 = vpop.f32.mrf.mxu0
    %v413 = vadd.f32 %v272, %v412
    %414 = vdwg.mxu0
    %v415 = vtanh.pop %v367
    %v416 = vtanh.pop %v396
    %v417 = vtanh.pop %v369
    %v418 = vtanh.pop %v398
    %v419 = vtanh.pop %v372
    %v420 = vtanh.pop %v401
    %v421 = vtanh.pop %v374
    %v422 = vtanh.pop %v403
    %v423 = vtanh.pop %v377
    %v424 = vtanh.pop %v406
    %v425 = vtanh.pop %v379
    %v426 = vtanh.pop %v408
    %v427 = vtanh.pop %v382
    %v428 = vtanh.pop %v411
    %v429 = vtanh.pop %v384
    %v430 = vtanh.pop %v413
    %v431 = vpack.c.bf16 %v416, %v415
    %v432 = vpack.c.bf16 %v418, %v417
    %v433 = vpack.c.bf16 %v420, %v419
    %v434 = vpack.c.bf16 %v422, %v421
    %v435 = vpack.c.bf16 %v424, %v423
    %v436 = vpack.c.bf16 %v426, %v425
    %v437 = vpack.c.bf16 %v428, %v427
    %v438 = vpack.c.bf16 %v430, %v429
    %439 = vst.msk [vmem:[#allocation4] sm:$0xff] %vm124, %v431
    %440 = vst.msk [vmem:[#allocation4 + $0x8] sm:$0xff] %vm124, %v432
    %441 = vst.msk [vmem:[#allocation4 + $0x10] sm:$0xff] %vm124, %v433
    %442 = vst.msk [vmem:[#allocation4 + $0x18] sm:$0xff] %vm124, %v434
    %443 = vst.msk [vmem:[#allocation4 + $0x20] sm:$0xff] %vm124, %v435
    %444 = vst.msk [vmem:[#allocation4 + $0x28] sm:$0xff] %vm124, %v436
    %445 = vst.msk [vmem:[#allocation4 + $0x30] sm:$0xff] %vm124, %v437
    %446 = vst.msk [vmem:[#allocation4 + $0x38] sm:$0xff] %vm124, %v438
    %v447 = vld [vmem:[#allocation4] sm:$0xff]
    %v448 = vld [vmem:[#allocation4 + $0x8] sm:$0xff]
    %v449 = vld [vmem:[#allocation4 + $0x10] sm:$0xff]
    %v450 = vld [vmem:[#allocation4 + $0x18] sm:$0xff]
    %v451 = vld [vmem:[#allocation4 + $0x20] sm:$0xff]
    %v452 = vld [vmem:[#allocation4 + $0x28] sm:$0xff]
    %v453 = vld [vmem:[#allocation4 + $0x30] sm:$0xff]
    %v454 = vld [vmem:[#allocation4 + $0x38] sm:$0xff]
    %v455 = vunpack.c.l.bf16 %v447
    %v456 = vunpack.c.h.bf16 %v447
    %v457 = vunpack.c.l.bf16 %v448
    %v458 = vunpack.c.h.bf16 %v448
    %v459 = vunpack.c.l.bf16 %v449
    %v460 = vunpack.c.h.bf16 %v449
    %v461 = vunpack.c.l.bf16 %v450
    %v462 = vunpack.c.h.bf16 %v450
    %v463 = vunpack.c.l.bf16 %v451
    %v464 = vunpack.c.h.bf16 %v451
    %v465 = vunpack.c.l.bf16 %v452
    %v466 = vunpack.c.h.bf16 %v452
    %v467 = vunpack.c.l.bf16 %v453
    %v468 = vunpack.c.h.bf16 %v453
    %v469 = vunpack.c.l.bf16 %v454
    %v470 = vunpack.c.h.bf16 %v454
    %487 = vrot.lane.b32.xlu0 %v455, 127
    %v488 = vpop.permute.xlu0 %487
    %489 = vrot.lane.b32.xlu0 %v456, 127
    %v490 = vpop.permute.xlu0 %489
    %491 = vrot.lane.b32.xlu0 %v457, 127
    %v492 = vpop.permute.xlu0 %491
    %493 = vrot.lane.b32.xlu0 %v458, 127
    %v494 = vpop.permute.xlu0 %493
    %495 = vrot.lane.b32.xlu0 %v459, 127
    %v496 = vpop.permute.xlu0 %495
    %497 = vrot.lane.b32.xlu0 %v460, 127
    %v498 = vpop.permute.xlu0 %497
    %499 = vrot.lane.b32.xlu0 %v461, 127
    %v500 = vpop.permute.xlu0 %499
    %501 = vrot.lane.b32.xlu0 %v462, 127
    %v502 = vpop.permute.xlu0 %501
    %503 = vrot.lane.b32.xlu0 %v463, 127
    %v504 = vpop.permute.xlu0 %503
    %505 = vrot.lane.b32.xlu0 %v464, 127
    %v506 = vpop.permute.xlu0 %505
    %507 = vrot.lane.b32.xlu0 %v465, 127
    %v508 = vpop.permute.xlu0 %507
    %509 = vrot.lane.b32.xlu0 %v466, 127
    %v510 = vpop.permute.xlu0 %509
    %511 = vrot.lane.b32.xlu0 %v467, 127
    %v512 = vpop.permute.xlu0 %511
    %513 = vrot.lane.b32.xlu0 %v468, 127
    %v514 = vpop.permute.xlu0 %513
    %515 = vrot.lane.b32.xlu0 %v469, 127
    %v516 = vpop.permute.xlu0 %515
    %517 = vrot.lane.b32.xlu0 %v470, 127
    %v518 = vpop.permute.xlu0 %517
    %vm519 = vcmask 1039360
    %v520 = vsel %vm519, %v488, %v490
    %v521 = vsel %vm519, %v492, %v494
    %v522 = vsel %vm519, %v496, %v498
    %v523 = vsel %vm519, %v500, %v502
    %v524 = vsel %vm519, %v504, %v506
    %v525 = vsel %vm519, %v508, %v510
    %v526 = vsel %vm519, %v512, %v514
    %v527 = vsel %vm519, %v516, %v518
    %v544 = vmax.f32 %v455, %v520
    %v545 = vmax.f32 %v456, %v490
    %v546 = vmax.f32 %v457, %v521
    %v547 = vmax.f32 %v458, %v494
    %v548 = vmax.f32 %v459, %v522
    %v549 = vmax.f32 %v460, %v498
    %v550 = vmax.f32 %v461, %v523
    %v551 = vmax.f32 %v462, %v502
    %v552 = vmax.f32 %v463, %v524
    %v553 = vmax.f32 %v464, %v506
    %v554 = vmax.f32 %v465, %v525
    %v555 = vmax.f32 %v466, %v510
    %v556 = vmax.f32 %v467, %v526
    %v557 = vmax.f32 %v468, %v514
    %v558 = vmax.f32 %v469, %v527
    %v559 = vmax.f32 %v470, %v518
    %v560 = vpack.c.bf16 %v545, %v544
    %v561 = vpack.c.bf16 %v547, %v546
    %v562 = vpack.c.bf16 %v549, %v548
    %v563 = vpack.c.bf16 %v551, %v550
    %v564 = vpack.c.bf16 %v553, %v552
    %v565 = vpack.c.bf16 %v555, %v554
    %v566 = vpack.c.bf16 %v557, %v556
    %v567 = vpack.c.bf16 %v559, %v558
    %v568 = vunpack.c.l.bf16 %v560
    %v569 = vunpack.c.h.bf16 %v560
    %v570 = vunpack.c.l.bf16 %v561
    %v571 = vunpack.c.h.bf16 %v561
    %v572 = vunpack.c.l.bf16 %v562
    %v573 = vunpack.c.h.bf16 %v562
    %v574 = vunpack.c.l.bf16 %v563
    %v575 = vunpack.c.h.bf16 %v563
    %v576 = vunpack.c.l.bf16 %v564
    %v577 = vunpack.c.h.bf16 %v564
    %v578 = vunpack.c.l.bf16 %v565
    %v579 = vunpack.c.h.bf16 %v565
    %v580 = vunpack.c.l.bf16 %v566
    %v581 = vunpack.c.h.bf16 %v566
    %v582 = vunpack.c.l.bf16 %v567
    %v583 = vunpack.c.h.bf16 %v567
    %584 = vrot.lane.b32.xlu0 %v455, 126
    %v585 = vpop.permute.xlu0 %584
    %586 = vrot.lane.b32.xlu0 %v456, 126
    %v587 = vpop.permute.xlu0 %586
    %588 = vrot.lane.b32.xlu0 %v457, 126
    %v589 = vpop.permute.xlu0 %588
    %590 = vrot.lane.b32.xlu0 %v458, 126
    %v591 = vpop.permute.xlu0 %590
    %592 = vrot.lane.b32.xlu0 %v459, 126
    %v593 = vpop.permute.xlu0 %592
    %594 = vrot.lane.b32.xlu0 %v460, 126
    %v595 = vpop.permute.xlu0 %594
    %596 = vrot.lane.b32.xlu0 %v461, 126
    %v597 = vpop.permute.xlu0 %596
    %598 = vrot.lane.b32.xlu0 %v462, 126
    %v599 = vpop.permute.xlu0 %598
    %600 = vrot.lane.b32.xlu0 %v463, 126
    %v601 = vpop.permute.xlu0 %600
    %602 = vrot.lane.b32.xlu0 %v464, 126
    %v603 = vpop.permute.xlu0 %602
    %604 = vrot.lane.b32.xlu0 %v465, 126
    %v605 = vpop.permute.xlu0 %604
    %606 = vrot.lane.b32.xlu0 %v466, 126
    %v607 = vpop.permute.xlu0 %606
    %608 = vrot.lane.b32.xlu0 %v467, 126
    %v609 = vpop.permute.xlu0 %608
    %610 = vrot.lane.b32.xlu0 %v468, 126
    %v611 = vpop.permute.xlu0 %610
    %612 = vrot.lane.b32.xlu0 %v469, 126
    %v613 = vpop.permute.xlu0 %612
    %614 = vrot.lane.b32.xlu0 %v470, 126
    %v615 = vpop.permute.xlu0 %614
    %vm616 = vcmask 1031168
    %v617 = vsel %vm616, %v585, %v587
    %v618 = vsel %vm616, %v589, %v591
    %v619 = vsel %vm616, %v593, %v595
    %v620 = vsel %vm616, %v597, %v599
    %v621 = vsel %vm616, %v601, %v603
    %v622 = vsel %vm616, %v605, %v607
    %v623 = vsel %vm616, %v609, %v611
    %v624 = vsel %vm616, %v613, %v615
    %v641 = vmax.f32 %v568, %v617
    %v642 = vmax.f32 %v569, %v587
    %v643 = vmax.f32 %v570, %v618
    %v644 = vmax.f32 %v571, %v591
    %v645 = vmax.f32 %v572, %v619
    %v646 = vmax.f32 %v573, %v595
    %v647 = vmax.f32 %v574, %v620
    %v648 = vmax.f32 %v575, %v599
    %v649 = vmax.f32 %v576, %v621
    %v650 = vmax.f32 %v577, %v603
    %v651 = vmax.f32 %v578, %v622
    %v652 = vmax.f32 %v579, %v607
    %v653 = vmax.f32 %v580, %v623
    %v654 = vmax.f32 %v581, %v611
    %v655 = vmax.f32 %v582, %v624
    %v656 = vmax.f32 %v583, %v615
    %v657 = vpack.c.bf16 %v643, %v641
    %v658 = vpack.c.bf16 %v644, %v642
    %v659 = vpack.c.bf16 %v647, %v645
    %v660 = vpack.c.bf16 %v648, %v646
    %v661 = vpack.c.bf16 %v651, %v649
    %v662 = vpack.c.bf16 %v652, %v650
    %v663 = vpack.c.bf16 %v655, %v653
    %v664 = vpack.c.bf16 %v656, %v654
    %v665 = vld [vmem:[%s3] sm:$0xf]
    %v666 = vld [vmem:[%s3 + $0x4] sm:$0xf]
    %v667 = vld [vmem:[%s3 + $0x8] sm:$0xf]
    %v668 = vld [vmem:[%s3 + $0xc] sm:$0xf]
    %v669 = vld [vmem:[%s3 + $0x10] sm:$0xf]
    %v670 = vld [vmem:[%s3 + $0x14] sm:$0xf]
    %v671 = vld [vmem:[%s3 + $0x18] sm:$0xf]
    %v672 = vld [vmem:[%s3 + $0x1c] sm:$0xf]
    %v673 = vld [vmem:[%s3 + $0x20] sm:$0xf]
    %v674 = vld [vmem:[%s3 + $0x24] sm:$0xf]
    %v675 = vld [vmem:[%s3 + $0x28] sm:$0xf]
    %v676 = vld [vmem:[%s3 + $0x2c] sm:$0xf]
    %v677 = vld [vmem:[%s3 + $0x30] sm:$0xf]
    %v678 = vld [vmem:[%s3 + $0x34] sm:$0xf]
    %v679 = vld [vmem:[%s3 + $0x38] sm:$0xf]
    %v680 = vld [vmem:[%s3 + $0x3c] sm:$0xf]
    %v681 = vld [vmem:[%s3 + $0x40] sm:$0xf]
    %v682 = vld [vmem:[%s3 + $0x44] sm:$0xf]
    %v683 = vld [vmem:[%s3 + $0x48] sm:$0xf]
    %v684 = vld [vmem:[%s3 + $0x4c] sm:$0xf]
    %v685 = vld [vmem:[%s3 + $0x50] sm:$0xf]
    %v686 = vld [vmem:[%s3 + $0x54] sm:$0xf]
    %v687 = vld [vmem:[%s3 + $0x58] sm:$0xf]
    %v688 = vld [vmem:[%s3 + $0x5c] sm:$0xf]
    %v689 = vld [vmem:[%s3 + $0x60] sm:$0xf]
    %v690 = vld [vmem:[%s3 + $0x64] sm:$0xf]
    %v691 = vld [vmem:[%s3 + $0x68] sm:$0xf]
    %v692 = vld [vmem:[%s3 + $0x6c] sm:$0xf]
    %v693 = vld [vmem:[%s3 + $0x70] sm:$0xf]
    %v694 = vld [vmem:[%s3 + $0x74] sm:$0xf]
    %v695 = vld [vmem:[%s3 + $0x78] sm:$0xf]
    %v727 = vunpack.c.l.b16 %v665
    %v728 = vunpack.c.l.b16 %v666
    %v729 = vunpack.c.l.b16 %v667
    %v730 = vunpack.c.l.b16 %v668
    %v731 = vunpack.c.l.b16 %v669
    %v732 = vunpack.c.l.b16 %v670
    %v733 = vunpack.c.l.b16 %v671
    %v734 = vunpack.c.l.b16 %v672
    %v735 = vunpack.c.l.b16 %v673
    %v736 = vunpack.c.l.b16 %v674
    %v737 = vunpack.c.l.b16 %v675
    %v738 = vunpack.c.l.b16 %v676
    %v739 = vunpack.c.l.b16 %v677
    %v740 = vunpack.c.l.b16 %v678
    %v741 = vunpack.c.l.b16 %v679
    %v742 = vunpack.c.l.b16 %v680
    %v743 = vunpack.c.l.b16 %v681
    %v744 = vunpack.c.l.b16 %v682
    %v745 = vunpack.c.l.b16 %v683
    %v746 = vunpack.c.l.b16 %v684
    %v747 = vunpack.c.l.b16 %v685
    %v748 = vunpack.c.l.b16 %v686
    %v749 = vunpack.c.l.b16 %v687
    %v750 = vunpack.c.l.b16 %v688
    %v751 = vunpack.c.l.b16 %v689
    %v752 = vunpack.c.l.b16 %v690
    %v753 = vunpack.c.l.b16 %v691
    %v754 = vunpack.c.l.b16 %v692
    %v755 = vunpack.c.l.b16 %v693
    %v756 = vunpack.c.l.b16 %v694
    %v757 = vunpack.c.l.b16 %v695
    %v758 = vpack.c.b16 %v728, %v727
    %v759 = vpack.c.b16 %v730, %v729
    %v760 = vpack.c.b16 %v732, %v731
    %v761 = vpack.c.b16 %v734, %v733
    %v762 = vpack.c.b16 %v736, %v735
    %v763 = vpack.c.b16 %v738, %v737
    %v764 = vpack.c.b16 %v740, %v739
    %v765 = vpack.c.b16 %v742, %v741
    %v766 = vpack.c.b16 %v744, %v743
    %v767 = vpack.c.b16 %v746, %v745
    %v768 = vpack.c.b16 %v748, %v747
    %v769 = vpack.c.b16 %v750, %v749
    %v770 = vpack.c.b16 %v752, %v751
    %v771 = vpack.c.b16 %v754, %v753
    %v772 = vpack.c.b16 %v756, %v755
    %v773 = vpack.c.b16 %v757, %v757
    %vm789 = vcmask 982016
    %v791 = vsel %vm789, %v658, 0
    %v794 = vsel %vm789, %v660, 0
    %v797 = vsel %vm789, %v662, 0
    %v800 = vsel %vm789, %v664, 0
    %v803 = vsel %vm122, %v773, 0
    %805 = vmatpush.bf16.msra.mxu0 %v765
    %806 = vmatpush.bf16.msra.mxu0 %v764
    %807 = vmatpush.bf16.msra.mxu0 %v763
    %808 = vmatpush.bf16.msra.mxu0 %v762
    %809 = vmatpush.bf16.msra.mxu0 %v761
    %810 = vmatpush.bf16.msra.mxu0 %v760
    %811 = vmatpush.bf16.msra.mxu0 %v759
    %812 = vmatpush.bf16.msra.mxu0 %v758
    %813 = vmatmul.bf16.gmra.mxu0 %v657
    %v814 = vpop.f32.mrf.mxu0
    %v815 = vadd.f32 0.0, %v814
    %v816 = vpop.f32.mrf.mxu0
    %v817 = vadd.f32 0.0, %v816
    %818 = vmatmul.bf16.gmra.mxu0 %v659
    %v819 = vpop.f32.mrf.mxu0
    %v820 = vadd.f32 0.0, %v819
    %v821 = vpop.f32.mrf.mxu0
    %v822 = vadd.f32 0.0, %v821
    %823 = vmatmul.bf16.gmra.mxu0 %v661
    %v824 = vpop.f32.mrf.mxu0
    %v825 = vadd.f32 0.0, %v824
    %v826 = vpop.f32.mrf.mxu0
    %v827 = vadd.f32 0.0, %v826
    %828 = vmatmul.bf16.gmra.mxu0 %v663
    %v829 = vpop.f32.mrf.mxu0
    %v830 = vadd.f32 0.0, %v829
    %v831 = vpop.f32.mrf.mxu0
    %v832 = vadd.f32 0.0, %v831
    %833 = vdwg.mxu0
    %834 = vmatpush.bf16.msra.mxu0 %v803
    %835 = vmatpush.bf16.msra.mxu0 %v772
    %836 = vmatpush.bf16.msra.mxu0 %v771
    %837 = vmatpush.bf16.msra.mxu0 %v770
    %838 = vmatpush.bf16.msra.mxu0 %v769
    %839 = vmatpush.bf16.msra.mxu0 %v768
    %840 = vmatpush.bf16.msra.mxu0 %v767
    %841 = vmatpush.bf16.msra.mxu0 %v766
    %842 = vmatmul.bf16.gmra.mxu0 %v791
    %v843 = vpop.f32.mrf.mxu0
    %v844 = vadd.f32 %v815, %v843
    %v845 = vpop.f32.mrf.mxu0
    %v846 = vadd.f32 %v817, %v845
    %847 = vmatmul.bf16.gmra.mxu0 %v794
    %v848 = vpop.f32.mrf.mxu0
    %v849 = vadd.f32 %v820, %v848
    %v850 = vpop.f32.mrf.mxu0
    %v851 = vadd.f32 %v822, %v850
    %852 = vmatmul.bf16.gmra.mxu0 %v797
    %v853 = vpop.f32.mrf.mxu0
    %v854 = vadd.f32 %v825, %v853
    %v855 = vpop.f32.mrf.mxu0
    %v856 = vadd.f32 %v827, %v855
    %857 = vmatmul.bf16.gmra.mxu0 %v800
    %v858 = vpop.f32.mrf.mxu0
    %v859 = vadd.f32 %v830, %v858
    %v860 = vpop.f32.mrf.mxu0
    %v861 = vadd.f32 %v832, %v860
    %862 = vdwg.mxu0
    %863 = vst.msk [vmem:[#allocation2] sm:$0xf] %vm92, 0
    %864 = vst.msk [vmem:[#allocation2 + $0xc] sm:$0xf] %vm92, 0
    %865 = vst.msk [vmem:[#allocation2 + $0x18] sm:$0xf] %vm92, 0
    %866 = vst.msk [vmem:[#allocation2 + $0x24] sm:$0xf] %vm92, 0
    %867 = vst.msk [vmem:[#allocation2 + $0x30] sm:$0xf] %vm92, 0
    %868 = vst.msk [vmem:[#allocation2 + $0x3c] sm:$0xf] %vm92, 0
    %869 = vst.msk [vmem:[#allocation2 + $0x48] sm:$0xf] %vm92, 0
    %870 = vst.msk [vmem:[#allocation2 + $0x54] sm:$0xf] %vm92, 0
    %871 = vst.msk [vmem:[#allocation2 + $0x4] sm:$0xf] %vm92, 0
    %872 = vst.msk [vmem:[#allocation2 + $0x10] sm:$0xf] %vm92, 0
    %873 = vst.msk [vmem:[#allocation2 + $0x1c] sm:$0xf] %vm92, 0
    %874 = vst.msk [vmem:[#allocation2 + $0x28] sm:$0xf] %vm92, 0
    %875 = vst.msk [vmem:[#allocation2 + $0x34] sm:$0xf] %vm92, 0
    %876 = vst.msk [vmem:[#allocation2 + $0x40] sm:$0xf] %vm92, 0
    %877 = vst.msk [vmem:[#allocation2 + $0x4c] sm:$0xf] %vm92, 0
    %878 = vst.msk [vmem:[#allocation2 + $0x58] sm:$0xf] %vm92, 0
    %v879 = vpack.c.bf16 %v844, %v844
    %v880 = vpack.c.bf16 %v846, %v846
    %v881 = vpack.c.bf16 %v849, %v849
    %v882 = vpack.c.bf16 %v851, %v851
    %v883 = vpack.c.bf16 %v854, %v854
    %v884 = vpack.c.bf16 %v856, %v856
    %v885 = vpack.c.bf16 %v859, %v859
    %v886 = vpack.c.bf16 %v861, %v861
    %895 = vrot.lane.b32.xlu0 %v879, 4
    %v896 = vpop.permute.xlu0 %895
    %897 = vrot.lane.b32.xlu0 %v880, 4
    %v898 = vpop.permute.xlu0 %897
    %899 = vrot.lane.b32.xlu0 %v881, 4
    %v900 = vpop.permute.xlu0 %899
    %901 = vrot.lane.b32.xlu0 %v882, 4
    %v902 = vpop.permute.xlu0 %901
    %903 = vrot.lane.b32.xlu0 %v883, 4
    %v904 = vpop.permute.xlu0 %903
    %905 = vrot.lane.b32.xlu0 %v884, 4
    %v906 = vpop.permute.xlu0 %905
    %907 = vrot.lane.b32.xlu0 %v885, 4
    %v908 = vpop.permute.xlu0 %907
    %909 = vrot.lane.b32.xlu0 %v886, 4
    %v910 = vpop.permute.xlu0 %909
    %919 = vst.msk [vmem:[#allocation2] sm:$0xf] %vm115, %v896
    %920 = vst.msk [vmem:[#allocation2 + $0xc] sm:$0xf] %vm115, %v898
    %921 = vst.msk [vmem:[#allocation2 + $0x18] sm:$0xf] %vm115, %v900
    %922 = vst.msk [vmem:[#allocation2 + $0x24] sm:$0xf] %vm115, %v902
    %923 = vst.msk [vmem:[#allocation2 + $0x30] sm:$0xf] %vm115, %v904
    %924 = vst.msk [vmem:[#allocation2 + $0x3c] sm:$0xf] %vm115, %v906
    %925 = vst.msk [vmem:[#allocation2 + $0x48] sm:$0xf] %vm115, %v908
    %926 = vst.msk [vmem:[#allocation2 + $0x54] sm:$0xf] %vm115, %v910
    %v927 = vld [vmem:[#allocation2] sm:$0xf]
    %v928 = vld [vmem:[#allocation2 + $0xc] sm:$0xf]
    %v929 = vld [vmem:[#allocation2 + $0x18] sm:$0xf]
    %v930 = vld [vmem:[#allocation2 + $0x24] sm:$0xf]
    %v931 = vld [vmem:[#allocation2 + $0x30] sm:$0xf]
    %v932 = vld [vmem:[#allocation2 + $0x3c] sm:$0xf]
    %v933 = vld [vmem:[#allocation2 + $0x48] sm:$0xf]
    %v934 = vld [vmem:[#allocation2 + $0x54] sm:$0xf]
    %vm935 = vcmask 1010688
    %936 = vst.msk [vmem:[#allocation3] sm:$0xf] %vm935, %v927
    %937 = vst.msk [vmem:[#allocation3 + $0x8] sm:$0xf] %vm935, %v928
    %938 = vst.msk [vmem:[#allocation3 + $0x10] sm:$0xf] %vm935, %v929
    %939 = vst.msk [vmem:[#allocation3 + $0x18] sm:$0xf] %vm935, %v930
    %940 = vst.msk [vmem:[#allocation3 + $0x20] sm:$0xf] %vm935, %v931
    %941 = vst.msk [vmem:[#allocation3 + $0x28] sm:$0xf] %vm935, %v932
    %942 = vst.msk [vmem:[#allocation3 + $0x30] sm:$0xf] %vm935, %v933
    %943 = vst.msk [vmem:[#allocation3 + $0x38] sm:$0xf] %vm935, %v934
    %v944 = vld [vmem:[#allocation2] sm:$0xf]
    %v945 = vld [vmem:[#allocation2 + $0xc] sm:$0xf]
    %v946 = vld [vmem:[#allocation2 + $0x18] sm:$0xf]
    %v947 = vld [vmem:[#allocation2 + $0x24] sm:$0xf]
    %v948 = vld [vmem:[#allocation2 + $0x30] sm:$0xf]
    %v949 = vld [vmem:[#allocation2 + $0x3c] sm:$0xf]
    %v950 = vld [vmem:[#allocation2 + $0x48] sm:$0xf]
    %v951 = vld [vmem:[#allocation2 + $0x54] sm:$0xf]
    %960 = vrot.lane.b32.xlu0 %v944, 126
    %v961 = vpop.permute.xlu0 %960
    %962 = vrot.lane.b32.xlu0 %v945, 126
    %v963 = vpop.permute.xlu0 %962
    %964 = vrot.lane.b32.xlu0 %v946, 126
    %v965 = vpop.permute.xlu0 %964
    %966 = vrot.lane.b32.xlu0 %v947, 126
    %v967 = vpop.permute.xlu0 %966
    %968 = vrot.lane.b32.xlu0 %v948, 126
    %v969 = vpop.permute.xlu0 %968
    %970 = vrot.lane.b32.xlu0 %v949, 126
    %v971 = vpop.permute.xlu0 %970
    %972 = vrot.lane.b32.xlu0 %v950, 126
    %v973 = vpop.permute.xlu0 %972
    %974 = vrot.lane.b32.xlu0 %v951, 126
    %v975 = vpop.permute.xlu0 %974
    %984 = vst.msk [vmem:[#allocation3 + $0x40] sm:$0xf] %vm935, %v961
    %985 = vst.msk [vmem:[#allocation3 + $0x48] sm:$0xf] %vm935, %v963
    %986 = vst.msk [vmem:[#allocation3 + $0x50] sm:$0xf] %vm935, %v965
    %987 = vst.msk [vmem:[#allocation3 + $0x58] sm:$0xf] %vm935, %v967
    %988 = vst.msk [vmem:[#allocation3 + $0x60] sm:$0xf] %vm935, %v969
    %989 = vst.msk [vmem:[#allocation3 + $0x68] sm:$0xf] %vm935, %v971
    %990 = vst.msk [vmem:[#allocation3 + $0x70] sm:$0xf] %vm935, %v973
    %991 = vst.msk [vmem:[#allocation3 + $0x78] sm:$0xf] %vm935, %v975
    %v992 = vld [vmem:[#allocation2] sm:$0xf]
    %v993 = vld [vmem:[#allocation2 + $0xc] sm:$0xf]
    %v994 = vld [vmem:[#allocation2 + $0x18] sm:$0xf]
    %v995 = vld [vmem:[#allocation2 + $0x24] sm:$0xf]
    %v996 = vld [vmem:[#allocation2 + $0x30] sm:$0xf]
    %v997 = vld [vmem:[#allocation2 + $0x3c] sm:$0xf]
    %v998 = vld [vmem:[#allocation2 + $0x48] sm:$0xf]
    %v999 = vld [vmem:[#allocation2 + $0x54] sm:$0xf]
    %1008 = vrot.lane.b32.xlu0 %v992, 124
    %v1009 = vpop.permute.xlu0 %1008
    %1010 = vrot.lane.b32.xlu0 %v993, 124
    %v1011 = vpop.permute.xlu0 %1010
    %1012 = vrot.lane.b32.xlu0 %v994, 124
    %v1013 = vpop.permute.xlu0 %1012
    %1014 = vrot.lane.b32.xlu0 %v995, 124
    %v1015 = vpop.permute.xlu0 %1014
    %1016 = vrot.lane.b32.xlu0 %v996, 124
    %v1017 = vpop.permute.xlu0 %1016
    %1018 = vrot.lane.b32.xlu0 %v997, 124
    %v1019 = vpop.permute.xlu0 %1018
    %1020 = vrot.lane.b32.xlu0 %v998, 124
    %v1021 = vpop.permute.xlu0 %1020
    %1022 = vrot.lane.b32.xlu0 %v999, 124
    %v1023 = vpop.permute.xlu0 %1022
    %1032 = vst.msk [vmem:[#allocation3 + $0x80] sm:$0xf] %vm935, %v1009
    %1033 = vst.msk [vmem:[#allocation3 + $0x88] sm:$0xf] %vm935, %v1011
    %1034 = vst.msk [vmem:[#allocation3 + $0x90] sm:$0xf] %vm935, %v1013
    %1035 = vst.msk [vmem:[#allocation3 + $0x98] sm:$0xf] %vm935, %v1015
    %1036 = vst.msk [vmem:[#allocation3 + $0xa0] sm:$0xf] %vm935, %v1017
    %1037 = vst.msk [vmem:[#allocation3 + $0xa8] sm:$0xf] %vm935, %v1019
    %1038 = vst.msk [vmem:[#allocation3 + $0xb0] sm:$0xf] %vm935, %v1021
    %1039 = vst.msk [vmem:[#allocation3 + $0xb8] sm:$0xf] %vm935, %v1023
    %v1040 = vld [vmem:[#allocation2] sm:$0xff]
    %v1041 = vld [vmem:[#allocation2 + $0xc] sm:$0xff]
    %v1042 = vld [vmem:[#allocation2 + $0x18] sm:$0xff]
    %v1043 = vld [vmem:[#allocation2 + $0x24] sm:$0xff]
    %v1044 = vld [vmem:[#allocation2 + $0x30] sm:$0xff]
    %v1045 = vld [vmem:[#allocation2 + $0x3c] sm:$0xff]
    %v1046 = vld [vmem:[#allocation2 + $0x48] sm:$0xff]
    %v1047 = vld [vmem:[#allocation2 + $0x54] sm:$0xff]
    %1056 = vrot.lane.b32.xlu0 %v1040, 122
    %v1057 = vpop.permute.xlu0 %1056
    %1058 = vrot.lane.b32.xlu0 %v1041, 122
    %v1059 = vpop.permute.xlu0 %1058
    %1060 = vrot.lane.b32.xlu0 %v1042, 122
    %v1061 = vpop.permute.xlu0 %1060
    %1062 = vrot.lane.b32.xlu0 %v1043, 122
    %v1063 = vpop.permute.xlu0 %1062
    %1064 = vrot.lane.b32.xlu0 %v1044, 122
    %v1065 = vpop.permute.xlu0 %1064
    %1066 = vrot.lane.b32.xlu0 %v1045, 122
    %v1067 = vpop.permute.xlu0 %1066
    %1068 = vrot.lane.b32.xlu0 %v1046, 122
    %v1069 = vpop.permute.xlu0 %1068
    %1070 = vrot.lane.b32.xlu0 %v1047, 122
    %v1071 = vpop.permute.xlu0 %1070
    %v1072 = vrot.slane %v1057, 4
    %v1073 = vrot.slane %v1059, 4
    %v1074 = vrot.slane %v1061, 4
    %v1075 = vrot.slane %v1063, 4
    %v1076 = vrot.slane %v1065, 4
    %v1077 = vrot.slane %v1067, 4
    %v1078 = vrot.slane %v1069, 4
    %v1079 = vrot.slane %v1071, 4
    %v1080 = vsel %vm171, %v1057, %v1072
    %v1081 = vsel %vm171, %v1059, %v1073
    %v1082 = vsel %vm171, %v1061, %v1074
    %v1083 = vsel %vm171, %v1063, %v1075
    %v1084 = vsel %vm171, %v1065, %v1076
    %v1085 = vsel %vm171, %v1067, %v1077
    %v1086 = vsel %vm171, %v1069, %v1078
    %v1087 = vsel %vm171, %v1071, %v1079
    %1096 = vst.msk [vmem:[#allocation3 + $0xc0] sm:$0xf] %vm935, %v1080
    %1097 = vst.msk [vmem:[#allocation3 + $0xc8] sm:$0xf] %vm935, %v1081
    %1098 = vst.msk [vmem:[#allocation3 + $0xd0] sm:$0xf] %vm935, %v1082
    %1099 = vst.msk [vmem:[#allocation3 + $0xd8] sm:$0xf] %vm935, %v1083
    %1100 = vst.msk [vmem:[#allocation3 + $0xe0] sm:$0xf] %vm935, %v1084
    %1101 = vst.msk [vmem:[#allocation3 + $0xe8] sm:$0xf] %vm935, %v1085
    %1102 = vst.msk [vmem:[#allocation3 + $0xf0] sm:$0xf] %vm935, %v1086
    %1103 = vst.msk [vmem:[#allocation3 + $0xf8] sm:$0xf] %vm935, %v1087
    %v1104 = vld [vmem:[#allocation2] sm:$0xff]
    %v1105 = vld [vmem:[#allocation2 + $0xc] sm:$0xff]
    %v1106 = vld [vmem:[#allocation2 + $0x18] sm:$0xff]
    %v1107 = vld [vmem:[#allocation2 + $0x24] sm:$0xff]
    %v1108 = vld [vmem:[#allocation2 + $0x30] sm:$0xff]
    %v1109 = vld [vmem:[#allocation2 + $0x3c] sm:$0xff]
    %v1110 = vld [vmem:[#allocation2 + $0x48] sm:$0xff]
    %v1111 = vld [vmem:[#allocation2 + $0x54] sm:$0xff]
    %1120 = vrot.lane.b32.xlu0 %v1104, 120
    %v1121 = vpop.permute.xlu0 %1120
    %1122 = vrot.lane.b32.xlu0 %v1105, 120
    %v1123 = vpop.permute.xlu0 %1122
    %1124 = vrot.lane.b32.xlu0 %v1106, 120
    %v1125 = vpop.permute.xlu0 %1124
    %1126 = vrot.lane.b32.xlu0 %v1107, 120
    %v1127 = vpop.permute.xlu0 %1126
    %1128 = vrot.lane.b32.xlu0 %v1108, 120
    %v1129 = vpop.permute.xlu0 %1128
    %1130 = vrot.lane.b32.xlu0 %v1109, 120
    %v1131 = vpop.permute.xlu0 %1130
    %1132 = vrot.lane.b32.xlu0 %v1110, 120
    %v1133 = vpop.permute.xlu0 %1132
    %1134 = vrot.lane.b32.xlu0 %v1111, 120
    %v1135 = vpop.permute.xlu0 %1134
    %v1136 = vrot.slane %v1121, 4
    %v1137 = vrot.slane %v1123, 4
    %v1138 = vrot.slane %v1125, 4
    %v1139 = vrot.slane %v1127, 4
    %v1140 = vrot.slane %v1129, 4
    %v1141 = vrot.slane %v1131, 4
    %v1142 = vrot.slane %v1133, 4
    %v1143 = vrot.slane %v1135, 4
    %v1144 = vsel %vm200, %v1121, %v1136
    %v1145 = vsel %vm200, %v1123, %v1137
    %v1146 = vsel %vm200, %v1125, %v1138
    %v1147 = vsel %vm200, %v1127, %v1139
    %v1148 = vsel %vm200, %v1129, %v1140
    %v1149 = vsel %vm200, %v1131, %v1141
    %v1150 = vsel %vm200, %v1133, %v1142
    %v1151 = vsel %vm200, %v1135, %v1143
    %1160 = vst.msk [vmem:[#allocation3 + $0x100] sm:$0xf] %vm935, %v1144
    %1161 = vst.msk [vmem:[#allocation3 + $0x108] sm:$0xf] %vm935, %v1145
    %1162 = vst.msk [vmem:[#allocation3 + $0x110] sm:$0xf] %vm935, %v1146
    %1163 = vst.msk [vmem:[#allocation3 + $0x118] sm:$0xf] %vm935, %v1147
    %1164 = vst.msk [vmem:[#allocation3 + $0x120] sm:$0xf] %vm935, %v1148
    %1165 = vst.msk [vmem:[#allocation3 + $0x128] sm:$0xf] %vm935, %v1149
    %1166 = vst.msk [vmem:[#allocation3 + $0x130] sm:$0xf] %vm935, %v1150
    %1167 = vst.msk [vmem:[#allocation3 + $0x138] sm:$0xf] %vm935, %v1151
    %v1168 = vld [vmem:[%s4] sm:$0xff]
    %v1169 = vld [vmem:[%s4 + $0x8] sm:$0xf]
    %v1170 = vld [vmem:[%s4 + $0xc] sm:$0xff]
    %v1171 = vld [vmem:[%s4 + $0x14] sm:$0xf]
    %v1172 = vld [vmem:[%s4 + $0x18] sm:$0xff]
    %v1173 = vld [vmem:[%s4 + $0x20] sm:$0xf]
    %v1174 = vld [vmem:[%s4 + $0x24] sm:$0xff]
    %v1175 = vld [vmem:[%s4 + $0x2c] sm:$0xf]
    %v1176 = vld [vmem:[%s4 + $0x30] sm:$0xff]
    %v1177 = vld [vmem:[%s4 + $0x38] sm:$0xf]
    %v1178 = vld [vmem:[%s4 + $0x3c] sm:$0xff]
    %v1179 = vld [vmem:[%s4 + $0x44] sm:$0xf]
    %v1180 = vld [vmem:[%s4 + $0x48] sm:$0xff]
    %v1181 = vld [vmem:[%s4 + $0x50] sm:$0xf]
    %v1182 = vld [vmem:[%s4 + $0x54] sm:$0xff]
    %v1183 = vld [vmem:[%s4 + $0x5c] sm:$0xf]
    %v1184 = vld [vmem:[%s4 + $0x60] sm:$0xff]
    %v1185 = vld [vmem:[%s4 + $0x68] sm:$0xf]
    %v1186 = vld [vmem:[%s4 + $0x6c] sm:$0xff]
    %v1187 = vld [vmem:[%s4 + $0x74] sm:$0xf]
    %v1188 = vld [vmem:[%s4 + $0x78] sm:$0xff]
    %v1189 = vld [vmem:[%s4 + $0x80] sm:$0xf]
    %v1190 = vld [vmem:[%s4 + $0x84] sm:$0xff]
    %v1191 = vld [vmem:[%s4 + $0x8c] sm:$0xf]
    %v1192 = vld [vmem:[%s4 + $0x90] sm:$0xff]
    %v1193 = vld [vmem:[%s4 + $0x98] sm:$0xf]
    %v1194 = vld [vmem:[%s4 + $0x9c] sm:$0xff]
    %v1195 = vld [vmem:[%s4 + $0xa4] sm:$0xf]
    %v1196 = vld [vmem:[%s4 + $0xa8] sm:$0xff]
    %v1197 = vld [vmem:[%s4 + $0xb0] sm:$0xf]
    %v1198 = vld [vmem:[%s4 + $0xb4] sm:$0xff]
    %v1199 = vld [vmem:[%s4 + $0xbc] sm:$0xf]
    %v1200 = vld [vmem:[#allocation3] sm:$0xf]
    %v1201 = vld [vmem:[#allocation3 + $0x8] sm:$0xf]
    %v1202 = vld [vmem:[#allocation3 + $0x10] sm:$0xf]
    %v1203 = vld [vmem:[#allocation3 + $0x18] sm:$0xf]
    %v1204 = vld [vmem:[#allocation3 + $0x20] sm:$0xf]
    %v1205 = vld [vmem:[#allocation3 + $0x28] sm:$0xf]
    %v1206 = vld [vmem:[#allocation3 + $0x30] sm:$0xf]
    %v1207 = vld [vmem:[#allocation3 + $0x38] sm:$0xf]
    %v1208 = vld [vmem:[#allocation3 + $0x40] sm:$0xf]
    %v1209 = vld [vmem:[#allocation3 + $0x48] sm:$0xf]
    %v1210 = vld [vmem:[#allocation3 + $0x50] sm:$0xf]
    %v1211 = vld [vmem:[#allocation3 + $0x58] sm:$0xf]
    %v1212 = vld [vmem:[#allocation3 + $0x60] sm:$0xf]
    %v1213 = vld [vmem:[#allocation3 + $0x68] sm:$0xf]
    %v1214 = vld [vmem:[#allocation3 + $0x70] sm:$0xf]
    %v1215 = vld [vmem:[#allocation3 + $0x78] sm:$0xf]
    %v1216 = vld [vmem:[#allocation3 + $0x80] sm:$0xf]
    %v1217 = vld [vmem:[#allocation3 + $0x88] sm:$0xf]
    %v1218 = vld [vmem:[#allocation3 + $0x90] sm:$0xf]
    %v1219 = vld [vmem:[#allocation3 + $0x98] sm:$0xf]
    %v1220 = vld [vmem:[#allocation3 + $0xa0] sm:$0xf]
    %v1221 = vld [vmem:[#allocation3 + $0xa8] sm:$0xf]
    %v1222 = vld [vmem:[#allocation3 + $0xb0] sm:$0xf]
    %v1223 = vld [vmem:[#allocation3 + $0xb8] sm:$0xf]
    %v1224 = vld [vmem:[#allocation3 + $0xc0] sm:$0xf]
    %v1225 = vld [vmem:[#allocation3 + $0xc8] sm:$0xf]
    %v1226 = vld [vmem:[#allocation3 + $0xd0] sm:$0xf]
    %v1227 = vld [vmem:[#allocation3 + $0xd8] sm:$0xf]
    %v1228 = vld [vmem:[#allocation3 + $0xe0] sm:$0xf]
    %v1229 = vld [vmem:[#allocation3 + $0xe8] sm:$0xf]
    %v1230 = vld [vmem:[#allocation3 + $0xf0] sm:$0xf]
    %v1231 = vld [vmem:[#allocation3 + $0xf8] sm:$0xf]
    %v1232 = vld [vmem:[#allocation3 + $0x100] sm:$0xf]
    %v1233 = vld [vmem:[#allocation3 + $0x108] sm:$0xf]
    %v1234 = vld [vmem:[#allocation3 + $0x110] sm:$0xf]
    %v1235 = vld [vmem:[#allocation3 + $0x118] sm:$0xf]
    %v1236 = vld [vmem:[#allocation3 + $0x120] sm:$0xf]
    %v1237 = vld [vmem:[#allocation3 + $0x128] sm:$0xf]
    %v1238 = vld [vmem:[#allocation3 + $0x130] sm:$0xf]
    %v1239 = vld [vmem:[#allocation3 + $0x138] sm:$0xf]
    %v1240 = vld [vmem:[%s5] sm:$0xff]
    %v1241 = vld [vmem:[%s5 + $0x8] sm:$0xff]
    %v1242 = vld [vmem:[%s5 + $0x10] sm:$0xff]
    %v1243 = vld [vmem:[%s5 + $0x18] sm:$0xff]
    %v1244 = vld [vmem:[%s5 + $0x20] sm:$0xff]
    %v1245 = vld [vmem:[%s5 + $0x28] sm:$0xff]
    %v1246 = vld [vmem:[%s5 + $0x30] sm:$0xff]
    %v1247 = vld [vmem:[%s5 + $0x38] sm:$0xff]
    %v1248 = vld [vmem:[%s5 + $0x40] sm:$0xff]
    %v1249 = vld [vmem:[%s5 + $0x48] sm:$0xff]
    %v1250 = vld [vmem:[%s5 + $0x50] sm:$0xff]
    %v1251 = vld [vmem:[%s5 + $0x58] sm:$0xff]
    %v1252 = vld [vmem:[%s5 + $0x60] sm:$0xff]
    %v1253 = vld [vmem:[%s5 + $0x68] sm:$0xff]
    %v1254 = vld [vmem:[%s5 + $0x70] sm:$0xff]
    %v1255 = vld [vmem:[%s5 + $0x78] sm:$0xff]
    %1257 = vset.pattern.permute.xlu0 0
    %1258 = vperm.xlu0 %1257, %v1240
    %v1259 = vpop.permute.xlu0 %1258
    %1262 = vset.pattern.permute.xlu0 0
    %1263 = vperm.xlu0 %1262, %v1241
    %v1264 = vpop.permute.xlu0 %1263
    %1267 = vset.pattern.permute.xlu0 0
    %1268 = vperm.xlu0 %1267, %v1242
    %v1269 = vpop.permute.xlu0 %1268
    %1272 = vset.pattern.permute.xlu0 0
    %1273 = vperm.xlu0 %1272, %v1243
    %v1274 = vpop.permute.xlu0 %1273
    %1277 = vset.pattern.permute.xlu0 0
    %1278 = vperm.xlu0 %1277, %v1244
    %v1279 = vpop.permute.xlu0 %1278
    %1282 = vset.pattern.permute.xlu0 0
    %1283 = vperm.xlu0 %1282, %v1245
    %v1284 = vpop.permute.xlu0 %1283
    %1287 = vset.pattern.permute.xlu0 0
    %1288 = vperm.xlu0 %1287, %v1246
    %v1289 = vpop.permute.xlu0 %1288
    %1292 = vset.pattern.permute.xlu0 0
    %1293 = vperm.xlu0 %1292, %v1247
    %v1294 = vpop.permute.xlu0 %1293
    %1297 = vset.pattern.permute.xlu0 0
    %1298 = vperm.xlu0 %1297, %v1248
    %v1299 = vpop.permute.xlu0 %1298
    %1302 = vset.pattern.permute.xlu0 0
    %1303 = vperm.xlu0 %1302, %v1249
    %v1304 = vpop.permute.xlu0 %1303
    %1307 = vset.pattern.permute.xlu0 0
    %1308 = vperm.xlu0 %1307, %v1250
    %v1309 = vpop.permute.xlu0 %1308
    %1312 = vset.pattern.permute.xlu0 0
    %1313 = vperm.xlu0 %1312, %v1251
    %v1314 = vpop.permute.xlu0 %1313
    %1317 = vset.pattern.permute.xlu0 0
    %1318 = vperm.xlu0 %1317, %v1252
    %v1319 = vpop.permute.xlu0 %1318
    %1322 = vset.pattern.permute.xlu0 0
    %1323 = vperm.xlu0 %1322, %v1253
    %v1324 = vpop.permute.xlu0 %1323
    %1327 = vset.pattern.permute.xlu0 0
    %1328 = vperm.xlu0 %1327, %v1254
    %v1329 = vpop.permute.xlu0 %1328
    %1332 = vset.pattern.permute.xlu0 0
    %1333 = vperm.xlu0 %1332, %v1255
    %v1334 = vpop.permute.xlu0 %1333
    %v1368 = vunpack.c.l.b16 %v1168
    %v1369 = vunpack.c.h.b16 %v1168
    %v1370 = vunpack.c.l.b16 %v1169
    %v1371 = vunpack.c.l.b16 %v1170
    %v1372 = vunpack.c.h.b16 %v1170
    %v1373 = vunpack.c.l.b16 %v1171
    %v1374 = vunpack.c.l.b16 %v1172
    %v1375 = vunpack.c.h.b16 %v1172
    %v1376 = vunpack.c.l.b16 %v1173
    %v1377 = vunpack.c.l.b16 %v1174
    %v1378 = vunpack.c.h.b16 %v1174
    %v1379 = vunpack.c.l.b16 %v1175
    %v1380 = vunpack.c.l.b16 %v1176
    %v1381 = vunpack.c.h.b16 %v1176
    %v1382 = vunpack.c.l.b16 %v1177
    %v1383 = vunpack.c.l.b16 %v1178
    %v1384 = vunpack.c.h.b16 %v1178
    %v1385 = vunpack.c.l.b16 %v1179
    %v1386 = vunpack.c.l.b16 %v1180
    %v1387 = vunpack.c.h.b16 %v1180
    %v1388 = vunpack.c.l.b16 %v1181
    %v1389 = vunpack.c.l.b16 %v1182
    %v1390 = vunpack.c.h.b16 %v1182
    %v1391 = vunpack.c.l.b16 %v1183
    %v1392 = vunpack.c.l.b16 %v1184
    %v1393 = vunpack.c.h.b16 %v1184
    %v1394 = vunpack.c.l.b16 %v1185
    %v1395 = vunpack.c.l.b16 %v1186
    %v1396 = vunpack.c.h.b16 %v1186
    %v1397 = vunpack.c.l.b16 %v1187
    %v1398 = vunpack.c.l.b16 %v1188
    %v1399 = vunpack.c.h.b16 %v1188
    %v1400 = vunpack.c.l.b16 %v1189
    %v1401 = vunpack.c.l.b16 %v1190
    %v1402 = vunpack.c.h.b16 %v1190
    %v1403 = vunpack.c.l.b16 %v1191
    %v1404 = vunpack.c.l.b16 %v1192
    %v1405 = vunpack.c.h.b16 %v1192
    %v1406 = vunpack.c.l.b16 %v1193
    %v1407 = vunpack.c.l.b16 %v1194
    %v1408 = vunpack.c.h.b16 %v1194
    %v1409 = vunpack.c.l.b16 %v1195
    %v1410 = vunpack.c.l.b16 %v1196
    %v1411 = vunpack.c.h.b16 %v1196
    %v1412 = vunpack.c.l.b16 %v1197
    %v1413 = vunpack.c.l.b16 %v1198
    %v1414 = vunpack.c.h.b16 %v1198
    %v1415 = vunpack.c.l.b16 %v1199
    %v1416 = vpack.c.b16 %v1371, %v1368
    %v1417 = vpack.c.b16 %v1372, %v1369
    %v1418 = vpack.c.b16 %v1373, %v1370
    %v1419 = vpack.c.b16 %v1377, %v1374
    %v1420 = vpack.c.b16 %v1378, %v1375
    %v1421 = vpack.c.b16 %v1379, %v1376
    %v1422 = vpack.c.b16 %v1383, %v1380
    %v1423 = vpack.c.b16 %v1384, %v1381
    %v1424 = vpack.c.b16 %v1385, %v1382
    %v1425 = vpack.c.b16 %v1389, %v1386
    %v1426 = vpack.c.b16 %v1390, %v1387
    %v1427 = vpack.c.b16 %v1391, %v1388
    %v1428 = vpack.c.b16 %v1395, %v1392
    %v1429 = vpack.c.b16 %v1396, %v1393
    %v1430 = vpack.c.b16 %v1397, %v1394
    %v1431 = vpack.c.b16 %v1401, %v1398
    %v1432 = vpack.c.b16 %v1402, %v1399
    %v1433 = vpack.c.b16 %v1403, %v1400
    %v1434 = vpack.c.b16 %v1407, %v1404
    %v1435 = vpack.c.b16 %v1408, %v1405
    %v1436 = vpack.c.b16 %v1409, %v1406
    %v1437 = vpack.c.b16 %v1413, %v1410
    %v1438 = vpack.c.b16 %v1414, %v1411
    %v1439 = vpack.c.b16 %v1415, %v1412
    %v1496 = vunpack.c.l.b16 %v1200
    %v1497 = vunpack.c.l.b16 %v1201
    %v1498 = vunpack.c.l.b16 %v1202
    %v1499 = vunpack.c.l.b16 %v1203
    %v1500 = vunpack.c.l.b16 %v1204
    %v1501 = vunpack.c.l.b16 %v1205
    %v1502 = vunpack.c.l.b16 %v1206
    %v1503 = vunpack.c.l.b16 %v1207
    %v1504 = vunpack.c.l.b16 %v1208
    %v1505 = vunpack.c.l.b16 %v1209
    %v1506 = vunpack.c.l.b16 %v1210
    %v1507 = vunpack.c.l.b16 %v1211
    %v1508 = vunpack.c.l.b16 %v1212
    %v1509 = vunpack.c.l.b16 %v1213
    %v1510 = vunpack.c.l.b16 %v1214
    %v1511 = vunpack.c.l.b16 %v1215
    %v1512 = vunpack.c.l.b16 %v1216
    %v1513 = vunpack.c.l.b16 %v1217
    %v1514 = vunpack.c.l.b16 %v1218
    %v1515 = vunpack.c.l.b16 %v1219
    %v1516 = vunpack.c.l.b16 %v1220
    %v1517 = vunpack.c.l.b16 %v1221
    %v1518 = vunpack.c.l.b16 %v1222
    %v1519 = vunpack.c.l.b16 %v1223
    %v1520 = vunpack.c.l.b16 %v1224
    %v1521 = vunpack.c.l.b16 %v1225
    %v1522 = vunpack.c.l.b16 %v1226
    %v1523 = vunpack.c.l.b16 %v1227
    %v1524 = vunpack.c.l.b16 %v1228
    %v1525 = vunpack.c.l.b16 %v1229
    %v1526 = vunpack.c.l.b16 %v1230
    %v1527 = vunpack.c.l.b16 %v1231
    %v1528 = vunpack.c.l.b16 %v1232
    %v1529 = vunpack.c.l.b16 %v1233
    %v1530 = vunpack.c.l.b16 %v1234
    %v1531 = vunpack.c.l.b16 %v1235
    %v1532 = vunpack.c.l.b16 %v1236
    %v1533 = vunpack.c.l.b16 %v1237
    %v1534 = vunpack.c.l.b16 %v1238
    %v1535 = vunpack.c.l.b16 %v1239
    %v1536 = vpack.c.b16 %v1497, %v1496
    %v1537 = vpack.c.b16 %v1499, %v1498
    %v1538 = vpack.c.b16 %v1501, %v1500
    %v1539 = vpack.c.b16 %v1503, %v1502
    %v1540 = vpack.c.b16 %v1505, %v1504
    %v1541 = vpack.c.b16 %v1507, %v1506
    %v1542 = vpack.c.b16 %v1509, %v1508
    %v1543 = vpack.c.b16 %v1511, %v1510
    %v1544 = vpack.c.b16 %v1513, %v1512
    %v1545 = vpack.c.b16 %v1515, %v1514
    %v1546 = vpack.c.b16 %v1517, %v1516
    %v1547 = vpack.c.b16 %v1519, %v1518
    %v1548 = vpack.c.b16 %v1521, %v1520
    %v1549 = vpack.c.b16 %v1523, %v1522
    %v1550 = vpack.c.b16 %v1525, %v1524
    %v1551 = vpack.c.b16 %v1527, %v1526
    %v1552 = vpack.c.b16 %v1529, %v1528
    %v1553 = vpack.c.b16 %v1531, %v1530
    %v1554 = vpack.c.b16 %v1533, %v1532
    %v1555 = vpack.c.b16 %v1535, %v1534
    %vm1576 = vcmask 523264
    %v1578 = vsel %vm1576, %v1418, 0
    %v1581 = vsel %vm1576, %v1421, 0
    %v1584 = vsel %vm1576, %v1424, 0
    %v1587 = vsel %vm1576, %v1427, 0
    %v1590 = vsel %vm1576, %v1430, 0
    %v1593 = vsel %vm1576, %v1433, 0
    %v1596 = vsel %vm1576, %v1436, 0
    %v1599 = vsel %vm1576, %v1439, 0
    %1601 = vmatpush.bf16.msra.mxu0 %v1543
    %1602 = vmatpush.bf16.msra.mxu0 %v1542
    %1603 = vmatpush.bf16.msra.mxu0 %v1541
    %1604 = vmatpush.bf16.msra.mxu0 %v1540
    %1605 = vmatpush.bf16.msra.mxu0 %v1539
    %1606 = vmatpush.bf16.msra.mxu0 %v1538
    %1607 = vmatpush.bf16.msra.mxu0 %v1537
    %1608 = vmatpush.bf16.msra.mxu0 %v1536
    %1609 = vmatmul.bf16.gmra.mxu0 %v1416
    %v1610 = vpop.f32.mrf.mxu0
    %v1611 = vadd.f32 %v1259, %v1610
    %v1612 = vpop.f32.mrf.mxu0
    %v1613 = vadd.f32 %v1264, %v1612
    %1614 = vmatmul.bf16.gmra.mxu0 %v1419
    %v1615 = vpop.f32.mrf.mxu0
    %v1616 = vadd.f32 %v1269, %v1615
    %v1617 = vpop.f32.mrf.mxu0
    %v1618 = vadd.f32 %v1274, %v1617
    %1619 = vmatmul.bf16.gmra.mxu0 %v1422
    %v1620 = vpop.f32.mrf.mxu0
    %v1621 = vadd.f32 %v1279, %v1620
    %v1622 = vpop.f32.mrf.mxu0
    %v1623 = vadd.f32 %v1284, %v1622
    %1624 = vmatmul.bf16.gmra.mxu0 %v1425
    %v1625 = vpop.f32.mrf.mxu0
    %v1626 = vadd.f32 %v1289, %v1625
    %v1627 = vpop.f32.mrf.mxu0
    %v1628 = vadd.f32 %v1294, %v1627
    %1629 = vmatmul.bf16.gmra.mxu0 %v1428
    %v1630 = vpop.f32.mrf.mxu0
    %v1631 = vadd.f32 %v1299, %v1630
    %v1632 = vpop.f32.mrf.mxu0
    %v1633 = vadd.f32 %v1304, %v1632
    %1634 = vmatmul.bf16.gmra.mxu0 %v1431
    %v1635 = vpop.f32.mrf.mxu0
    %v1636 = vadd.f32 %v1309, %v1635
    %v1637 = vpop.f32.mrf.mxu0
    %v1638 = vadd.f32 %v1314, %v1637
    %1639 = vmatmul.bf16.gmra.mxu0 %v1434
    %v1640 = vpop.f32.mrf.mxu0
    %v1641 = vadd.f32 %v1319, %v1640
    %v1642 = vpop.f32.mrf.mxu0
    %v1643 = vadd.f32 %v1324, %v1642
    %1644 = vmatmul.bf16.gmra.mxu0 %v1437
    %v1645 = vpop.f32.mrf.mxu0
    %v1646 = vadd.f32 %v1329, %v1645
    %v1647 = vpop.f32.mrf.mxu0
    %v1648 = vadd.f32 %v1334, %v1647
    %1649 = vdwg.mxu0
    %1650 = vmatpush.bf16.msra.mxu0 %v1551
    %1651 = vmatpush.bf16.msra.mxu0 %v1550
    %1652 = vmatpush.bf16.msra.mxu0 %v1549
    %1653 = vmatpush.bf16.msra.mxu0 %v1548
    %1654 = vmatpush.bf16.msra.mxu0 %v1547
    %1655 = vmatpush.bf16.msra.mxu0 %v1546
    %1656 = vmatpush.bf16.msra.mxu0 %v1545
    %1657 = vmatpush.bf16.msra.mxu0 %v1544
    %1658 = vmatmul.bf16.gmra.mxu0 %v1417
    %v1659 = vpop.f32.mrf.mxu0
    %v1660 = vadd.f32 %v1611, %v1659
    %v1661 = vpop.f32.mrf.mxu0
    %v1662 = vadd.f32 %v1613, %v1661
    %1663 = vmatmul.bf16.gmra.mxu0 %v1420
    %v1664 = vpop.f32.mrf.mxu0
    %v1665 = vadd.f32 %v1616, %v1664
    %v1666 = vpop.f32.mrf.mxu0
    %v1667 = vadd.f32 %v1618, %v1666
    %1668 = vmatmul.bf16.gmra.mxu0 %v1423
    %v1669 = vpop.f32.mrf.mxu0
    %v1670 = vadd.f32 %v1621, %v1669
    %v1671 = vpop.f32.mrf.mxu0
    %v1672 = vadd.f32 %v1623, %v1671
    %1673 = vmatmul.bf16.gmra.mxu0 %v1426
    %v1674 = vpop.f32.mrf.mxu0
    %v1675 = vadd.f32 %v1626, %v1674
    %v1676 = vpop.f32.mrf.mxu0
    %v1677 = vadd.f32 %v1628, %v1676
    %1678 = vmatmul.bf16.gmra.mxu0 %v1429
    %v1679 = vpop.f32.mrf.mxu0
    %v1680 = vadd.f32 %v1631, %v1679
    %v1681 = vpop.f32.mrf.mxu0
    %v1682 = vadd.f32 %v1633, %v1681
    %1683 = vmatmul.bf16.gmra.mxu0 %v1432
    %v1684 = vpop.f32.mrf.mxu0
    %v1685 = vadd.f32 %v1636, %v1684
    %v1686 = vpop.f32.mrf.mxu0
    %v1687 = vadd.f32 %v1638, %v1686
    %1688 = vmatmul.bf16.gmra.mxu0 %v1435
    %v1689 = vpop.f32.mrf.mxu0
    %v1690 = vadd.f32 %v1641, %v1689
    %v1691 = vpop.f32.mrf.mxu0
    %v1692 = vadd.f32 %v1643, %v1691
    %1693 = vmatmul.bf16.gmra.mxu0 %v1438
    %v1694 = vpop.f32.mrf.mxu0
    %v1695 = vadd.f32 %v1646, %v1694
    %v1696 = vpop.f32.mrf.mxu0
    %v1697 = vadd.f32 %v1648, %v1696
    %1698 = vdwg.mxu0
    %1699 = vmatpush.bf16.msra.mxu0 0
    %1700 = vmatpush.bf16.msra.mxu0 0
    %1701 = vmatpush.bf16.msra.mxu0 0
    %1702 = vmatpush.bf16.msra.mxu0 0
    %1703 = vmatpush.bf16.msra.mxu0 %v1555
    %1704 = vmatpush.bf16.msra.mxu0 %v1554
    %1705 = vmatpush.bf16.msra.mxu0 %v1553
    %1706 = vmatpush.bf16.msra.mxu0 %v1552
    %1707 = vmatmul.bf16.gmra.mxu0 %v1578
    %v1708 = vpop.f32.mrf.mxu0
    %v1709 = vadd.f32 %v1660, %v1708
    %v1710 = vpop.f32.mrf.mxu0
    %v1711 = vadd.f32 %v1662, %v1710
    %1712 = vmatmul.bf16.gmra.mxu0 %v1581
    %v1713 = vpop.f32.mrf.mxu0
    %v1714 = vadd.f32 %v1665, %v1713
    %v1715 = vpop.f32.mrf.mxu0
    %v1716 = vadd.f32 %v1667, %v1715
    %1717 = vmatmul.bf16.gmra.mxu0 %v1584
    %v1718 = vpop.f32.mrf.mxu0
    %v1719 = vadd.f32 %v1670, %v1718
    %v1720 = vpop.f32.mrf.mxu0
    %v1721 = vadd.f32 %v1672, %v1720
    %1722 = vmatmul.bf16.gmra.mxu0 %v1587
    %v1723 = vpop.f32.mrf.mxu0
    %v1724 = vadd.f32 %v1675, %v1723
    %v1725 = vpop.f32.mrf.mxu0
    %v1726 = vadd.f32 %v1677, %v1725
    %1727 = vmatmul.bf16.gmra.mxu0 %v1590
    %v1728 = vpop.f32.mrf.mxu0
    %v1729 = vadd.f32 %v1680, %v1728
    %v1730 = vpop.f32.mrf.mxu0
    %v1731 = vadd.f32 %v1682, %v1730
    %1732 = vmatmul.bf16.gmra.mxu0 %v1593
    %v1733 = vpop.f32.mrf.mxu0
    %v1734 = vadd.f32 %v1685, %v1733
    %v1735 = vpop.f32.mrf.mxu0
    %v1736 = vadd.f32 %v1687, %v1735
    %1737 = vmatmul.bf16.gmra.mxu0 %v1596
    %v1738 = vpop.f32.mrf.mxu0
    %v1739 = vadd.f32 %v1690, %v1738
    %v1740 = vpop.f32.mrf.mxu0
    %v1741 = vadd.f32 %v1692, %v1740
    %1742 = vmatmul.bf16.gmra.mxu0 %v1599
    %v1743 = vpop.f32.mrf.mxu0
    %v1744 = vadd.f32 %v1695, %v1743
    %v1745 = vpop.f32.mrf.mxu0
    %v1746 = vadd.f32 %v1697, %v1745
    %1747 = vdwg.mxu0
    %v1748 = vtanh.pop %v1709
    %v1749 = vtanh.pop %v1711
    %v1750 = vtanh.pop %v1714
    %v1751 = vtanh.pop %v1716
    %v1752 = vtanh.pop %v1719
    %v1753 = vtanh.pop %v1721
    %v1754 = vtanh.pop %v1724
    %v1755 = vtanh.pop %v1726
    %v1756 = vtanh.pop %v1729
    %v1757 = vtanh.pop %v1731
    %v1758 = vtanh.pop %v1734
    %v1759 = vtanh.pop %v1736
    %v1760 = vtanh.pop %v1739
    %v1761 = vtanh.pop %v1741
    %v1762 = vtanh.pop %v1744
    %v1763 = vtanh.pop %v1746
    %v1764 = vpack.c.bf16 %v1748, %v1748
    %v1765 = vpack.c.bf16 %v1749, %v1749
    %v1766 = vpack.c.bf16 %v1750, %v1750
    %v1767 = vpack.c.bf16 %v1751, %v1751
    %v1768 = vpack.c.bf16 %v1752, %v1752
    %v1769 = vpack.c.bf16 %v1753, %v1753
    %v1770 = vpack.c.bf16 %v1754, %v1754
    %v1771 = vpack.c.bf16 %v1755, %v1755
    %v1772 = vpack.c.bf16 %v1756, %v1756
    %v1773 = vpack.c.bf16 %v1757, %v1757
    %v1774 = vpack.c.bf16 %v1758, %v1758
    %v1775 = vpack.c.bf16 %v1759, %v1759
    %v1776 = vpack.c.bf16 %v1760, %v1760
    %v1777 = vpack.c.bf16 %v1761, %v1761
    %v1778 = vpack.c.bf16 %v1762, %v1762
    %v1779 = vpack.c.bf16 %v1763, %v1763
    %1780 = vst.msk [vmem:[#allocation4] sm:$0xf] %vm935, %v1764
    %1781 = vst.msk [vmem:[#allocation4 + $0x8] sm:$0xf] %vm935, %v1765
    %1782 = vst.msk [vmem:[#allocation4 + $0x10] sm:$0xf] %vm935, %v1766
    %1783 = vst.msk [vmem:[#allocation4 + $0x18] sm:$0xf] %vm935, %v1767
    %1784 = vst.msk [vmem:[#allocation4 + $0x20] sm:$0xf] %vm935, %v1768
    %1785 = vst.msk [vmem:[#allocation4 + $0x28] sm:$0xf] %vm935, %v1769
    %1786 = vst.msk [vmem:[#allocation4 + $0x30] sm:$0xf] %vm935, %v1770
    %1787 = vst.msk [vmem:[#allocation4 + $0x38] sm:$0xf] %vm935, %v1771
    %1788 = vst.msk [vmem:[#allocation4 + $0x40] sm:$0xf] %vm935, %v1772
    %1789 = vst.msk [vmem:[#allocation4 + $0x48] sm:$0xf] %vm935, %v1773
    %1790 = vst.msk [vmem:[#allocation4 + $0x50] sm:$0xf] %vm935, %v1774
    %1791 = vst.msk [vmem:[#allocation4 + $0x58] sm:$0xf] %vm935, %v1775
    %1792 = vst.msk [vmem:[#allocation4 + $0x60] sm:$0xf] %vm935, %v1776
    %1793 = vst.msk [vmem:[#allocation4 + $0x68] sm:$0xf] %vm935, %v1777
    %1794 = vst.msk [vmem:[#allocation4 + $0x70] sm:$0xf] %vm935, %v1778
    %1795 = vst.msk [vmem:[#allocation4 + $0x78] sm:$0xf] %vm935, %v1779
    %v1796 = vld [vmem:[#allocation4] sm:$0xf]
    %v1797 = vld [vmem:[#allocation4 + $0x8] sm:$0xf]
    %v1798 = vld [vmem:[#allocation4 + $0x10] sm:$0xf]
    %v1799 = vld [vmem:[#allocation4 + $0x18] sm:$0xf]
    %v1800 = vld [vmem:[#allocation4 + $0x20] sm:$0xf]
    %v1801 = vld [vmem:[#allocation4 + $0x28] sm:$0xf]
    %v1802 = vld [vmem:[#allocation4 + $0x30] sm:$0xf]
    %v1803 = vld [vmem:[#allocation4 + $0x38] sm:$0xf]
    %v1804 = vld [vmem:[#allocation4 + $0x40] sm:$0xf]
    %v1805 = vld [vmem:[#allocation4 + $0x48] sm:$0xf]
    %v1806 = vld [vmem:[#allocation4 + $0x50] sm:$0xf]
    %v1807 = vld [vmem:[#allocation4 + $0x58] sm:$0xf]
    %v1808 = vld [vmem:[#allocation4 + $0x60] sm:$0xf]
    %v1809 = vld [vmem:[#allocation4 + $0x68] sm:$0xf]
    %v1810 = vld [vmem:[#allocation4 + $0x70] sm:$0xf]
    %v1811 = vld [vmem:[#allocation4 + $0x78] sm:$0xf]
    %v1812 = vunpack.c.l.bf16 %v1796
    %v1813 = vunpack.c.l.bf16 %v1797
    %v1814 = vunpack.c.l.bf16 %v1798
    %v1815 = vunpack.c.l.bf16 %v1799
    %v1816 = vunpack.c.l.bf16 %v1800
    %v1817 = vunpack.c.l.bf16 %v1801
    %v1818 = vunpack.c.l.bf16 %v1802
    %v1819 = vunpack.c.l.bf16 %v1803
    %v1820 = vunpack.c.l.bf16 %v1804
    %v1821 = vunpack.c.l.bf16 %v1805
    %v1822 = vunpack.c.l.bf16 %v1806
    %v1823 = vunpack.c.l.bf16 %v1807
    %v1824 = vunpack.c.l.bf16 %v1808
    %v1825 = vunpack.c.l.bf16 %v1809
    %v1826 = vunpack.c.l.bf16 %v1810
    %v1827 = vunpack.c.l.bf16 %v1811
    %1844 = vrot.lane.b32.xlu0 %v1812, 127
    %v1845 = vpop.permute.xlu0 %1844
    %1846 = vrot.lane.b32.xlu0 %v1813, 127
    %v1847 = vpop.permute.xlu0 %1846
    %1848 = vrot.lane.b32.xlu0 %v1814, 127
    %v1849 = vpop.permute.xlu0 %1848
    %1850 = vrot.lane.b32.xlu0 %v1815, 127
    %v1851 = vpop.permute.xlu0 %1850
    %1852 = vrot.lane.b32.xlu0 %v1816, 127
    %v1853 = vpop.permute.xlu0 %1852
    %1854 = vrot.lane.b32.xlu0 %v1817, 127
    %v1855 = vpop.permute.xlu0 %1854
    %1856 = vrot.lane.b32.xlu0 %v1818, 127
    %v1857 = vpop.permute.xlu0 %1856
    %1858 = vrot.lane.b32.xlu0 %v1819, 127
    %v1859 = vpop.permute.xlu0 %1858
    %1860 = vrot.lane.b32.xlu0 %v1820, 127
    %v1861 = vpop.permute.xlu0 %1860
    %1862 = vrot.lane.b32.xlu0 %v1821, 127
    %v1863 = vpop.permute.xlu0 %1862
    %1864 = vrot.lane.b32.xlu0 %v1822, 127
    %v1865 = vpop.permute.xlu0 %1864
    %1866 = vrot.lane.b32.xlu0 %v1823, 127
    %v1867 = vpop.permute.xlu0 %1866
    %1868 = vrot.lane.b32.xlu0 %v1824, 127
    %v1869 = vpop.permute.xlu0 %1868
    %1870 = vrot.lane.b32.xlu0 %v1825, 127
    %v1871 = vpop.permute.xlu0 %1870
    %1872 = vrot.lane.b32.xlu0 %v1826, 127
    %v1873 = vpop.permute.xlu0 %1872
    %1874 = vrot.lane.b32.xlu0 %v1827, 127
    %v1875 = vpop.permute.xlu0 %1874
    %v1892 = vmax.f32 %v1812, %v1845
    %v1893 = vmax.f32 %v1813, %v1847
    %v1894 = vmax.f32 %v1814, %v1849
    %v1895 = vmax.f32 %v1815, %v1851
    %v1896 = vmax.f32 %v1816, %v1853
    %v1897 = vmax.f32 %v1817, %v1855
    %v1898 = vmax.f32 %v1818, %v1857
    %v1899 = vmax.f32 %v1819, %v1859
    %v1900 = vmax.f32 %v1820, %v1861
    %v1901 = vmax.f32 %v1821, %v1863
    %v1902 = vmax.f32 %v1822, %v1865
    %v1903 = vmax.f32 %v1823, %v1867
    %v1904 = vmax.f32 %v1824, %v1869
    %v1905 = vmax.f32 %v1825, %v1871
    %v1906 = vmax.f32 %v1826, %v1873
    %v1907 = vmax.f32 %v1827, %v1875
    %v1908 = vpack.c.bf16 %v1892, %v1892
    %v1909 = vpack.c.bf16 %v1893, %v1893
    %v1910 = vpack.c.bf16 %v1894, %v1894
    %v1911 = vpack.c.bf16 %v1895, %v1895
    %v1912 = vpack.c.bf16 %v1896, %v1896
    %v1913 = vpack.c.bf16 %v1897, %v1897
    %v1914 = vpack.c.bf16 %v1898, %v1898
    %v1915 = vpack.c.bf16 %v1899, %v1899
    %v1916 = vpack.c.bf16 %v1900, %v1900
    %v1917 = vpack.c.bf16 %v1901, %v1901
    %v1918 = vpack.c.bf16 %v1902, %v1902
    %v1919 = vpack.c.bf16 %v1903, %v1903
    %v1920 = vpack.c.bf16 %v1904, %v1904
    %v1921 = vpack.c.bf16 %v1905, %v1905
    %v1922 = vpack.c.bf16 %v1906, %v1906
    %v1923 = vpack.c.bf16 %v1907, %v1907
    %v1924 = vunpack.c.l.bf16 %v1908
    %v1925 = vunpack.c.l.bf16 %v1909
    %v1926 = vunpack.c.l.bf16 %v1910
    %v1927 = vunpack.c.l.bf16 %v1911
    %v1928 = vunpack.c.l.bf16 %v1912
    %v1929 = vunpack.c.l.bf16 %v1913
    %v1930 = vunpack.c.l.bf16 %v1914
    %v1931 = vunpack.c.l.bf16 %v1915
    %v1932 = vunpack.c.l.bf16 %v1916
    %v1933 = vunpack.c.l.bf16 %v1917
    %v1934 = vunpack.c.l.bf16 %v1918
    %v1935 = vunpack.c.l.bf16 %v1919
    %v1936 = vunpack.c.l.bf16 %v1920
    %v1937 = vunpack.c.l.bf16 %v1921
    %v1938 = vunpack.c.l.bf16 %v1922
    %v1939 = vunpack.c.l.bf16 %v1923
    %1940 = vrot.lane.b32.xlu0 %v1812, 126
    %v1941 = vpop.permute.xlu0 %1940
    %1942 = vrot.lane.b32.xlu0 %v1813, 126
    %v1943 = vpop.permute.xlu0 %1942
    %1944 = vrot.lane.b32.xlu0 %v1814, 126
    %v1945 = vpop.permute.xlu0 %1944
    %1946 = vrot.lane.b32.xlu0 %v1815, 126
    %v1947 = vpop.permute.xlu0 %1946
    %1948 = vrot.lane.b32.xlu0 %v1816, 126
    %v1949 = vpop.permute.xlu0 %1948
    %1950 = vrot.lane.b32.xlu0 %v1817, 126
    %v1951 = vpop.permute.xlu0 %1950
    %1952 = vrot.lane.b32.xlu0 %v1818, 126
    %v1953 = vpop.permute.xlu0 %1952
    %1954 = vrot.lane.b32.xlu0 %v1819, 126
    %v1955 = vpop.permute.xlu0 %1954
    %1956 = vrot.lane.b32.xlu0 %v1820, 126
    %v1957 = vpop.permute.xlu0 %1956
    %1958 = vrot.lane.b32.xlu0 %v1821, 126
    %v1959 = vpop.permute.xlu0 %1958
    %1960 = vrot.lane.b32.xlu0 %v1822, 126
    %v1961 = vpop.permute.xlu0 %1960
    %1962 = vrot.lane.b32.xlu0 %v1823, 126
    %v1963 = vpop.permute.xlu0 %1962
    %1964 = vrot.lane.b32.xlu0 %v1824, 126
    %v1965 = vpop.permute.xlu0 %1964
    %1966 = vrot.lane.b32.xlu0 %v1825, 126
    %v1967 = vpop.permute.xlu0 %1966
    %1968 = vrot.lane.b32.xlu0 %v1826, 126
    %v1969 = vpop.permute.xlu0 %1968
    %1970 = vrot.lane.b32.xlu0 %v1827, 126
    %v1971 = vpop.permute.xlu0 %1970
    %v1988 = vmax.f32 %v1924, %v1941
    %v1989 = vmax.f32 %v1925, %v1943
    %v1990 = vmax.f32 %v1926, %v1945
    %v1991 = vmax.f32 %v1927, %v1947
    %v1992 = vmax.f32 %v1928, %v1949
    %v1993 = vmax.f32 %v1929, %v1951
    %v1994 = vmax.f32 %v1930, %v1953
    %v1995 = vmax.f32 %v1931, %v1955
    %v1996 = vmax.f32 %v1932, %v1957
    %v1997 = vmax.f32 %v1933, %v1959
    %v1998 = vmax.f32 %v1934, %v1961
    %v1999 = vmax.f32 %v1935, %v1963
    %v2000 = vmax.f32 %v1936, %v1965
    %v2001 = vmax.f32 %v1937, %v1967
    %v2002 = vmax.f32 %v1938, %v1969
    %v2003 = vmax.f32 %v1939, %v1971
    %v2004 = vpack.c.bf16 %v1989, %v1988
    %v2005 = vpack.c.bf16 %v1991, %v1990
    %v2006 = vpack.c.bf16 %v1993, %v1992
    %v2007 = vpack.c.bf16 %v1995, %v1994
    %v2008 = vpack.c.bf16 %v1997, %v1996
    %v2009 = vpack.c.bf16 %v1999, %v1998
    %v2010 = vpack.c.bf16 %v2001, %v2000
    %v2011 = vpack.c.bf16 %v2003, %v2002
    %v2012 = vld [vmem:[%s6] sm:$0xf]
    %v2013 = vld [vmem:[%s6 + $0x4] sm:$0xf]
    %v2014 = vld [vmem:[%s6 + $0x8] sm:$0xf]
    %v2015 = vld [vmem:[%s6 + $0xc] sm:$0xf]
    %v2016 = vld [vmem:[%s6 + $0x10] sm:$0xf]
    %v2017 = vld [vmem:[%s6 + $0x14] sm:$0xf]
    %v2018 = vld [vmem:[%s6 + $0x18] sm:$0xf]
    %v2019 = vld [vmem:[%s6 + $0x1c] sm:$0xf]
    %v2020 = vld [vmem:[%s6 + $0x20] sm:$0xf]
    %v2021 = vld [vmem:[%s6 + $0x24] sm:$0xf]
    %v2022 = vld [vmem:[%s6 + $0x28] sm:$0xf]
    %v2023 = vld [vmem:[%s6 + $0x2c] sm:$0xf]
    %v2024 = vld [vmem:[%s6 + $0x30] sm:$0xf]
    %v2025 = vld [vmem:[%s6 + $0x34] sm:$0xf]
    %v2026 = vld [vmem:[%s6 + $0x38] sm:$0xf]
    %v2027 = vld [vmem:[%s6 + $0x3c] sm:$0x1]
    %v2044 = vunpack.c.l.b16 %v2012
    %v2045 = vunpack.c.l.b16 %v2013
    %v2046 = vunpack.c.l.b16 %v2014
    %v2047 = vunpack.c.l.b16 %v2015
    %v2048 = vunpack.c.l.b16 %v2016
    %v2049 = vunpack.c.l.b16 %v2017
    %v2050 = vunpack.c.l.b16 %v2018
    %v2051 = vunpack.c.l.b16 %v2019
    %v2052 = vunpack.c.l.b16 %v2020
    %v2053 = vunpack.c.l.b16 %v2021
    %v2054 = vunpack.c.l.b16 %v2022
    %v2055 = vunpack.c.l.b16 %v2023
    %v2056 = vunpack.c.l.b16 %v2024
    %v2057 = vunpack.c.l.b16 %v2025
    %v2058 = vunpack.c.l.b16 %v2026
    %v2059 = vunpack.c.l.b16 %v2027
    %v2060 = vpack.c.b16 %v2045, %v2044
    %v2061 = vpack.c.b16 %v2047, %v2046
    %v2062 = vpack.c.b16 %v2049, %v2048
    %v2063 = vpack.c.b16 %v2051, %v2050
    %v2064 = vpack.c.b16 %v2053, %v2052
    %v2065 = vpack.c.b16 %v2055, %v2054
    %v2066 = vpack.c.b16 %v2057, %v2056
    %v2067 = vpack.c.b16 %v2059, %v2058
    %vm2075 = vcmask 998400
    %v2077 = vsel %vm2075, %v2004, 0
    %v2080 = vsel %vm2075, %v2005, 0
    %v2083 = vsel %vm2075, %v2006, 0
    %v2086 = vsel %vm2075, %v2007, 0
    %v2089 = vsel %vm2075, %v2008, 0
    %v2092 = vsel %vm2075, %v2009, 0
    %v2095 = vsel %vm2075, %v2010, 0
    %v2098 = vsel %vm2075, %v2011, 0
    %vm2100 = vcmask 1044480
    %v2102 = vsel %vm2100, %v2067, 0
    %2104 = vmatpush.bf16.msra.mxu0 %v2102
    %2105 = vmatpush.bf16.msra.mxu0 %v2066
    %2106 = vmatpush.bf16.msra.mxu0 %v2065
    %2107 = vmatpush.bf16.msra.mxu0 %v2064
    %2108 = vmatpush.bf16.msra.mxu0 %v2063
    %2109 = vmatpush.bf16.msra.mxu0 %v2062
    %2110 = vmatpush.bf16.msra.mxu0 %v2061
    %2111 = vmatpush.bf16.msra.mxu0 %v2060
    %2112 = vmatmul.bf16.gmra.mxu0 %v2077
    %v2113 = vpop.f32.mrf.mxu0
    %v2114 = vadd.f32 0.0, %v2113
    %v2115 = vpop.f32.mrf.mxu0
    %v2116 = vadd.f32 0.0, %v2115
    %2117 = vmatmul.bf16.gmra.mxu0 %v2080
    %v2118 = vpop.f32.mrf.mxu0
    %v2119 = vadd.f32 0.0, %v2118
    %v2120 = vpop.f32.mrf.mxu0
    %v2121 = vadd.f32 0.0, %v2120
    %2122 = vmatmul.bf16.gmra.mxu0 %v2083
    %v2123 = vpop.f32.mrf.mxu0
    %v2124 = vadd.f32 0.0, %v2123
    %v2125 = vpop.f32.mrf.mxu0
    %v2126 = vadd.f32 0.0, %v2125
    %2127 = vmatmul.bf16.gmra.mxu0 %v2086
    %v2128 = vpop.f32.mrf.mxu0
    %v2129 = vadd.f32 0.0, %v2128
    %v2130 = vpop.f32.mrf.mxu0
    %v2131 = vadd.f32 0.0, %v2130
    %2132 = vmatmul.bf16.gmra.mxu0 %v2089
    %v2133 = vpop.f32.mrf.mxu0
    %v2134 = vadd.f32 0.0, %v2133
    %v2135 = vpop.f32.mrf.mxu0
    %v2136 = vadd.f32 0.0, %v2135
    %2137 = vmatmul.bf16.gmra.mxu0 %v2092
    %v2138 = vpop.f32.mrf.mxu0
    %v2139 = vadd.f32 0.0, %v2138
    %v2140 = vpop.f32.mrf.mxu0
    %v2141 = vadd.f32 0.0, %v2140
    %2142 = vmatmul.bf16.gmra.mxu0 %v2095
    %v2143 = vpop.f32.mrf.mxu0
    %v2144 = vadd.f32 0.0, %v2143
    %v2145 = vpop.f32.mrf.mxu0
    %v2146 = vadd.f32 0.0, %v2145
    %2147 = vmatmul.bf16.gmra.mxu0 %v2098
    %v2148 = vpop.f32.mrf.mxu0
    %v2149 = vadd.f32 0.0, %v2148
    %v2150 = vpop.f32.mrf.mxu0
    %v2151 = vadd.f32 0.0, %v2150
    %2152 = vdwg.mxu0
    %2153 = vst.msk [vmem:[#allocation2] sm:$0xf] %vm92, 0
    %2154 = vst.msk [vmem:[#allocation2 + $0xc] sm:$0xf] %vm92, 0
    %2155 = vst.msk [vmem:[#allocation2 + $0x18] sm:$0xf] %vm92, 0
    %2156 = vst.msk [vmem:[#allocation2 + $0x24] sm:$0xf] %vm92, 0
    %2157 = vst.msk [vmem:[#allocation2 + $0x30] sm:$0xf] %vm92, 0
    %2158 = vst.msk [vmem:[#allocation2 + $0x3c] sm:$0xf] %vm92, 0
    %2159 = vst.msk [vmem:[#allocation2 + $0x48] sm:$0xf] %vm92, 0
    %2160 = vst.msk [vmem:[#allocation2 + $0x54] sm:$0xf] %vm92, 0
    %2161 = vst.msk [vmem:[#allocation2 + $0x60] sm:$0xf] %vm92, 0
    %2162 = vst.msk [vmem:[#allocation2 + $0x6c] sm:$0xf] %vm92, 0
    %2163 = vst.msk [vmem:[#allocation2 + $0x78] sm:$0xf] %vm92, 0
    %2164 = vst.msk [vmem:[#allocation2 + $0x84] sm:$0xf] %vm92, 0
    %2165 = vst.msk [vmem:[#allocation2 + $0x90] sm:$0xf] %vm92, 0
    %2166 = vst.msk [vmem:[#allocation2 + $0x9c] sm:$0xf] %vm92, 0
    %2167 = vst.msk [vmem:[#allocation2 + $0xa8] sm:$0xf] %vm92, 0
    %2168 = vst.msk [vmem:[#allocation2 + $0xb4] sm:$0xf] %vm92, 0
    %vm2169 = vcmask 560648
    %2170 = vst.msk [vmem:[#allocation2] sm:$0xf] %vm2169, 0
    %2171 = vst.msk [vmem:[#allocation2 + $0xc] sm:$0xf] %vm2169, 0
    %2172 = vst.msk [vmem:[#allocation2 + $0x18] sm:$0xf] %vm2169, 0
    %2173 = vst.msk [vmem:[#allocation2 + $0x24] sm:$0xf] %vm2169, 0
    %2174 = vst.msk [vmem:[#allocation2 + $0x30] sm:$0xf] %vm2169, 0
    %2175 = vst.msk [vmem:[#allocation2 + $0x3c] sm:$0xf] %vm2169, 0
    %2176 = vst.msk [vmem:[#allocation2 + $0x48] sm:$0xf] %vm2169, 0
    %2177 = vst.msk [vmem:[#allocation2 + $0x54] sm:$0xf] %vm2169, 0
    %2178 = vst.msk [vmem:[#allocation2 + $0x60] sm:$0xf] %vm2169, 0
    %2179 = vst.msk [vmem:[#allocation2 + $0x6c] sm:$0xf] %vm2169, 0
    %2180 = vst.msk [vmem:[#allocation2 + $0x78] sm:$0xf] %vm2169, 0
    %2181 = vst.msk [vmem:[#allocation2 + $0x84] sm:$0xf] %vm2169, 0
    %2182 = vst.msk [vmem:[#allocation2 + $0x90] sm:$0xf] %vm2169, 0
    %2183 = vst.msk [vmem:[#allocation2 + $0x9c] sm:$0xf] %vm2169, 0
    %2184 = vst.msk [vmem:[#allocation2 + $0xa8] sm:$0xf] %vm2169, 0
    %2185 = vst.msk [vmem:[#allocation2 + $0xb4] sm:$0xf] %vm2169, 0
    %v2186 = vpack.c.bf16 %v2114, %v2114
    %v2187 = vpack.c.bf16 %v2116, %v2116
    %v2188 = vpack.c.bf16 %v2119, %v2119
    %v2189 = vpack.c.bf16 %v2121, %v2121
    %v2190 = vpack.c.bf16 %v2124, %v2124
    %v2191 = vpack.c.bf16 %v2126, %v2126
    %v2192 = vpack.c.bf16 %v2129, %v2129
    %v2193 = vpack.c.bf16 %v2131, %v2131
    %v2194 = vpack.c.bf16 %v2134, %v2134
    %v2195 = vpack.c.bf16 %v2136, %v2136
    %v2196 = vpack.c.bf16 %v2139, %v2139
    %v2197 = vpack.c.bf16 %v2141, %v2141
    %v2198 = vpack.c.bf16 %v2144, %v2144
    %v2199 = vpack.c.bf16 %v2146, %v2146
    %v2200 = vpack.c.bf16 %v2149, %v2149
    %v2201 = vpack.c.bf16 %v2151, %v2151
    %2218 = vrot.lane.b32.xlu0 %v2186, 4
    %v2219 = vpop.permute.xlu0 %2218
    %2220 = vrot.lane.b32.xlu0 %v2187, 4
    %v2221 = vpop.permute.xlu0 %2220
    %2222 = vrot.lane.b32.xlu0 %v2188, 4
    %v2223 = vpop.permute.xlu0 %2222
    %2224 = vrot.lane.b32.xlu0 %v2189, 4
    %v2225 = vpop.permute.xlu0 %2224
    %2226 = vrot.lane.b32.xlu0 %v2190, 4
    %v2227 = vpop.permute.xlu0 %2226
    %2228 = vrot.lane.b32.xlu0 %v2191, 4
    %v2229 = vpop.permute.xlu0 %2228
    %2230 = vrot.lane.b32.xlu0 %v2192, 4
    %v2231 = vpop.permute.xlu0 %2230
    %2232 = vrot.lane.b32.xlu0 %v2193, 4
    %v2233 = vpop.permute.xlu0 %2232
    %2234 = vrot.lane.b32.xlu0 %v2194, 4
    %v2235 = vpop.permute.xlu0 %2234
    %2236 = vrot.lane.b32.xlu0 %v2195, 4
    %v2237 = vpop.permute.xlu0 %2236
    %2238 = vrot.lane.b32.xlu0 %v2196, 4
    %v2239 = vpop.permute.xlu0 %2238
    %2240 = vrot.lane.b32.xlu0 %v2197, 4
    %v2241 = vpop.permute.xlu0 %2240
    %2242 = vrot.lane.b32.xlu0 %v2198, 4
    %v2243 = vpop.permute.xlu0 %2242
    %2244 = vrot.lane.b32.xlu0 %v2199, 4
    %v2245 = vpop.permute.xlu0 %2244
    %2246 = vrot.lane.b32.xlu0 %v2200, 4
    %v2247 = vpop.permute.xlu0 %2246
    %2248 = vrot.lane.b32.xlu0 %v2201, 4
    %v2249 = vpop.permute.xlu0 %2248
    %vm2266 = vcmask 527392
    %2267 = vst.msk [vmem:[#allocation2] sm:$0xf] %vm2266, %v2219
    %2268 = vst.msk [vmem:[#allocation2 + $0xc] sm:$0xf] %vm2266, %v2221
    %2269 = vst.msk [vmem:[#allocation2 + $0x18] sm:$0xf] %vm2266, %v2223
    %2270 = vst.msk [vmem:[#allocation2 + $0x24] sm:$0xf] %vm2266, %v2225
    %2271 = vst.msk [vmem:[#allocation2 + $0x30] sm:$0xf] %vm2266, %v2227
    %2272 = vst.msk [vmem:[#allocation2 + $0x3c] sm:$0xf] %vm2266, %v2229
    %2273 = vst.msk [vmem:[#allocation2 + $0x48] sm:$0xf] %vm2266, %v2231
    %2274 = vst.msk [vmem:[#allocation2 + $0x54] sm:$0xf] %vm2266, %v2233
    %2275 = vst.msk [vmem:[#allocation2 + $0x60] sm:$0xf] %vm2266, %v2235
    %2276 = vst.msk [vmem:[#allocation2 + $0x6c] sm:$0xf] %vm2266, %v2237
    %2277 = vst.msk [vmem:[#allocation2 + $0x78] sm:$0xf] %vm2266, %v2239
    %2278 = vst.msk [vmem:[#allocation2 + $0x84] sm:$0xf] %vm2266, %v2241
    %2279 = vst.msk [vmem:[#allocation2 + $0x90] sm:$0xf] %vm2266, %v2243
    %2280 = vst.msk [vmem:[#allocation2 + $0x9c] sm:$0xf] %vm2266, %v2245
    %2281 = vst.msk [vmem:[#allocation2 + $0xa8] sm:$0xf] %vm2266, %v2247
    %2282 = vst.msk [vmem:[#allocation2 + $0xb4] sm:$0xf] %vm2266, %v2249
    %v2283 = vld [vmem:[#allocation2] sm:$0xf]
    %v2284 = vld [vmem:[#allocation2 + $0xc] sm:$0xf]
    %v2285 = vld [vmem:[#allocation2 + $0x18] sm:$0xf]
    %v2286 = vld [vmem:[#allocation2 + $0x24] sm:$0xf]
    %v2287 = vld [vmem:[#allocation2 + $0x30] sm:$0xf]
    %v2288 = vld [vmem:[#allocation2 + $0x3c] sm:$0xf]
    %v2289 = vld [vmem:[#allocation2 + $0x48] sm:$0xf]
    %v2290 = vld [vmem:[#allocation2 + $0x54] sm:$0xf]
    %v2291 = vld [vmem:[#allocation2 + $0x60] sm:$0xf]
    %v2292 = vld [vmem:[#allocation2 + $0x6c] sm:$0xf]
    %v2293 = vld [vmem:[#allocation2 + $0x78] sm:$0xf]
    %v2294 = vld [vmem:[#allocation2 + $0x84] sm:$0xf]
    %v2295 = vld [vmem:[#allocation2 + $0x90] sm:$0xf]
    %v2296 = vld [vmem:[#allocation2 + $0x9c] sm:$0xf]
    %v2297 = vld [vmem:[#allocation2 + $0xa8] sm:$0xf]
    %v2298 = vld [vmem:[#allocation2 + $0xb4] sm:$0xf]
    %vm2299 = vcmask 494592
    %2300 = vst.msk [vmem:[#allocation3] sm:$0xf] %vm2299, %v2283
    %2301 = vst.msk [vmem:[#allocation3 + $0x8] sm:$0xf] %vm2299, %v2284
    %2302 = vst.msk [vmem:[#allocation3 + $0x10] sm:$0xf] %vm2299, %v2285
    %2303 = vst.msk [vmem:[#allocation3 + $0x18] sm:$0xf] %vm2299, %v2286
    %2304 = vst.msk [vmem:[#allocation3 + $0x20] sm:$0xf] %vm2299, %v2287
    %2305 = vst.msk [vmem:[#allocation3 + $0x28] sm:$0xf] %vm2299, %v2288
    %2306 = vst.msk [vmem:[#allocation3 + $0x30] sm:$0xf] %vm2299, %v2289
    %2307 = vst.msk [vmem:[#allocation3 + $0x38] sm:$0xf] %vm2299, %v2290
    %2308 = vst.msk [vmem:[#allocation3 + $0x40] sm:$0xf] %vm2299, %v2291
    %2309 = vst.msk [vmem:[#allocation3 + $0x48] sm:$0xf] %vm2299, %v2292
    %2310 = vst.msk [vmem:[#allocation3 + $0x50] sm:$0xf] %vm2299, %v2293
    %2311 = vst.msk [vmem:[#allocation3 + $0x58] sm:$0xf] %vm2299, %v2294
    %2312 = vst.msk [vmem:[#allocation3 + $0x60] sm:$0xf] %vm2299, %v2295
    %2313 = vst.msk [vmem:[#allocation3 + $0x68] sm:$0xf] %vm2299, %v2296
    %2314 = vst.msk [vmem:[#allocation3 + $0x70] sm:$0xf] %vm2299, %v2297
    %2315 = vst.msk [vmem:[#allocation3 + $0x78] sm:$0xf] %vm2299, %v2298
    %v2316 = vld [vmem:[#allocation2] sm:$0xf]
    %v2317 = vld [vmem:[#allocation2 + $0xc] sm:$0xf]
    %v2318 = vld [vmem:[#allocation2 + $0x18] sm:$0xf]
    %v2319 = vld [vmem:[#allocation2 + $0x24] sm:$0xf]
    %v2320 = vld [vmem:[#allocation2 + $0x30] sm:$0xf]
    %v2321 = vld [vmem:[#allocation2 + $0x3c] sm:$0xf]
    %v2322 = vld [vmem:[#allocation2 + $0x48] sm:$0xf]
    %v2323 = vld [vmem:[#allocation2 + $0x54] sm:$0xf]
    %v2324 = vld [vmem:[#allocation2 + $0x60] sm:$0xf]
    %v2325 = vld [vmem:[#allocation2 + $0x6c] sm:$0xf]
    %v2326 = vld [vmem:[#allocation2 + $0x78] sm:$0xf]
    %v2327 = vld [vmem:[#allocation2 + $0x84] sm:$0xf]
    %v2328 = vld [vmem:[#allocation2 + $0x90] sm:$0xf]
    %v2329 = vld [vmem:[#allocation2 + $0x9c] sm:$0xf]
    %v2330 = vld [vmem:[#allocation2 + $0xa8] sm:$0xf]
    %v2331 = vld [vmem:[#allocation2 + $0xb4] sm:$0xf]
    %2348 = vrot.lane.b32.xlu0 %v2316, 126
    %v2349 = vpop.permute.xlu0 %2348
    %2350 = vrot.lane.b32.xlu0 %v2317, 126
    %v2351 = vpop.permute.xlu0 %2350
    %2352 = vrot.lane.b32.xlu0 %v2318, 126
    %v2353 = vpop.permute.xlu0 %2352
    %2354 = vrot.lane.b32.xlu0 %v2319, 126
    %v2355 = vpop.permute.xlu0 %2354
    %2356 = vrot.lane.b32.xlu0 %v2320, 126
    %v2357 = vpop.permute.xlu0 %2356
    %2358 = vrot.lane.b32.xlu0 %v2321, 126
    %v2359 = vpop.permute.xlu0 %2358
    %2360 = vrot.lane.b32.xlu0 %v2322, 126
    %v2361 = vpop.permute.xlu0 %2360
    %2362 = vrot.lane.b32.xlu0 %v2323, 126
    %v2363 = vpop.permute.xlu0 %2362
    %2364 = vrot.lane.b32.xlu0 %v2324, 126
    %v2365 = vpop.permute.xlu0 %2364
    %2366 = vrot.lane.b32.xlu0 %v2325, 126
    %v2367 = vpop.permute.xlu0 %2366
    %2368 = vrot.lane.b32.xlu0 %v2326, 126
    %v2369 = vpop.permute.xlu0 %2368
    %2370 = vrot.lane.b32.xlu0 %v2327, 126
    %v2371 = vpop.permute.xlu0 %2370
    %2372 = vrot.lane.b32.xlu0 %v2328, 126
    %v2373 = vpop.permute.xlu0 %2372
    %2374 = vrot.lane.b32.xlu0 %v2329, 126
    %v2375 = vpop.permute.xlu0 %2374
    %2376 = vrot.lane.b32.xlu0 %v2330, 126
    %v2377 = vpop.permute.xlu0 %2376
    %2378 = vrot.lane.b32.xlu0 %v2331, 126
    %v2379 = vpop.permute.xlu0 %2378
    %2396 = vst.msk [vmem:[#allocation3 + $0x80] sm:$0xf] %vm2299, %v2349
    %2397 = vst.msk [vmem:[#allocation3 + $0x88] sm:$0xf] %vm2299, %v2351
    %2398 = vst.msk [vmem:[#allocation3 + $0x90] sm:$0xf] %vm2299, %v2353
    %2399 = vst.msk [vmem:[#allocation3 + $0x98] sm:$0xf] %vm2299, %v2355
    %2400 = vst.msk [vmem:[#allocation3 + $0xa0] sm:$0xf] %vm2299, %v2357
    %2401 = vst.msk [vmem:[#allocation3 + $0xa8] sm:$0xf] %vm2299, %v2359
    %2402 = vst.msk [vmem:[#allocation3 + $0xb0] sm:$0xf] %vm2299, %v2361
    %2403 = vst.msk [vmem:[#allocation3 + $0xb8] sm:$0xf] %vm2299, %v2363
    %2404 = vst.msk [vmem:[#allocation3 + $0xc0] sm:$0xf] %vm2299, %v2365
    %2405 = vst.msk [vmem:[#allocation3 + $0xc8] sm:$0xf] %vm2299, %v2367
    %2406 = vst.msk [vmem:[#allocation3 + $0xd0] sm:$0xf] %vm2299, %v2369
    %2407 = vst.msk [vmem:[#allocation3 + $0xd8] sm:$0xf] %vm2299, %v2371
    %2408 = vst.msk [vmem:[#allocation3 + $0xe0] sm:$0xf] %vm2299, %v2373
    %2409 = vst.msk [vmem:[#allocation3 + $0xe8] sm:$0xf] %vm2299, %v2375
    %2410 = vst.msk [vmem:[#allocation3 + $0xf0] sm:$0xf] %vm2299, %v2377
    %2411 = vst.msk [vmem:[#allocation3 + $0xf8] sm:$0xf] %vm2299, %v2379
    %v2412 = vld [vmem:[#allocation2] sm:$0xf]
    %v2413 = vld [vmem:[#allocation2 + $0xc] sm:$0xf]
    %v2414 = vld [vmem:[#allocation2 + $0x18] sm:$0xf]
    %v2415 = vld [vmem:[#allocation2 + $0x24] sm:$0xf]
    %v2416 = vld [vmem:[#allocation2 + $0x30] sm:$0xf]
    %v2417 = vld [vmem:[#allocation2 + $0x3c] sm:$0xf]
    %v2418 = vld [vmem:[#allocation2 + $0x48] sm:$0xf]
    %v2419 = vld [vmem:[#allocation2 + $0x54] sm:$0xf]
    %v2420 = vld [vmem:[#allocation2 + $0x60] sm:$0xf]
    %v2421 = vld [vmem:[#allocation2 + $0x6c] sm:$0xf]
    %v2422 = vld [vmem:[#allocation2 + $0x78] sm:$0xf]
    %v2423 = vld [vmem:[#allocation2 + $0x84] sm:$0xf]
    %v2424 = vld [vmem:[#allocation2 + $0x90] sm:$0xf]
    %v2425 = vld [vmem:[#allocation2 + $0x9c] sm:$0xf]
    %v2426 = vld [vmem:[#allocation2 + $0xa8] sm:$0xf]
    %v2427 = vld [vmem:[#allocation2 + $0xb4] sm:$0xf]
    %2444 = vrot.lane.b32.xlu0 %v2412, 124
    %v2445 = vpop.permute.xlu0 %2444
    %2446 = vrot.lane.b32.xlu0 %v2413, 124
    %v2447 = vpop.permute.xlu0 %2446
    %2448 = vrot.lane.b32.xlu0 %v2414, 124
    %v2449 = vpop.permute.xlu0 %2448
    %2450 = vrot.lane.b32.xlu0 %v2415, 124
    %v2451 = vpop.permute.xlu0 %2450
    %2452 = vrot.lane.b32.xlu0 %v2416, 124
    %v2453 = vpop.permute.xlu0 %2452
    %2454 = vrot.lane.b32.xlu0 %v2417, 124
    %v2455 = vpop.permute.xlu0 %2454
    %2456 = vrot.lane.b32.xlu0 %v2418, 124
    %v2457 = vpop.permute.xlu0 %2456
    %2458 = vrot.lane.b32.xlu0 %v2419, 124
    %v2459 = vpop.permute.xlu0 %2458
    %2460 = vrot.lane.b32.xlu0 %v2420, 124
    %v2461 = vpop.permute.xlu0 %2460
    %2462 = vrot.lane.b32.xlu0 %v2421, 124
    %v2463 = vpop.permute.xlu0 %2462
    %2464 = vrot.lane.b32.xlu0 %v2422, 124
    %v2465 = vpop.permute.xlu0 %2464
    %2466 = vrot.lane.b32.xlu0 %v2423, 124
    %v2467 = vpop.permute.xlu0 %2466
    %2468 = vrot.lane.b32.xlu0 %v2424, 124
    %v2469 = vpop.permute.xlu0 %2468
    %2470 = vrot.lane.b32.xlu0 %v2425, 124
    %v2471 = vpop.permute.xlu0 %2470
    %2472 = vrot.lane.b32.xlu0 %v2426, 124
    %v2473 = vpop.permute.xlu0 %2472
    %2474 = vrot.lane.b32.xlu0 %v2427, 124
    %v2475 = vpop.permute.xlu0 %2474
    %2492 = vst.msk [vmem:[#allocation3 + $0x100] sm:$0xf] %vm2299, %v2445
    %2493 = vst.msk [vmem:[#allocation3 + $0x108] sm:$0xf] %vm2299, %v2447
    %2494 = vst.msk [vmem:[#allocation3 + $0x110] sm:$0xf] %vm2299, %v2449
    %2495 = vst.msk [vmem:[#allocation3 + $0x118] sm:$0xf] %vm2299, %v2451
    %2496 = vst.msk [vmem:[#allocation3 + $0x120] sm:$0xf] %vm2299, %v2453
    %2497 = vst.msk [vmem:[#allocation3 + $0x128] sm:$0xf] %vm2299, %v2455
    %2498 = vst.msk [vmem:[#allocation3 + $0x130] sm:$0xf] %vm2299, %v2457
    %2499 = vst.msk [vmem:[#allocation3 + $0x138] sm:$0xf] %vm2299, %v2459
    %2500 = vst.msk [vmem:[#allocation3 + $0x140] sm:$0xf] %vm2299, %v2461
    %2501 = vst.msk [vmem:[#allocation3 + $0x148] sm:$0xf] %vm2299, %v2463
    %2502 = vst.msk [vmem:[#allocation3 + $0x150] sm:$0xf] %vm2299, %v2465
    %2503 = vst.msk [vmem:[#allocation3 + $0x158] sm:$0xf] %vm2299, %v2467
    %2504 = vst.msk [vmem:[#allocation3 + $0x160] sm:$0xf] %vm2299, %v2469
    %2505 = vst.msk [vmem:[#allocation3 + $0x168] sm:$0xf] %vm2299, %v2471
    %2506 = vst.msk [vmem:[#allocation3 + $0x170] sm:$0xf] %vm2299, %v2473
    %2507 = vst.msk [vmem:[#allocation3 + $0x178] sm:$0xf] %vm2299, %v2475
    %v2508 = vld [vmem:[#allocation2] sm:$0xf]
    %v2509 = vld [vmem:[#allocation2 + $0xc] sm:$0xf]
    %v2510 = vld [vmem:[#allocation2 + $0x18] sm:$0xf]
    %v2511 = vld [vmem:[#allocation2 + $0x24] sm:$0xf]
    %v2512 = vld [vmem:[#allocation2 + $0x30] sm:$0xf]
    %v2513 = vld [vmem:[#allocation2 + $0x3c] sm:$0xf]
    %v2514 = vld [vmem:[#allocation2 + $0x48] sm:$0xf]
    %v2515 = vld [vmem:[#allocation2 + $0x54] sm:$0xf]
    %v2516 = vld [vmem:[#allocation2 + $0x60] sm:$0xf]
    %v2517 = vld [vmem:[#allocation2 + $0x6c] sm:$0xf]
    %v2518 = vld [vmem:[#allocation2 + $0x78] sm:$0xf]
    %v2519 = vld [vmem:[#allocation2 + $0x84] sm:$0xf]
    %v2520 = vld [vmem:[#allocation2 + $0x90] sm:$0xf]
    %v2521 = vld [vmem:[#allocation2 + $0x9c] sm:$0xf]
    %v2522 = vld [vmem:[#allocation2 + $0xa8] sm:$0xf]
    %v2523 = vld [vmem:[#allocation2 + $0xb4] sm:$0xf]
    %2540 = vrot.lane.b32.xlu0 %v2508, 122
    %v2541 = vpop.permute.xlu0 %2540
    %2542 = vrot.lane.b32.xlu0 %v2509, 122
    %v2543 = vpop.permute.xlu0 %2542
    %2544 = vrot.lane.b32.xlu0 %v2510, 122
    %v2545 = vpop.permute.xlu0 %2544
    %2546 = vrot.lane.b32.xlu0 %v2511, 122
    %v2547 = vpop.permute.xlu0 %2546
    %2548 = vrot.lane.b32.xlu0 %v2512, 122
    %v2549 = vpop.permute.xlu0 %2548
    %2550 = vrot.lane.b32.xlu0 %v2513, 122
    %v2551 = vpop.permute.xlu0 %2550
    %2552 = vrot.lane.b32.xlu0 %v2514, 122
    %v2553 = vpop.permute.xlu0 %2552
    %2554 = vrot.lane.b32.xlu0 %v2515, 122
    %v2555 = vpop.permute.xlu0 %2554
    %2556 = vrot.lane.b32.xlu0 %v2516, 122
    %v2557 = vpop.permute.xlu0 %2556
    %2558 = vrot.lane.b32.xlu0 %v2517, 122
    %v2559 = vpop.permute.xlu0 %2558
    %2560 = vrot.lane.b32.xlu0 %v2518, 122
    %v2561 = vpop.permute.xlu0 %2560
    %2562 = vrot.lane.b32.xlu0 %v2519, 122
    %v2563 = vpop.permute.xlu0 %2562
    %2564 = vrot.lane.b32.xlu0 %v2520, 122
    %v2565 = vpop.permute.xlu0 %2564
    %2566 = vrot.lane.b32.xlu0 %v2521, 122
    %v2567 = vpop.permute.xlu0 %2566
    %2568 = vrot.lane.b32.xlu0 %v2522, 122
    %v2569 = vpop.permute.xlu0 %2568
    %2570 = vrot.lane.b32.xlu0 %v2523, 122
    %v2571 = vpop.permute.xlu0 %2570
    %2588 = vst.msk [vmem:[#allocation3 + $0x180] sm:$0xf] %vm2299, %v2541
    %2589 = vst.msk [vmem:[#allocation3 + $0x188] sm:$0xf] %vm2299, %v2543
    %2590 = vst.msk [vmem:[#allocation3 + $0x190] sm:$0xf] %vm2299, %v2545
    %2591 = vst.msk [vmem:[#allocation3 + $0x198] sm:$0xf] %vm2299, %v2547
    %2592 = vst.msk [vmem:[#allocation3 + $0x1a0] sm:$0xf] %vm2299, %v2549
    %2593 = vst.msk [vmem:[#allocation3 + $0x1a8] sm:$0xf] %vm2299, %v2551
    %2594 = vst.msk [vmem:[#allocation3 + $0x1b0] sm:$0xf] %vm2299, %v2553
    %2595 = vst.msk [vmem:[#allocation3 + $0x1b8] sm:$0xf] %vm2299, %v2555
    %2596 = vst.msk [vmem:[#allocation3 + $0x1c0] sm:$0xf] %vm2299, %v2557
    %2597 = vst.msk [vmem:[#allocation3 + $0x1c8] sm:$0xf] %vm2299, %v2559
    %2598 = vst.msk [vmem:[#allocation3 + $0x1d0] sm:$0xf] %vm2299, %v2561
    %2599 = vst.msk [vmem:[#allocation3 + $0x1d8] sm:$0xf] %vm2299, %v2563
    %2600 = vst.msk [vmem:[#allocation3 + $0x1e0] sm:$0xf] %vm2299, %v2565
    %2601 = vst.msk [vmem:[#allocation3 + $0x1e8] sm:$0xf] %vm2299, %v2567
    %2602 = vst.msk [vmem:[#allocation3 + $0x1f0] sm:$0xf] %vm2299, %v2569
    %2603 = vst.msk [vmem:[#allocation3 + $0x1f8] sm:$0xf] %vm2299, %v2571
    %v2604 = vld [vmem:[#allocation2] sm:$0xf]
    %v2605 = vld [vmem:[#allocation2 + $0xc] sm:$0xf]
    %v2606 = vld [vmem:[#allocation2 + $0x18] sm:$0xf]
    %v2607 = vld [vmem:[#allocation2 + $0x24] sm:$0xf]
    %v2608 = vld [vmem:[#allocation2 + $0x30] sm:$0xf]
    %v2609 = vld [vmem:[#allocation2 + $0x3c] sm:$0xf]
    %v2610 = vld [vmem:[#allocation2 + $0x48] sm:$0xf]
    %v2611 = vld [vmem:[#allocation2 + $0x54] sm:$0xf]
    %v2612 = vld [vmem:[#allocation2 + $0x60] sm:$0xf]
    %v2613 = vld [vmem:[#allocation2 + $0x6c] sm:$0xf]
    %v2614 = vld [vmem:[#allocation2 + $0x78] sm:$0xf]
    %v2615 = vld [vmem:[#allocation2 + $0x84] sm:$0xf]
    %v2616 = vld [vmem:[#allocation2 + $0x90] sm:$0xf]
    %v2617 = vld [vmem:[#allocation2 + $0x9c] sm:$0xf]
    %v2618 = vld [vmem:[#allocation2 + $0xa8] sm:$0xf]
    %v2619 = vld [vmem:[#allocation2 + $0xb4] sm:$0xf]
    %2636 = vrot.lane.b32.xlu0 %v2604, 120
    %v2637 = vpop.permute.xlu0 %2636
    %2638 = vrot.lane.b32.xlu0 %v2605, 120
    %v2639 = vpop.permute.xlu0 %2638
    %2640 = vrot.lane.b32.xlu0 %v2606, 120
    %v2641 = vpop.permute.xlu0 %2640
    %2642 = vrot.lane.b32.xlu0 %v2607, 120
    %v2643 = vpop.permute.xlu0 %2642
    %2644 = vrot.lane.b32.xlu0 %v2608, 120
    %v2645 = vpop.permute.xlu0 %2644
    %2646 = vrot.lane.b32.xlu0 %v2609, 120
    %v2647 = vpop.permute.xlu0 %2646
    %2648 = vrot.lane.b32.xlu0 %v2610, 120
    %v2649 = vpop.permute.xlu0 %2648
    %2650 = vrot.lane.b32.xlu0 %v2611, 120
    %v2651 = vpop.permute.xlu0 %2650
    %2652 = vrot.lane.b32.xlu0 %v2612, 120
    %v2653 = vpop.permute.xlu0 %2652
    %2654 = vrot.lane.b32.xlu0 %v2613, 120
    %v2655 = vpop.permute.xlu0 %2654
    %2656 = vrot.lane.b32.xlu0 %v2614, 120
    %v2657 = vpop.permute.xlu0 %2656
    %2658 = vrot.lane.b32.xlu0 %v2615, 120
    %v2659 = vpop.permute.xlu0 %2658
    %2660 = vrot.lane.b32.xlu0 %v2616, 120
    %v2661 = vpop.permute.xlu0 %2660
    %2662 = vrot.lane.b32.xlu0 %v2617, 120
    %v2663 = vpop.permute.xlu0 %2662
    %2664 = vrot.lane.b32.xlu0 %v2618, 120
    %v2665 = vpop.permute.xlu0 %2664
    %2666 = vrot.lane.b32.xlu0 %v2619, 120
    %v2667 = vpop.permute.xlu0 %2666
    %2684 = vst.msk [vmem:[#allocation3 + $0x200] sm:$0xf] %vm2299, %v2637
    %2685 = vst.msk [vmem:[#allocation3 + $0x208] sm:$0xf] %vm2299, %v2639
    %2686 = vst.msk [vmem:[#allocation3 + $0x210] sm:$0xf] %vm2299, %v2641
    %2687 = vst.msk [vmem:[#allocation3 + $0x218] sm:$0xf] %vm2299, %v2643
    %2688 = vst.msk [vmem:[#allocation3 + $0x220] sm:$0xf] %vm2299, %v2645
    %2689 = vst.msk [vmem:[#allocation3 + $0x228] sm:$0xf] %vm2299, %v2647
    %2690 = vst.msk [vmem:[#allocation3 + $0x230] sm:$0xf] %vm2299, %v2649
    %2691 = vst.msk [vmem:[#allocation3 + $0x238] sm:$0xf] %vm2299, %v2651
    %2692 = vst.msk [vmem:[#allocation3 + $0x240] sm:$0xf] %vm2299, %v2653
    %2693 = vst.msk [vmem:[#allocation3 + $0x248] sm:$0xf] %vm2299, %v2655
    %2694 = vst.msk [vmem:[#allocation3 + $0x250] sm:$0xf] %vm2299, %v2657
    %2695 = vst.msk [vmem:[#allocation3 + $0x258] sm:$0xf] %vm2299, %v2659
    %2696 = vst.msk [vmem:[#allocation3 + $0x260] sm:$0xf] %vm2299, %v2661
    %2697 = vst.msk [vmem:[#allocation3 + $0x268] sm:$0xf] %vm2299, %v2663
    %2698 = vst.msk [vmem:[#allocation3 + $0x270] sm:$0xf] %vm2299, %v2665
    %2699 = vst.msk [vmem:[#allocation3 + $0x278] sm:$0xf] %vm2299, %v2667
    %v2700 = vld [vmem:[#allocation6] sm:$0xff]
    %v2701 = vld [vmem:[#allocation6 + $0x8] sm:$0xff]
    %v2702 = vld [vmem:[#allocation6 + $0x10] sm:$0xf]
    %v2703 = vld [vmem:[#allocation6 + $0x14] sm:$0xff]
    %v2704 = vld [vmem:[#allocation6 + $0x1c] sm:$0xff]
    %v2705 = vld [vmem:[#allocation6 + $0x24] sm:$0xf]
    %v2706 = vld [vmem:[#allocation6 + $0x28] sm:$0xff]
    %v2707 = vld [vmem:[#allocation6 + $0x30] sm:$0xff]
    %v2708 = vld [vmem:[#allocation6 + $0x38] sm:$0xf]
    %v2709 = vld [vmem:[#allocation6 + $0x3c] sm:$0xff]
    %v2710 = vld [vmem:[#allocation6 + $0x44] sm:$0xff]
    %v2711 = vld [vmem:[#allocation6 + $0x4c] sm:$0xf]
    %v2712 = vld [vmem:[#allocation6 + $0x50] sm:$0xff]
    %v2713 = vld [vmem:[#allocation6 + $0x58] sm:$0xff]
    %v2714 = vld [vmem:[#allocation6 + $0x60] sm:$0xf]
    %v2715 = vld [vmem:[#allocation6 + $0x64] sm:$0xff]
    %v2716 = vld [vmem:[#allocation6 + $0x6c] sm:$0xff]
    %v2717 = vld [vmem:[#allocation6 + $0x74] sm:$0xf]
    %v2718 = vld [vmem:[#allocation6 + $0x78] sm:$0xff]
    %v2719 = vld [vmem:[#allocation6 + $0x80] sm:$0xff]
    %v2720 = vld [vmem:[#allocation6 + $0x88] sm:$0xf]
    %v2721 = vld [vmem:[#allocation6 + $0x8c] sm:$0xff]
    %v2722 = vld [vmem:[#allocation6 + $0x94] sm:$0xff]
    %v2723 = vld [vmem:[#allocation6 + $0x9c] sm:$0xf]
    %v2724 = vld [vmem:[#allocation6 + $0xa0] sm:$0xff]
    %v2725 = vld [vmem:[#allocation6 + $0xa8] sm:$0xff]
    %v2726 = vld [vmem:[#allocation6 + $0xb0] sm:$0xf]
    %v2727 = vld [vmem:[#allocation6 + $0xb4] sm:$0xff]
    %v2728 = vld [vmem:[#allocation6 + $0xbc] sm:$0xff]
    %v2729 = vld [vmem:[#allocation6 + $0xc4] sm:$0xf]
    %v2730 = vld [vmem:[#allocation6 + $0xc8] sm:$0xff]
    %v2731 = vld [vmem:[#allocation6 + $0xd0] sm:$0xff]
    %v2732 = vld [vmem:[#allocation6 + $0xd8] sm:$0xf]
    %v2733 = vld [vmem:[#allocation6 + $0xdc] sm:$0xff]
    %v2734 = vld [vmem:[#allocation6 + $0xe4] sm:$0xff]
    %v2735 = vld [vmem:[#allocation6 + $0xec] sm:$0xf]
    %v2736 = vld [vmem:[#allocation6 + $0xf0] sm:$0xff]
    %v2737 = vld [vmem:[#allocation6 + $0xf8] sm:$0xff]
    %v2738 = vld [vmem:[#allocation6 + $0x100] sm:$0xf]
    %v2739 = vld [vmem:[#allocation6 + $0x104] sm:$0xff]
    %v2740 = vld [vmem:[#allocation6 + $0x10c] sm:$0xff]
    %v2741 = vld [vmem:[#allocation6 + $0x114] sm:$0xf]
    %v2742 = vld [vmem:[#allocation6 + $0x118] sm:$0xff]
    %v2743 = vld [vmem:[#allocation6 + $0x120] sm:$0xff]
    %v2744 = vld [vmem:[#allocation6 + $0x128] sm:$0xf]
    %v2745 = vld [vmem:[#allocation6 + $0x12c] sm:$0xff]
    %v2746 = vld [vmem:[#allocation6 + $0x134] sm:$0xff]
    %v2747 = vld [vmem:[#allocation6 + $0x13c] sm:$0xf]
    %v2748 = vld [vmem:[#allocation6 + $0x140] sm:$0xff]
    %v2749 = vld [vmem:[#allocation6 + $0x148] sm:$0xff]
    %v2750 = vld [vmem:[#allocation6 + $0x150] sm:$0xf]
    %v2751 = vld [vmem:[#allocation6 + $0x154] sm:$0xff]
    %v2752 = vld [vmem:[#allocation6 + $0x15c] sm:$0xff]
    %v2753 = vld [vmem:[#allocation6 + $0x164] sm:$0xf]
    %v2754 = vld [vmem:[#allocation6 + $0x168] sm:$0xff]
    %v2755 = vld [vmem:[#allocation6 + $0x170] sm:$0xff]
    %v2756 = vld [vmem:[#allocation6 + $0x178] sm:$0xf]
    %v2757 = vld [vmem:[#allocation6 + $0x17c] sm:$0xff]
    %v2758 = vld [vmem:[#allocation6 + $0x184] sm:$0xff]
    %v2759 = vld [vmem:[#allocation6 + $0x18c] sm:$0xf]
    %v2760 = vld [vmem:[#allocation6 + $0x190] sm:$0xff]
    %v2761 = vld [vmem:[#allocation6 + $0x198] sm:$0xff]
    %v2762 = vld [vmem:[#allocation6 + $0x1a0] sm:$0xf]
    %v2763 = vld [vmem:[#allocation6 + $0x1a4] sm:$0xff]
    %v2764 = vld [vmem:[#allocation6 + $0x1ac] sm:$0xff]
    %v2765 = vld [vmem:[#allocation6 + $0x1b4] sm:$0xf]
    %v2766 = vld [vmem:[#allocation6 + $0x1b8] sm:$0xff]
    %v2767 = vld [vmem:[#allocation6 + $0x1c0] sm:$0xff]
    %v2768 = vld [vmem:[#allocation6 + $0x1c8] sm:$0xf]
    %v2769 = vld [vmem:[#allocation6 + $0x1cc] sm:$0xff]
    %v2770 = vld [vmem:[#allocation6 + $0x1d4] sm:$0xff]
    %v2771 = vld [vmem:[#allocation6 + $0x1dc] sm:$0xf]
    %v2772 = vld [vmem:[#allocation6 + $0x1e0] sm:$0xff]
    %v2773 = vld [vmem:[#allocation6 + $0x1e8] sm:$0xff]
    %v2774 = vld [vmem:[#allocation6 + $0x1f0] sm:$0xf]
    %v2775 = vld [vmem:[#allocation6 + $0x1f4] sm:$0xff]
    %v2776 = vld [vmem:[#allocation6 + $0x1fc] sm:$0xff]
    %v2777 = vld [vmem:[#allocation6 + $0x204] sm:$0xf]
    %v2778 = vld [vmem:[#allocation6 + $0x208] sm:$0xff]
    %v2779 = vld [vmem:[#allocation6 + $0x210] sm:$0xff]
    %v2780 = vld [vmem:[#allocation6 + $0x218] sm:$0xf]
    %v2781 = vld [vmem:[#allocation6 + $0x21c] sm:$0xff]
    %v2782 = vld [vmem:[#allocation6 + $0x224] sm:$0xff]
    %v2783 = vld [vmem:[#allocation6 + $0x22c] sm:$0xf]
    %v2784 = vld [vmem:[#allocation6 + $0x230] sm:$0xff]
    %v2785 = vld [vmem:[#allocation6 + $0x238] sm:$0xff]
    %v2786 = vld [vmem:[#allocation6 + $0x240] sm:$0xf]
    %v2787 = vld [vmem:[#allocation6 + $0x244] sm:$0xff]
    %v2788 = vld [vmem:[#allocation6 + $0x24c] sm:$0xff]
    %v2789 = vld [vmem:[#allocation6 + $0x254] sm:$0xf]
    %v2790 = vld [vmem:[#allocation6 + $0x258] sm:$0xff]
    %v2791 = vld [vmem:[#allocation6 + $0x260] sm:$0xff]
    %v2792 = vld [vmem:[#allocation6 + $0x268] sm:$0xf]
    %v2793 = vld [vmem:[#allocation6 + $0x26c] sm:$0xff]
    %v2794 = vld [vmem:[#allocation6 + $0x274] sm:$0xff]
    %v2795 = vld [vmem:[#allocation6 + $0x27c] sm:$0xf]
    %v2796 = vld [vmem:[#allocation3] sm:$0xf]
    %v2797 = vld [vmem:[#allocation3 + $0x8] sm:$0xf]
    %v2798 = vld [vmem:[#allocation3 + $0x10] sm:$0xf]
    %v2799 = vld [vmem:[#allocation3 + $0x18] sm:$0xf]
    %v2800 = vld [vmem:[#allocation3 + $0x20] sm:$0xf]
    %v2801 = vld [vmem:[#allocation3 + $0x28] sm:$0xf]
    %v2802 = vld [vmem:[#allocation3 + $0x30] sm:$0xf]
    %v2803 = vld [vmem:[#allocation3 + $0x38] sm:$0xf]
    %v2804 = vld [vmem:[#allocation3 + $0x40] sm:$0xf]
    %v2805 = vld [vmem:[#allocation3 + $0x48] sm:$0xf]
    %v2806 = vld [vmem:[#allocation3 + $0x50] sm:$0xf]
    %v2807 = vld [vmem:[#allocation3 + $0x58] sm:$0xf]
    %v2808 = vld [vmem:[#allocation3 + $0x60] sm:$0xf]
    %v2809 = vld [vmem:[#allocation3 + $0x68] sm:$0xf]
    %v2810 = vld [vmem:[#allocation3 + $0x70] sm:$0xf]
    %v2811 = vld [vmem:[#allocation3 + $0x78] sm:$0xf]
    %v2812 = vld [vmem:[#allocation3 + $0x80] sm:$0xf]
    %v2813 = vld [vmem:[#allocation3 + $0x88] sm:$0xf]
    %v2814 = vld [vmem:[#allocation3 + $0x90] sm:$0xf]
    %v2815 = vld [vmem:[#allocation3 + $0x98] sm:$0xf]
    %v2816 = vld [vmem:[#allocation3 + $0xa0] sm:$0xf]
    %v2817 = vld [vmem:[#allocation3 + $0xa8] sm:$0xf]
    %v2818 = vld [vmem:[#allocation3 + $0xb0] sm:$0xf]
    %v2819 = vld [vmem:[#allocation3 + $0xb8] sm:$0xf]
    %v2820 = vld [vmem:[#allocation3 + $0xc0] sm:$0xf]
    %v2821 = vld [vmem:[#allocation3 + $0xc8] sm:$0xf]
    %v2822 = vld [vmem:[#allocation3 + $0xd0] sm:$0xf]
    %v2823 = vld [vmem:[#allocation3 + $0xd8] sm:$0xf]
    %v2824 = vld [vmem:[#allocation3 + $0xe0] sm:$0xf]
    %v2825 = vld [vmem:[#allocation3 + $0xe8] sm:$0xf]
    %v2826 = vld [vmem:[#allocation3 + $0xf0] sm:$0xf]
    %v2827 = vld [vmem:[#allocation3 + $0xf8] sm:$0xf]
    %v2828 = vld [vmem:[#allocation3 + $0x100] sm:$0xf]
    %v2829 = vld [vmem:[#allocation3 + $0x108] sm:$0xf]
    %v2830 = vld [vmem:[#allocation3 + $0x110] sm:$0xf]
    %v2831 = vld [vmem:[#allocation3 + $0x118] sm:$0xf]
    %v2832 = vld [vmem:[#allocation3 + $0x120] sm:$0xf]
    %v2833 = vld [vmem:[#allocation3 + $0x128] sm:$0xf]
    %v2834 = vld [vmem:[#allocation3 + $0x130] sm:$0xf]
    %v2835 = vld [vmem:[#allocation3 + $0x138] sm:$0xf]
    %v2836 = vld [vmem:[#allocation3 + $0x140] sm:$0xf]
    %v2837 = vld [vmem:[#allocation3 + $0x148] sm:$0xf]
    %v2838 = vld [vmem:[#allocation3 + $0x150] sm:$0xf]
    %v2839 = vld [vmem:[#allocation3 + $0x158] sm:$0xf]
    %v2840 = vld [vmem:[#allocation3 + $0x160] sm:$0xf]
    %v2841 = vld [vmem:[#allocation3 + $0x168] sm:$0xf]
    %v2842 = vld [vmem:[#allocation3 + $0x170] sm:$0xf]
    %v2843 = vld [vmem:[#allocation3 + $0x178] sm:$0xf]
    %v2844 = vld [vmem:[#allocation3 + $0x180] sm:$0xf]
    %v2845 = vld [vmem:[#allocation3 + $0x188] sm:$0xf]
    %v2846 = vld [vmem:[#allocation3 + $0x190] sm:$0xf]
    %v2847 = vld [vmem:[#allocation3 + $0x198] sm:$0xf]
    %v2848 = vld [vmem:[#allocation3 + $0x1a0] sm:$0xf]
    %v2849 = vld [vmem:[#allocation3 + $0x1a8] sm:$0xf]
    %v2850 = vld [vmem:[#allocation3 + $0x1b0] sm:$0xf]
    %v2851 = vld [vmem:[#allocation3 + $0x1b8] sm:$0xf]
    %v2852 = vld [vmem:[#allocation3 + $0x1c0] sm:$0xf]
    %v2853 = vld [vmem:[#allocation3 + $0x1c8] sm:$0xf]
    %v2854 = vld [vmem:[#allocation3 + $0x1d0] sm:$0xf]
    %v2855 = vld [vmem:[#allocation3 + $0x1d8] sm:$0xf]
    %v2856 = vld [vmem:[#allocation3 + $0x1e0] sm:$0xf]
    %v2857 = vld [vmem:[#allocation3 + $0x1e8] sm:$0xf]
    %v2858 = vld [vmem:[#allocation3 + $0x1f0] sm:$0xf]
    %v2859 = vld [vmem:[#allocation3 + $0x1f8] sm:$0xf]
    %v2860 = vld [vmem:[#allocation3 + $0x200] sm:$0xf]
    %v2861 = vld [vmem:[#allocation3 + $0x208] sm:$0xf]
    %v2862 = vld [vmem:[#allocation3 + $0x210] sm:$0xf]
    %v2863 = vld [vmem:[#allocation3 + $0x218] sm:$0xf]
    %v2864 = vld [vmem:[#allocation3 + $0x220] sm:$0xf]
    %v2865 = vld [vmem:[#allocation3 + $0x228] sm:$0xf]
    %v2866 = vld [vmem:[#allocation3 + $0x230] sm:$0xf]
    %v2867 = vld [vmem:[#allocation3 + $0x238] sm:$0xf]
    %v2868 = vld [vmem:[#allocation3 + $0x240] sm:$0xf]
    %v2869 = vld [vmem:[#allocation3 + $0x248] sm:$0xf]
    %v2870 = vld [vmem:[#allocation3 + $0x250] sm:$0xf]
    %v2871 = vld [vmem:[#allocation3 + $0x258] sm:$0xf]
    %v2872 = vld [vmem:[#allocation3 + $0x260] sm:$0xf]
    %v2873 = vld [vmem:[#allocation3 + $0x268] sm:$0xf]
    %v2874 = vld [vmem:[#allocation3 + $0x270] sm:$0xf]
    %v2875 = vld [vmem:[#allocation3 + $0x278] sm:$0xf]
    %v2876 = vld [vmem:[%s8] sm:$0xff]
    %v2877 = vld [vmem:[%s8 + $0x8] sm:$0xff]
    %v2878 = vld [vmem:[%s8 + $0x10] sm:$0xff]
    %v2879 = vld [vmem:[%s8 + $0x18] sm:$0xff]
    %v2880 = vld [vmem:[%s8 + $0x20] sm:$0xff]
    %v2881 = vld [vmem:[%s8 + $0x28] sm:$0xff]
    %v2882 = vld [vmem:[%s8 + $0x30] sm:$0xff]
    %v2883 = vld [vmem:[%s8 + $0x38] sm:$0xff]
    %v2884 = vld [vmem:[%s8 + $0x40] sm:$0xff]
    %v2885 = vld [vmem:[%s8 + $0x48] sm:$0xff]
    %v2886 = vld [vmem:[%s8 + $0x50] sm:$0xff]
    %v2887 = vld [vmem:[%s8 + $0x58] sm:$0xff]
    %v2888 = vld [vmem:[%s8 + $0x60] sm:$0xff]
    %v2889 = vld [vmem:[%s8 + $0x68] sm:$0xff]
    %v2890 = vld [vmem:[%s8 + $0x70] sm:$0xff]
    %v2891 = vld [vmem:[%s8 + $0x78] sm:$0xff]
    %v2892 = vld [vmem:[%s8 + $0x80] sm:$0xff]
    %v2893 = vld [vmem:[%s8 + $0x88] sm:$0xff]
    %v2894 = vld [vmem:[%s8 + $0x90] sm:$0xff]
    %v2895 = vld [vmem:[%s8 + $0x98] sm:$0xff]
    %v2896 = vld [vmem:[%s8 + $0xa0] sm:$0xff]
    %v2897 = vld [vmem:[%s8 + $0xa8] sm:$0xff]
    %v2898 = vld [vmem:[%s8 + $0xb0] sm:$0xff]
    %v2899 = vld [vmem:[%s8 + $0xb8] sm:$0xff]
    %v2900 = vld [vmem:[%s8 + $0xc0] sm:$0xff]
    %v2901 = vld [vmem:[%s8 + $0xc8] sm:$0xff]
    %v2902 = vld [vmem:[%s8 + $0xd0] sm:$0xff]
    %v2903 = vld [vmem:[%s8 + $0xd8] sm:$0xff]
    %v2904 = vld [vmem:[%s8 + $0xe0] sm:$0xff]
    %v2905 = vld [vmem:[%s8 + $0xe8] sm:$0xff]
    %v2906 = vld [vmem:[%s8 + $0xf0] sm:$0xff]
    %v2907 = vld [vmem:[%s8 + $0xf8] sm:$0xff]
    %2909 = vset.pattern.permute.xlu0 0
    %2910 = vperm.xlu0 %2909, %v2876
    %v2911 = vpop.permute.xlu0 %2910
    %2914 = vset.pattern.permute.xlu0 0
    %2915 = vperm.xlu0 %2914, %v2877
    %v2916 = vpop.permute.xlu0 %2915
    %2919 = vset.pattern.permute.xlu0 0
    %2920 = vperm.xlu0 %2919, %v2878
    %v2921 = vpop.permute.xlu0 %2920
    %2924 = vset.pattern.permute.xlu0 0
    %2925 = vperm.xlu0 %2924, %v2879
    %v2926 = vpop.permute.xlu0 %2925
    %2929 = vset.pattern.permute.xlu0 0
    %2930 = vperm.xlu0 %2929, %v2880
    %v2931 = vpop.permute.xlu0 %2930
    %2934 = vset.pattern.permute.xlu0 0
    %2935 = vperm.xlu0 %2934, %v2881
    %v2936 = vpop.permute.xlu0 %2935
    %2939 = vset.pattern.permute.xlu0 0
    %2940 = vperm.xlu0 %2939, %v2882
    %v2941 = vpop.permute.xlu0 %2940
    %2944 = vset.pattern.permute.xlu0 0
    %2945 = vperm.xlu0 %2944, %v2883
    %v2946 = vpop.permute.xlu0 %2945
    %2949 = vset.pattern.permute.xlu0 0
    %2950 = vperm.xlu0 %2949, %v2884
    %v2951 = vpop.permute.xlu0 %2950
    %2954 = vset.pattern.permute.xlu0 0
    %2955 = vperm.xlu0 %2954, %v2885
    %v2956 = vpop.permute.xlu0 %2955
    %2959 = vset.pattern.permute.xlu0 0
    %2960 = vperm.xlu0 %2959, %v2886
    %v2961 = vpop.permute.xlu0 %2960
    %2964 = vset.pattern.permute.xlu0 0
    %2965 = vperm.xlu0 %2964, %v2887
    %v2966 = vpop.permute.xlu0 %2965
    %2969 = vset.pattern.permute.xlu0 0
    %2970 = vperm.xlu0 %2969, %v2888
    %v2971 = vpop.permute.xlu0 %2970
    %2974 = vset.pattern.permute.xlu0 0
    %2975 = vperm.xlu0 %2974, %v2889
    %v2976 = vpop.permute.xlu0 %2975
    %2979 = vset.pattern.permute.xlu0 0
    %2980 = vperm.xlu0 %2979, %v2890
    %v2981 = vpop.permute.xlu0 %2980
    %2984 = vset.pattern.permute.xlu0 0
    %2985 = vperm.xlu0 %2984, %v2891
    %v2986 = vpop.permute.xlu0 %2985
    %2989 = vset.pattern.permute.xlu0 0
    %2990 = vperm.xlu0 %2989, %v2892
    %v2991 = vpop.permute.xlu0 %2990
    %2994 = vset.pattern.permute.xlu0 0
    %2995 = vperm.xlu0 %2994, %v2893
    %v2996 = vpop.permute.xlu0 %2995
    %2999 = vset.pattern.permute.xlu0 0
    %3000 = vperm.xlu0 %2999, %v2894
    %v3001 = vpop.permute.xlu0 %3000
    %3004 = vset.pattern.permute.xlu0 0
    %3005 = vperm.xlu0 %3004, %v2895
    %v3006 = vpop.permute.xlu0 %3005
    %3009 = vset.pattern.permute.xlu0 0
    %3010 = vperm.xlu0 %3009, %v2896
    %v3011 = vpop.permute.xlu0 %3010
    %3014 = vset.pattern.permute.xlu0 0
    %3015 = vperm.xlu0 %3014, %v2897
    %v3016 = vpop.permute.xlu0 %3015
    %3019 = vset.pattern.permute.xlu0 0
    %3020 = vperm.xlu0 %3019, %v2898
    %v3021 = vpop.permute.xlu0 %3020
    %3024 = vset.pattern.permute.xlu0 0
    %3025 = vperm.xlu0 %3024, %v2899
    %v3026 = vpop.permute.xlu0 %3025
    %3029 = vset.pattern.permute.xlu0 0
    %3030 = vperm.xlu0 %3029, %v2900
    %v3031 = vpop.permute.xlu0 %3030
    %3034 = vset.pattern.permute.xlu0 0
    %3035 = vperm.xlu0 %3034, %v2901
    %v3036 = vpop.permute.xlu0 %3035
    %3039 = vset.pattern.permute.xlu0 0
    %3040 = vperm.xlu0 %3039, %v2902
    %v3041 = vpop.permute.xlu0 %3040
    %3044 = vset.pattern.permute.xlu0 0
    %3045 = vperm.xlu0 %3044, %v2903
    %v3046 = vpop.permute.xlu0 %3045
    %3049 = vset.pattern.permute.xlu0 0
    %3050 = vperm.xlu0 %3049, %v2904
    %v3051 = vpop.permute.xlu0 %3050
    %3054 = vset.pattern.permute.xlu0 0
    %3055 = vperm.xlu0 %3054, %v2905
    %v3056 = vpop.permute.xlu0 %3055
    %3059 = vset.pattern.permute.xlu0 0
    %3060 = vperm.xlu0 %3059, %v2906
    %v3061 = vpop.permute.xlu0 %3060
    %3064 = vset.pattern.permute.xlu0 0
    %3065 = vperm.xlu0 %3064, %v2907
    %v3066 = vpop.permute.xlu0 %3065
    %v3164 = vunpack.c.l.b16 %v2700
    %v3165 = vunpack.c.h.b16 %v2700
    %v3166 = vunpack.c.l.b16 %v2701
    %v3167 = vunpack.c.h.b16 %v2701
    %v3168 = vunpack.c.l.b16 %v2702
    %v3169 = vunpack.c.l.b16 %v2703
    %v3170 = vunpack.c.h.b16 %v2703
    %v3171 = vunpack.c.l.b16 %v2704
    %v3172 = vunpack.c.h.b16 %v2704
    %v3173 = vunpack.c.l.b16 %v2705
    %v3174 = vunpack.c.l.b16 %v2706
    %v3175 = vunpack.c.h.b16 %v2706
    %v3176 = vunpack.c.l.b16 %v2707
    %v3177 = vunpack.c.h.b16 %v2707
    %v3178 = vunpack.c.l.b16 %v2708
    %v3179 = vunpack.c.l.b16 %v2709
    %v3180 = vunpack.c.h.b16 %v2709
    %v3181 = vunpack.c.l.b16 %v2710
    %v3182 = vunpack.c.h.b16 %v2710
    %v3183 = vunpack.c.l.b16 %v2711
    %v3184 = vunpack.c.l.b16 %v2712
    %v3185 = vunpack.c.h.b16 %v2712
    %v3186 = vunpack.c.l.b16 %v2713
    %v3187 = vunpack.c.h.b16 %v2713
    %v3188 = vunpack.c.l.b16 %v2714
    %v3189 = vunpack.c.l.b16 %v2715
    %v3190 = vunpack.c.h.b16 %v2715
    %v3191 = vunpack.c.l.b16 %v2716
    %v3192 = vunpack.c.h.b16 %v2716
    %v3193 = vunpack.c.l.b16 %v2717
    %v3194 = vunpack.c.l.b16 %v2718
    %v3195 = vunpack.c.h.b16 %v2718
    %v3196 = vunpack.c.l.b16 %v2719
    %v3197 = vunpack.c.h.b16 %v2719
    %v3198 = vunpack.c.l.b16 %v2720
    %v3199 = vunpack.c.l.b16 %v2721
    %v3200 = vunpack.c.h.b16 %v2721
    %v3201 = vunpack.c.l.b16 %v2722
    %v3202 = vunpack.c.h.b16 %v2722
    %v3203 = vunpack.c.l.b16 %v2723
    %v3204 = vunpack.c.l.b16 %v2724
    %v3205 = vunpack.c.h.b16 %v2724
    %v3206 = vunpack.c.l.b16 %v2725
    %v3207 = vunpack.c.h.b16 %v2725
    %v3208 = vunpack.c.l.b16 %v2726
    %v3209 = vunpack.c.l.b16 %v2727
    %v3210 = vunpack.c.h.b16 %v2727
    %v3211 = vunpack.c.l.b16 %v2728
    %v3212 = vunpack.c.h.b16 %v2728
    %v3213 = vunpack.c.l.b16 %v2729
    %v3214 = vunpack.c.l.b16 %v2730
    %v3215 = vunpack.c.h.b16 %v2730
    %v3216 = vunpack.c.l.b16 %v2731
    %v3217 = vunpack.c.h.b16 %v2731
    %v3218 = vunpack.c.l.b16 %v2732
    %v3219 = vunpack.c.l.b16 %v2733
    %v3220 = vunpack.c.h.b16 %v2733
    %v3221 = vunpack.c.l.b16 %v2734
    %v3222 = vunpack.c.h.b16 %v2734
    %v3223 = vunpack.c.l.b16 %v2735
    %v3224 = vunpack.c.l.b16 %v2736
    %v3225 = vunpack.c.h.b16 %v2736
    %v3226 = vunpack.c.l.b16 %v2737
    %v3227 = vunpack.c.h.b16 %v2737
    %v3228 = vunpack.c.l.b16 %v2738
    %v3229 = vunpack.c.l.b16 %v2739
    %v3230 = vunpack.c.h.b16 %v2739
    %v3231 = vunpack.c.l.b16 %v2740
    %v3232 = vunpack.c.h.b16 %v2740
    %v3233 = vunpack.c.l.b16 %v2741
    %v3234 = vunpack.c.l.b16 %v2742
    %v3235 = vunpack.c.h.b16 %v2742
    %v3236 = vunpack.c.l.b16 %v2743
    %v3237 = vunpack.c.h.b16 %v2743
    %v3238 = vunpack.c.l.b16 %v2744
    %v3239 = vunpack.c.l.b16 %v2745
    %v3240 = vunpack.c.h.b16 %v2745
    %v3241 = vunpack.c.l.b16 %v2746
    %v3242 = vunpack.c.h.b16 %v2746
    %v3243 = vunpack.c.l.b16 %v2747
    %v3244 = vunpack.c.l.b16 %v2748
    %v3245 = vunpack.c.h.b16 %v2748
    %v3246 = vunpack.c.l.b16 %v2749
    %v3247 = vunpack.c.h.b16 %v2749
    %v3248 = vunpack.c.l.b16 %v2750
    %v3249 = vunpack.c.l.b16 %v2751
    %v3250 = vunpack.c.h.b16 %v2751
    %v3251 = vunpack.c.l.b16 %v2752
    %v3252 = vunpack.c.h.b16 %v2752
    %v3253 = vunpack.c.l.b16 %v2753
    %v3254 = vunpack.c.l.b16 %v2754
    %v3255 = vunpack.c.h.b16 %v2754
    %v3256 = vunpack.c.l.b16 %v2755
    %v3257 = vunpack.c.h.b16 %v2755
    %v3258 = vunpack.c.l.b16 %v2756
    %v3259 = vunpack.c.l.b16 %v2757
    %v3260 = vunpack.c.h.b16 %v2757
    %v3261 = vunpack.c.l.b16 %v2758
    %v3262 = vunpack.c.h.b16 %v2758
    %v3263 = vunpack.c.l.b16 %v2759
    %v3264 = vunpack.c.l.b16 %v2760
    %v3265 = vunpack.c.h.b16 %v2760
    %v3266 = vunpack.c.l.b16 %v2761
    %v3267 = vunpack.c.h.b16 %v2761
    %v3268 = vunpack.c.l.b16 %v2762
    %v3269 = vunpack.c.l.b16 %v2763
    %v3270 = vunpack.c.h.b16 %v2763
    %v3271 = vunpack.c.l.b16 %v2764
    %v3272 = vunpack.c.h.b16 %v2764
    %v3273 = vunpack.c.l.b16 %v2765
    %v3274 = vunpack.c.l.b16 %v2766
    %v3275 = vunpack.c.h.b16 %v2766
    %v3276 = vunpack.c.l.b16 %v2767
    %v3277 = vunpack.c.h.b16 %v2767
    %v3278 = vunpack.c.l.b16 %v2768
    %v3279 = vunpack.c.l.b16 %v2769
    %v3280 = vunpack.c.h.b16 %v2769
    %v3281 = vunpack.c.l.b16 %v2770
    %v3282 = vunpack.c.h.b16 %v2770
    %v3283 = vunpack.c.l.b16 %v2771
    %v3284 = vunpack.c.l.b16 %v2772
    %v3285 = vunpack.c.h.b16 %v2772
    %v3286 = vunpack.c.l.b16 %v2773
    %v3287 = vunpack.c.h.b16 %v2773
    %v3288 = vunpack.c.l.b16 %v2774
    %v3289 = vunpack.c.l.b16 %v2775
    %v3290 = vunpack.c.h.b16 %v2775
    %v3291 = vunpack.c.l.b16 %v2776
    %v3292 = vunpack.c.h.b16 %v2776
    %v3293 = vunpack.c.l.b16 %v2777
    %v3294 = vunpack.c.l.b16 %v2778
    %v3295 = vunpack.c.h.b16 %v2778
    %v3296 = vunpack.c.l.b16 %v2779
    %v3297 = vunpack.c.h.b16 %v2779
    %v3298 = vunpack.c.l.b16 %v2780
    %v3299 = vunpack.c.l.b16 %v2781
    %v3300 = vunpack.c.h.b16 %v2781
    %v3301 = vunpack.c.l.b16 %v2782
    %v3302 = vunpack.c.h.b16 %v2782
    %v3303 = vunpack.c.l.b16 %v2783
    %v3304 = vunpack.c.l.b16 %v2784
    %v3305 = vunpack.c.h.b16 %v2784
    %v3306 = vunpack.c.l.b16 %v2785
    %v3307 = vunpack.c.h.b16 %v2785
    %v3308 = vunpack.c.l.b16 %v2786
    %v3309 = vunpack.c.l.b16 %v2787
    %v3310 = vunpack.c.h.b16 %v2787
    %v3311 = vunpack.c.l.b16 %v2788
    %v3312 = vunpack.c.h.b16 %v2788
    %v3313 = vunpack.c.l.b16 %v2789
    %v3314 = vunpack.c.l.b16 %v2790
    %v3315 = vunpack.c.h.b16 %v2790
    %v3316 = vunpack.c.l.b16 %v2791
    %v3317 = vunpack.c.h.b16 %v2791
    %v3318 = vunpack.c.l.b16 %v2792
    %v3319 = vunpack.c.l.b16 %v2793
    %v3320 = vunpack.c.h.b16 %v2793
    %v3321 = vunpack.c.l.b16 %v2794
    %v3322 = vunpack.c.h.b16 %v2794
    %v3323 = vunpack.c.l.b16 %v2795
    %v3324 = vpack.c.b16 %v3169, %v3164
    %v3325 = vpack.c.b16 %v3170, %v3165
    %v3326 = vpack.c.b16 %v3171, %v3166
    %v3327 = vpack.c.b16 %v3172, %v3167
    %v3328 = vpack.c.b16 %v3173, %v3168
    %v3329 = vpack.c.b16 %v3179, %v3174
    %v3330 = vpack.c.b16 %v3180, %v3175
    %v3331 = vpack.c.b16 %v3181, %v3176
    %v3332 = vpack.c.b16 %v3182, %v3177
    %v3333 = vpack.c.b16 %v3183, %v3178
    %v3334 = vpack.c.b16 %v3189, %v3184
    %v3335 = vpack.c.b16 %v3190, %v3185
    %v3336 = vpack.c.b16 %v3191, %v3186
    %v3337 = vpack.c.b16 %v3192, %v3187
    %v3338 = vpack.c.b16 %v3193, %v3188
    %v3339 = vpack.c.b16 %v3199, %v3194
    %v3340 = vpack.c.b16 %v3200, %v3195
    %v3341 = vpack.c.b16 %v3201, %v3196
    %v3342 = vpack.c.b16 %v3202, %v3197
    %v3343 = vpack.c.b16 %v3203, %v3198
    %v3344 = vpack.c.b16 %v3209, %v3204
    %v3345 = vpack.c.b16 %v3210, %v3205
    %v3346 = vpack.c.b16 %v3211, %v3206
    %v3347 = vpack.c.b16 %v3212, %v3207
    %v3348 = vpack.c.b16 %v3213, %v3208
    %v3349 = vpack.c.b16 %v3219, %v3214
    %v3350 = vpack.c.b16 %v3220, %v3215
    %v3351 = vpack.c.b16 %v3221, %v3216
    %v3352 = vpack.c.b16 %v3222, %v3217
    %v3353 = vpack.c.b16 %v3223, %v3218
    %v3354 = vpack.c.b16 %v3229, %v3224
    %v3355 = vpack.c.b16 %v3230, %v3225
    %v3356 = vpack.c.b16 %v3231, %v3226
    %v3357 = vpack.c.b16 %v3232, %v3227
    %v3358 = vpack.c.b16 %v3233, %v3228
    %v3359 = vpack.c.b16 %v3239, %v3234
    %v3360 = vpack.c.b16 %v3240, %v3235
    %v3361 = vpack.c.b16 %v3241, %v3236
    %v3362 = vpack.c.b16 %v3242, %v3237
    %v3363 = vpack.c.b16 %v3243, %v3238
    %v3364 = vpack.c.b16 %v3249, %v3244
    %v3365 = vpack.c.b16 %v3250, %v3245
    %v3366 = vpack.c.b16 %v3251, %v3246
    %v3367 = vpack.c.b16 %v3252, %v3247
    %v3368 = vpack.c.b16 %v3253, %v3248
    %v3369 = vpack.c.b16 %v3259, %v3254
    %v3370 = vpack.c.b16 %v3260, %v3255
    %v3371 = vpack.c.b16 %v3261, %v3256
    %v3372 = vpack.c.b16 %v3262, %v3257
    %v3373 = vpack.c.b16 %v3263, %v3258
    %v3374 = vpack.c.b16 %v3269, %v3264
    %v3375 = vpack.c.b16 %v3270, %v3265
    %v3376 = vpack.c.b16 %v3271, %v3266
    %v3377 = vpack.c.b16 %v3272, %v3267
    %v3378 = vpack.c.b16 %v3273, %v3268
    %v3379 = vpack.c.b16 %v3279, %v3274
    %v3380 = vpack.c.b16 %v3280, %v3275
    %v3381 = vpack.c.b16 %v3281, %v3276
    %v3382 = vpack.c.b16 %v3282, %v3277
    %v3383 = vpack.c.b16 %v3283, %v3278
    %v3384 = vpack.c.b16 %v3289, %v3284
    %v3385 = vpack.c.b16 %v3290, %v3285
    %v3386 = vpack.c.b16 %v3291, %v3286
    %v3387 = vpack.c.b16 %v3292, %v3287
    %v3388 = vpack.c.b16 %v3293, %v3288
    %v3389 = vpack.c.b16 %v3299, %v3294
    %v3390 = vpack.c.b16 %v3300, %v3295
    %v3391 = vpack.c.b16 %v3301, %v3296
    %v3392 = vpack.c.b16 %v3302, %v3297
    %v3393 = vpack.c.b16 %v3303, %v3298
    %v3394 = vpack.c.b16 %v3309, %v3304
    %v3395 = vpack.c.b16 %v3310, %v3305
    %v3396 = vpack.c.b16 %v3311, %v3306
    %v3397 = vpack.c.b16 %v3312, %v3307
    %v3398 = vpack.c.b16 %v3313, %v3308
    %v3399 = vpack.c.b16 %v3319, %v3314
    %v3400 = vpack.c.b16 %v3320, %v3315
    %v3401 = vpack.c.b16 %v3321, %v3316
    %v3402 = vpack.c.b16 %v3322, %v3317
    %v3403 = vpack.c.b16 %v3323, %v3318
    %v3564 = vunpack.c.l.b16 %v2796
    %v3565 = vunpack.c.l.b16 %v2797
    %v3566 = vunpack.c.l.b16 %v2798
    %v3567 = vunpack.c.l.b16 %v2799
    %v3568 = vunpack.c.l.b16 %v2800
    %v3569 = vunpack.c.l.b16 %v2801
    %v3570 = vunpack.c.l.b16 %v2802
    %v3571 = vunpack.c.l.b16 %v2803
    %v3572 = vunpack.c.l.b16 %v2804
    %v3573 = vunpack.c.l.b16 %v2805
    %v3574 = vunpack.c.l.b16 %v2806
    %v3575 = vunpack.c.l.b16 %v2807
    %v3576 = vunpack.c.l.b16 %v2808
    %v3577 = vunpack.c.l.b16 %v2809
    %v3578 = vunpack.c.l.b16 %v2810
    %v3579 = vunpack.c.l.b16 %v2811
    %v3580 = vunpack.c.l.b16 %v2812
    %v3581 = vunpack.c.l.b16 %v2813
    %v3582 = vunpack.c.l.b16 %v2814
    %v3583 = vunpack.c.l.b16 %v2815
    %v3584 = vunpack.c.l.b16 %v2816
    %v3585 = vunpack.c.l.b16 %v2817
    %v3586 = vunpack.c.l.b16 %v2818
    %v3587 = vunpack.c.l.b16 %v2819
    %v3588 = vunpack.c.l.b16 %v2820
    %v3589 = vunpack.c.l.b16 %v2821
    %v3590 = vunpack.c.l.b16 %v2822
    %v3591 = vunpack.c.l.b16 %v2823
    %v3592 = vunpack.c.l.b16 %v2824
    %v3593 = vunpack.c.l.b16 %v2825
    %v3594 = vunpack.c.l.b16 %v2826
    %v3595 = vunpack.c.l.b16 %v2827
    %v3596 = vunpack.c.l.b16 %v2828
    %v3597 = vunpack.c.l.b16 %v2829
    %v3598 = vunpack.c.l.b16 %v2830
    %v3599 = vunpack.c.l.b16 %v2831
    %v3600 = vunpack.c.l.b16 %v2832
    %v3601 = vunpack.c.l.b16 %v2833
    %v3602 = vunpack.c.l.b16 %v2834
    %v3603 = vunpack.c.l.b16 %v2835
    %v3604 = vunpack.c.l.b16 %v2836
    %v3605 = vunpack.c.l.b16 %v2837
    %v3606 = vunpack.c.l.b16 %v2838
    %v3607 = vunpack.c.l.b16 %v2839
    %v3608 = vunpack.c.l.b16 %v2840
    %v3609 = vunpack.c.l.b16 %v2841
    %v3610 = vunpack.c.l.b16 %v2842
    %v3611 = vunpack.c.l.b16 %v2843
    %v3612 = vunpack.c.l.b16 %v2844
    %v3613 = vunpack.c.l.b16 %v2845
    %v3614 = vunpack.c.l.b16 %v2846
    %v3615 = vunpack.c.l.b16 %v2847
    %v3616 = vunpack.c.l.b16 %v2848
    %v3617 = vunpack.c.l.b16 %v2849
    %v3618 = vunpack.c.l.b16 %v2850
    %v3619 = vunpack.c.l.b16 %v2851
    %v3620 = vunpack.c.l.b16 %v2852
    %v3621 = vunpack.c.l.b16 %v2853
    %v3622 = vunpack.c.l.b16 %v2854
    %v3623 = vunpack.c.l.b16 %v2855
    %v3624 = vunpack.c.l.b16 %v2856
    %v3625 = vunpack.c.l.b16 %v2857
    %v3626 = vunpack.c.l.b16 %v2858
    %v3627 = vunpack.c.l.b16 %v2859
    %v3628 = vunpack.c.l.b16 %v2860
    %v3629 = vunpack.c.l.b16 %v2861
    %v3630 = vunpack.c.l.b16 %v2862
    %v3631 = vunpack.c.l.b16 %v2863
    %v3632 = vunpack.c.l.b16 %v2864
    %v3633 = vunpack.c.l.b16 %v2865
    %v3634 = vunpack.c.l.b16 %v2866
    %v3635 = vunpack.c.l.b16 %v2867
    %v3636 = vunpack.c.l.b16 %v2868
    %v3637 = vunpack.c.l.b16 %v2869
    %v3638 = vunpack.c.l.b16 %v2870
    %v3639 = vunpack.c.l.b16 %v2871
    %v3640 = vunpack.c.l.b16 %v2872
    %v3641 = vunpack.c.l.b16 %v2873
    %v3642 = vunpack.c.l.b16 %v2874
    %v3643 = vunpack.c.l.b16 %v2875
    %v3644 = vpack.c.b16 %v3565, %v3564
    %v3645 = vpack.c.b16 %v3567, %v3566
    %v3646 = vpack.c.b16 %v3569, %v3568
    %v3647 = vpack.c.b16 %v3571, %v3570
    %v3648 = vpack.c.b16 %v3573, %v3572
    %v3649 = vpack.c.b16 %v3575, %v3574
    %v3650 = vpack.c.b16 %v3577, %v3576
    %v3651 = vpack.c.b16 %v3579, %v3578
    %v3652 = vpack.c.b16 %v3581, %v3580
    %v3653 = vpack.c.b16 %v3583, %v3582
    %v3654 = vpack.c.b16 %v3585, %v3584
    %v3655 = vpack.c.b16 %v3587, %v3586
    %v3656 = vpack.c.b16 %v3589, %v3588
    %v3657 = vpack.c.b16 %v3591, %v3590
    %v3658 = vpack.c.b16 %v3593, %v3592
    %v3659 = vpack.c.b16 %v3595, %v3594
    %v3660 = vpack.c.b16 %v3597, %v3596
    %v3661 = vpack.c.b16 %v3599, %v3598
    %v3662 = vpack.c.b16 %v3601, %v3600
    %v3663 = vpack.c.b16 %v3603, %v3602
    %v3664 = vpack.c.b16 %v3605, %v3604
    %v3665 = vpack.c.b16 %v3607, %v3606
    %v3666 = vpack.c.b16 %v3609, %v3608
    %v3667 = vpack.c.b16 %v3611, %v3610
    %v3668 = vpack.c.b16 %v3613, %v3612
    %v3669 = vpack.c.b16 %v3615, %v3614
    %v3670 = vpack.c.b16 %v3617, %v3616
    %v3671 = vpack.c.b16 %v3619, %v3618
    %v3672 = vpack.c.b16 %v3621, %v3620
    %v3673 = vpack.c.b16 %v3623, %v3622
    %v3674 = vpack.c.b16 %v3625, %v3624
    %v3675 = vpack.c.b16 %v3627, %v3626
    %v3676 = vpack.c.b16 %v3629, %v3628
    %v3677 = vpack.c.b16 %v3631, %v3630
    %v3678 = vpack.c.b16 %v3633, %v3632
    %v3679 = vpack.c.b16 %v3635, %v3634
    %v3680 = vpack.c.b16 %v3637, %v3636
    %v3681 = vpack.c.b16 %v3639, %v3638
    %v3682 = vpack.c.b16 %v3641, %v3640
    %v3683 = vpack.c.b16 %v3643, %v3642
    %3724 = vmatpush.bf16.msra.mxu0 %v3651
    %3725 = vmatpush.bf16.msra.mxu0 %v3650
    %3726 = vmatpush.bf16.msra.mxu0 %v3649
    %3727 = vmatpush.bf16.msra.mxu0 %v3648
    %3728 = vmatpush.bf16.msra.mxu0 %v3647
    %3729 = vmatpush.bf16.msra.mxu0 %v3646
    %3730 = vmatpush.bf16.msra.mxu0 %v3645
    %3731 = vmatpush.bf16.msra.mxu0 %v3644
    %3732 = vmatmul.bf16.gmra.mxu0 %v3324
    %v3733 = vpop.f32.mrf.mxu0
    %v3734 = vadd.f32 %v2911, %v3733
    %v3735 = vpop.f32.mrf.mxu0
    %v3736 = vadd.f32 %v2916, %v3735
    %3737 = vmatmul.bf16.gmra.mxu0 %v3329
    %v3738 = vpop.f32.mrf.mxu0
    %v3739 = vadd.f32 %v2921, %v3738
    %v3740 = vpop.f32.mrf.mxu0
    %v3741 = vadd.f32 %v2926, %v3740
    %3742 = vmatmul.bf16.gmra.mxu0 %v3334
    %v3743 = vpop.f32.mrf.mxu0
    %v3744 = vadd.f32 %v2931, %v3743
    %v3745 = vpop.f32.mrf.mxu0
    %v3746 = vadd.f32 %v2936, %v3745
    %3747 = vmatmul.bf16.gmra.mxu0 %v3339
    %v3748 = vpop.f32.mrf.mxu0
    %v3749 = vadd.f32 %v2941, %v3748
    %v3750 = vpop.f32.mrf.mxu0
    %v3751 = vadd.f32 %v2946, %v3750
    %3752 = vmatmul.bf16.gmra.mxu0 %v3344
    %v3753 = vpop.f32.mrf.mxu0
    %v3754 = vadd.f32 %v2951, %v3753
    %v3755 = vpop.f32.mrf.mxu0
    %v3756 = vadd.f32 %v2956, %v3755
    %3757 = vmatmul.bf16.gmra.mxu0 %v3349
    %v3758 = vpop.f32.mrf.mxu0
    %v3759 = vadd.f32 %v2961, %v3758
    %v3760 = vpop.f32.mrf.mxu0
    %v3761 = vadd.f32 %v2966, %v3760
    %3762 = vmatmul.bf16.gmra.mxu0 %v3354
    %v3763 = vpop.f32.mrf.mxu0
    %v3764 = vadd.f32 %v2971, %v3763
    %v3765 = vpop.f32.mrf.mxu0
    %v3766 = vadd.f32 %v2976, %v3765
    %3767 = vmatmul.bf16.gmra.mxu0 %v3359
    %v3768 = vpop.f32.mrf.mxu0
    %v3769 = vadd.f32 %v2981, %v3768
    %v3770 = vpop.f32.mrf.mxu0
    %v3771 = vadd.f32 %v2986, %v3770
    %3772 = vmatmul.bf16.gmra.mxu0 %v3364
    %v3773 = vpop.f32.mrf.mxu0
    %v3774 = vadd.f32 %v2991, %v3773
    %v3775 = vpop.f32.mrf.mxu0
    %v3776 = vadd.f32 %v2996, %v3775
    %3777 = vmatmul.bf16.gmra.mxu0 %v3369
    %v3778 = vpop.f32.mrf.mxu0
    %v3779 = vadd.f32 %v3001, %v3778
    %v3780 = vpop.f32.mrf.mxu0
    %v3781 = vadd.f32 %v3006, %v3780
    %3782 = vmatmul.bf16.gmra.mxu0 %v3374
    %v3783 = vpop.f32.mrf.mxu0
    %v3784 = vadd.f32 %v3011, %v3783
    %v3785 = vpop.f32.mrf.mxu0
    %v3786 = vadd.f32 %v3016, %v3785
    %3787 = vmatmul.bf16.gmra.mxu0 %v3379
    %v3788 = vpop.f32.mrf.mxu0
    %v3789 = vadd.f32 %v3021, %v3788
    %v3790 = vpop.f32.mrf.mxu0
    %v3791 = vadd.f32 %v3026, %v3790
    %3792 = vmatmul.bf16.gmra.mxu0 %v3384
    %v3793 = vpop.f32.mrf.mxu0
    %v3794 = vadd.f32 %v3031, %v3793
    %v3795 = vpop.f32.mrf.mxu0
    %v3796 = vadd.f32 %v3036, %v3795
    %3797 = vmatmul.bf16.gmra.mxu0 %v3389
    %v3798 = vpop.f32.mrf.mxu0
    %v3799 = vadd.f32 %v3041, %v3798
    %v3800 = vpop.f32.mrf.mxu0
    %v3801 = vadd.f32 %v3046, %v3800
    %3802 = vmatmul.bf16.gmra.mxu0 %v3394
    %v3803 = vpop.f32.mrf.mxu0
    %v3804 = vadd.f32 %v3051, %v3803
    %v3805 = vpop.f32.mrf.mxu0
    %v3806 = vadd.f32 %v3056, %v3805
    %3807 = vmatmul.bf16.gmra.mxu0 %v3399
    %v3808 = vpop.f32.mrf.mxu0
    %v3809 = vadd.f32 %v3061, %v3808
    %v3810 = vpop.f32.mrf.mxu0
    %v3811 = vadd.f32 %v3066, %v3810
    %3812 = vdwg.mxu0
    %3813 = vmatpush.bf16.msra.mxu0 %v3659
    %3814 = vmatpush.bf16.msra.mxu0 %v3658
    %3815 = vmatpush.bf16.msra.mxu0 %v3657
    %3816 = vmatpush.bf16.msra.mxu0 %v3656
    %3817 = vmatpush.bf16.msra.mxu0 %v3655
    %3818 = vmatpush.bf16.msra.mxu0 %v3654
    %3819 = vmatpush.bf16.msra.mxu0 %v3653
    %3820 = vmatpush.bf16.msra.mxu0 %v3652
    %3821 = vmatmul.bf16.gmra.mxu0 %v3325
    %v3822 = vpop.f32.mrf.mxu0
    %v3823 = vadd.f32 %v3734, %v3822
    %v3824 = vpop.f32.mrf.mxu0
    %v3825 = vadd.f32 %v3736, %v3824
    %3826 = vmatmul.bf16.gmra.mxu0 %v3330
    %v3827 = vpop.f32.mrf.mxu0
    %v3828 = vadd.f32 %v3739, %v3827
    %v3829 = vpop.f32.mrf.mxu0
    %v3830 = vadd.f32 %v3741, %v3829
    %3831 = vmatmul.bf16.gmra.mxu0 %v3335
    %v3832 = vpop.f32.mrf.mxu0
    %v3833 = vadd.f32 %v3744, %v3832
    %v3834 = vpop.f32.mrf.mxu0
    %v3835 = vadd.f32 %v3746, %v3834
    %3836 = vmatmul.bf16.gmra.mxu0 %v3340
    %v3837 = vpop.f32.mrf.mxu0
    %v3838 = vadd.f32 %v3749, %v3837
    %v3839 = vpop.f32.mrf.mxu0
    %v3840 = vadd.f32 %v3751, %v3839
    %3841 = vmatmul.bf16.gmra.mxu0 %v3345
    %v3842 = vpop.f32.mrf.mxu0
    %v3843 = vadd.f32 %v3754, %v3842
    %v3844 = vpop.f32.mrf.mxu0
    %v3845 = vadd.f32 %v3756, %v3844
    %3846 = vmatmul.bf16.gmra.mxu0 %v3350
    %v3847 = vpop.f32.mrf.mxu0
    %v3848 = vadd.f32 %v3759, %v3847
    %v3849 = vpop.f32.mrf.mxu0
    %v3850 = vadd.f32 %v3761, %v3849
    %3851 = vmatmul.bf16.gmra.mxu0 %v3355
    %v3852 = vpop.f32.mrf.mxu0
    %v3853 = vadd.f32 %v3764, %v3852
    %v3854 = vpop.f32.mrf.mxu0
    %v3855 = vadd.f32 %v3766, %v3854
    %3856 = vmatmul.bf16.gmra.mxu0 %v3360
    %v3857 = vpop.f32.mrf.mxu0
    %v3858 = vadd.f32 %v3769, %v3857
    %v3859 = vpop.f32.mrf.mxu0
    %v3860 = vadd.f32 %v3771, %v3859
    %3861 = vmatmul.bf16.gmra.mxu0 %v3365
    %v3862 = vpop.f32.mrf.mxu0
    %v3863 = vadd.f32 %v3774, %v3862
    %v3864 = vpop.f32.mrf.mxu0
    %v3865 = vadd.f32 %v3776, %v3864
    %3866 = vmatmul.bf16.gmra.mxu0 %v3370
    %v3867 = vpop.f32.mrf.mxu0
    %v3868 = vadd.f32 %v3779, %v3867
    %v3869 = vpop.f32.mrf.mxu0
    %v3870 = vadd.f32 %v3781, %v3869
    %3871 = vmatmul.bf16.gmra.mxu0 %v3375
    %v3872 = vpop.f32.mrf.mxu0
    %v3873 = vadd.f32 %v3784, %v3872
    %v3874 = vpop.f32.mrf.mxu0
    %v3875 = vadd.f32 %v3786, %v3874
    %3876 = vmatmul.bf16.gmra.mxu0 %v3380
    %v3877 = vpop.f32.mrf.mxu0
    %v3878 = vadd.f32 %v3789, %v3877
    %v3879 = vpop.f32.mrf.mxu0
    %v3880 = vadd.f32 %v3791, %v3879
    %3881 = vmatmul.bf16.gmra.mxu0 %v3385
    %v3882 = vpop.f32.mrf.mxu0
    %v3883 = vadd.f32 %v3794, %v3882
    %v3884 = vpop.f32.mrf.mxu0
    %v3885 = vadd.f32 %v3796, %v3884
    %3886 = vmatmul.bf16.gmra.mxu0 %v3390
    %v3887 = vpop.f32.mrf.mxu0
    %v3888 = vadd.f32 %v3799, %v3887
    %v3889 = vpop.f32.mrf.mxu0
    %v3890 = vadd.f32 %v3801, %v3889
    %3891 = vmatmul.bf16.gmra.mxu0 %v3395
    %v3892 = vpop.f32.mrf.mxu0
    %v3893 = vadd.f32 %v3804, %v3892
    %v3894 = vpop.f32.mrf.mxu0
    %v3895 = vadd.f32 %v3806, %v3894
    %3896 = vmatmul.bf16.gmra.mxu0 %v3400
    %v3897 = vpop.f32.mrf.mxu0
    %v3898 = vadd.f32 %v3809, %v3897
    %v3899 = vpop.f32.mrf.mxu0
    %v3900 = vadd.f32 %v3811, %v3899
    %3901 = vdwg.mxu0
    %3902 = vmatpush.bf16.msra.mxu0 %v3667
    %3903 = vmatpush.bf16.msra.mxu0 %v3666
    %3904 = vmatpush.bf16.msra.mxu0 %v3665
    %3905 = vmatpush.bf16.msra.mxu0 %v3664
    %3906 = vmatpush.bf16.msra.mxu0 %v3663
    %3907 = vmatpush.bf16.msra.mxu0 %v3662
    %3908 = vmatpush.bf16.msra.mxu0 %v3661
    %3909 = vmatpush.bf16.msra.mxu0 %v3660
    %3910 = vmatmul.bf16.gmra.mxu0 %v3326
    %v3911 = vpop.f32.mrf.mxu0
    %v3912 = vadd.f32 %v3823, %v3911
    %v3913 = vpop.f32.mrf.mxu0
    %v3914 = vadd.f32 %v3825, %v3913
    %3915 = vmatmul.bf16.gmra.mxu0 %v3331
    %v3916 = vpop.f32.mrf.mxu0
    %v3917 = vadd.f32 %v3828, %v3916
    %v3918 = vpop.f32.mrf.mxu0
    %v3919 = vadd.f32 %v3830, %v3918
    %3920 = vmatmul.bf16.gmra.mxu0 %v3336
    %v3921 = vpop.f32.mrf.mxu0
    %v3922 = vadd.f32 %v3833, %v3921
    %v3923 = vpop.f32.mrf.mxu0
    %v3924 = vadd.f32 %v3835, %v3923
    %3925 = vmatmul.bf16.gmra.mxu0 %v3341
    %v3926 = vpop.f32.mrf.mxu0
    %v3927 = vadd.f32 %v3838, %v3926
    %v3928 = vpop.f32.mrf.mxu0
    %v3929 = vadd.f32 %v3840, %v3928
    %3930 = vmatmul.bf16.gmra.mxu0 %v3346
    %v3931 = vpop.f32.mrf.mxu0
    %v3932 = vadd.f32 %v3843, %v3931
    %v3933 = vpop.f32.mrf.mxu0
    %v3934 = vadd.f32 %v3845, %v3933
    %3935 = vmatmul.bf16.gmra.mxu0 %v3351
    %v3936 = vpop.f32.mrf.mxu0
    %v3937 = vadd.f32 %v3848, %v3936
    %v3938 = vpop.f32.mrf.mxu0
    %v3939 = vadd.f32 %v3850, %v3938
    %3940 = vmatmul.bf16.gmra.mxu0 %v3356
    %v3941 = vpop.f32.mrf.mxu0
    %v3942 = vadd.f32 %v3853, %v3941
    %v3943 = vpop.f32.mrf.mxu0
    %v3944 = vadd.f32 %v3855, %v3943
    %3945 = vmatmul.bf16.gmra.mxu0 %v3361
    %v3946 = vpop.f32.mrf.mxu0
    %v3947 = vadd.f32 %v3858, %v3946
    %v3948 = vpop.f32.mrf.mxu0
    %v3949 = vadd.f32 %v3860, %v3948
    %3950 = vmatmul.bf16.gmra.mxu0 %v3366
    %v3951 = vpop.f32.mrf.mxu0
    %v3952 = vadd.f32 %v3863, %v3951
    %v3953 = vpop.f32.mrf.mxu0
    %v3954 = vadd.f32 %v3865, %v3953
    %3955 = vmatmul.bf16.gmra.mxu0 %v3371
    %v3956 = vpop.f32.mrf.mxu0
    %v3957 = vadd.f32 %v3868, %v3956
    %v3958 = vpop.f32.mrf.mxu0
    %v3959 = vadd.f32 %v3870, %v3958
    %3960 = vmatmul.bf16.gmra.mxu0 %v3376
    %v3961 = vpop.f32.mrf.mxu0
    %v3962 = vadd.f32 %v3873, %v3961
    %v3963 = vpop.f32.mrf.mxu0
    %v3964 = vadd.f32 %v3875, %v3963
    %3965 = vmatmul.bf16.gmra.mxu0 %v3381
    %v3966 = vpop.f32.mrf.mxu0
    %v3967 = vadd.f32 %v3878, %v3966
    %v3968 = vpop.f32.mrf.mxu0
    %v3969 = vadd.f32 %v3880, %v3968
    %3970 = vmatmul.bf16.gmra.mxu0 %v3386
    %v3971 = vpop.f32.mrf.mxu0
    %v3972 = vadd.f32 %v3883, %v3971
    %v3973 = vpop.f32.mrf.mxu0
    %v3974 = vadd.f32 %v3885, %v3973
    %3975 = vmatmul.bf16.gmra.mxu0 %v3391
    %v3976 = vpop.f32.mrf.mxu0
    %v3977 = vadd.f32 %v3888, %v3976
    %v3978 = vpop.f32.mrf.mxu0
    %v3979 = vadd.f32 %v3890, %v3978
    %3980 = vmatmul.bf16.gmra.mxu0 %v3396
    %v3981 = vpop.f32.mrf.mxu0
    %v3982 = vadd.f32 %v3893, %v3981
    %v3983 = vpop.f32.mrf.mxu0
    %v3984 = vadd.f32 %v3895, %v3983
    %3985 = vmatmul.bf16.gmra.mxu0 %v3401
    %v3986 = vpop.f32.mrf.mxu0
    %v3987 = vadd.f32 %v3898, %v3986
    %v3988 = vpop.f32.mrf.mxu0
    %v3989 = vadd.f32 %v3900, %v3988
    %3990 = vdwg.mxu0
    %3991 = vmatpush.bf16.msra.mxu0 %v3675
    %3992 = vmatpush.bf16.msra.mxu0 %v3674
    %3993 = vmatpush.bf16.msra.mxu0 %v3673
    %3994 = vmatpush.bf16.msra.mxu0 %v3672
    %3995 = vmatpush.bf16.msra.mxu0 %v3671
    %3996 = vmatpush.bf16.msra.mxu0 %v3670
    %3997 = vmatpush.bf16.msra.mxu0 %v3669
    %3998 = vmatpush.bf16.msra.mxu0 %v3668
    %3999 = vmatmul.bf16.gmra.mxu0 %v3327
    %v4000 = vpop.f32.mrf.mxu0
    %v4001 = vadd.f32 %v3912, %v4000
    %v4002 = vpop.f32.mrf.mxu0
    %v4003 = vadd.f32 %v3914, %v4002
    %4004 = vmatmul.bf16.gmra.mxu0 %v3332
    %v4005 = vpop.f32.mrf.mxu0
    %v4006 = vadd.f32 %v3917, %v4005
    %v4007 = vpop.f32.mrf.mxu0
    %v4008 = vadd.f32 %v3919, %v4007
    %4009 = vmatmul.bf16.gmra.mxu0 %v3337
    %v4010 = vpop.f32.mrf.mxu0
    %v4011 = vadd.f32 %v3922, %v4010
    %v4012 = vpop.f32.mrf.mxu0
    %v4013 = vadd.f32 %v3924, %v4012
    %4014 = vmatmul.bf16.gmra.mxu0 %v3342
    %v4015 = vpop.f32.mrf.mxu0
    %v4016 = vadd.f32 %v3927, %v4015
    %v4017 = vpop.f32.mrf.mxu0
    %v4018 = vadd.f32 %v3929, %v4017
    %4019 = vmatmul.bf16.gmra.mxu0 %v3347
    %v4020 = vpop.f32.mrf.mxu0
    %v4021 = vadd.f32 %v3932, %v4020
    %v4022 = vpop.f32.mrf.mxu0
    %v4023 = vadd.f32 %v3934, %v4022
    %4024 = vmatmul.bf16.gmra.mxu0 %v3352
    %v4025 = vpop.f32.mrf.mxu0
    %v4026 = vadd.f32 %v3937, %v4025
    %v4027 = vpop.f32.mrf.mxu0
    %v4028 = vadd.f32 %v3939, %v4027
    %4029 = vmatmul.bf16.gmra.mxu0 %v3357
    %v4030 = vpop.f32.mrf.mxu0
    %v4031 = vadd.f32 %v3942, %v4030
    %v4032 = vpop.f32.mrf.mxu0
    %v4033 = vadd.f32 %v3944, %v4032
    %4034 = vmatmul.bf16.gmra.mxu0 %v3362
    %v4035 = vpop.f32.mrf.mxu0
    %v4036 = vadd.f32 %v3947, %v4035
    %v4037 = vpop.f32.mrf.mxu0
    %v4038 = vadd.f32 %v3949, %v4037
    %4039 = vmatmul.bf16.gmra.mxu0 %v3367
    %v4040 = vpop.f32.mrf.mxu0
    %v4041 = vadd.f32 %v3952, %v4040
    %v4042 = vpop.f32.mrf.mxu0
    %v4043 = vadd.f32 %v3954, %v4042
    %4044 = vmatmul.bf16.gmra.mxu0 %v3372
    %v4045 = vpop.f32.mrf.mxu0
    %v4046 = vadd.f32 %v3957, %v4045
    %v4047 = vpop.f32.mrf.mxu0
    %v4048 = vadd.f32 %v3959, %v4047
    %4049 = vmatmul.bf16.gmra.mxu0 %v3377
    %v4050 = vpop.f32.mrf.mxu0
    %v4051 = vadd.f32 %v3962, %v4050
    %v4052 = vpop.f32.mrf.mxu0
    %v4053 = vadd.f32 %v3964, %v4052
    %4054 = vmatmul.bf16.gmra.mxu0 %v3382
    %v4055 = vpop.f32.mrf.mxu0
    %v4056 = vadd.f32 %v3967, %v4055
    %v4057 = vpop.f32.mrf.mxu0
    %v4058 = vadd.f32 %v3969, %v4057
    %4059 = vmatmul.bf16.gmra.mxu0 %v3387
    %v4060 = vpop.f32.mrf.mxu0
    %v4061 = vadd.f32 %v3972, %v4060
    %v4062 = vpop.f32.mrf.mxu0
    %v4063 = vadd.f32 %v3974, %v4062
    %4064 = vmatmul.bf16.gmra.mxu0 %v3392
    %v4065 = vpop.f32.mrf.mxu0
    %v4066 = vadd.f32 %v3977, %v4065
    %v4067 = vpop.f32.mrf.mxu0
    %v4068 = vadd.f32 %v3979, %v4067
    %4069 = vmatmul.bf16.gmra.mxu0 %v3397
    %v4070 = vpop.f32.mrf.mxu0
    %v4071 = vadd.f32 %v3982, %v4070
    %v4072 = vpop.f32.mrf.mxu0
    %v4073 = vadd.f32 %v3984, %v4072
    %4074 = vmatmul.bf16.gmra.mxu0 %v3402
    %v4075 = vpop.f32.mrf.mxu0
    %v4076 = vadd.f32 %v3987, %v4075
    %v4077 = vpop.f32.mrf.mxu0
    %v4078 = vadd.f32 %v3989, %v4077
    %4079 = vdwg.mxu0
    %4080 = vmatpush.bf16.msra.mxu0 %v3683
    %4081 = vmatpush.bf16.msra.mxu0 %v3682
    %4082 = vmatpush.bf16.msra.mxu0 %v3681
    %4083 = vmatpush.bf16.msra.mxu0 %v3680
    %4084 = vmatpush.bf16.msra.mxu0 %v3679
    %4085 = vmatpush.bf16.msra.mxu0 %v3678
    %4086 = vmatpush.bf16.msra.mxu0 %v3677
    %4087 = vmatpush.bf16.msra.mxu0 %v3676
    %4088 = vmatmul.bf16.gmra.mxu0 %v3328
    %v4089 = vpop.f32.mrf.mxu0
    %v4090 = vadd.f32 %v4001, %v4089
    %v4091 = vpop.f32.mrf.mxu0
    %v4092 = vadd.f32 %v4003, %v4091
    %4093 = vmatmul.bf16.gmra.mxu0 %v3333
    %v4094 = vpop.f32.mrf.mxu0
    %v4095 = vadd.f32 %v4006, %v4094
    %v4096 = vpop.f32.mrf.mxu0
    %v4097 = vadd.f32 %v4008, %v4096
    %4098 = vmatmul.bf16.gmra.mxu0 %v3338
    %v4099 = vpop.f32.mrf.mxu0
    %v4100 = vadd.f32 %v4011, %v4099
    %v4101 = vpop.f32.mrf.mxu0
    %v4102 = vadd.f32 %v4013, %v4101
    %4103 = vmatmul.bf16.gmra.mxu0 %v3343
    %v4104 = vpop.f32.mrf.mxu0
    %v4105 = vadd.f32 %v4016, %v4104
    %v4106 = vpop.f32.mrf.mxu0
    %v4107 = vadd.f32 %v4018, %v4106
    %4108 = vmatmul.bf16.gmra.mxu0 %v3348
    %v4109 = vpop.f32.mrf.mxu0
    %v4110 = vadd.f32 %v4021, %v4109
    %v4111 = vpop.f32.mrf.mxu0
    %v4112 = vadd.f32 %v4023, %v4111
    %4113 = vmatmul.bf16.gmra.mxu0 %v3353
    %v4114 = vpop.f32.mrf.mxu0
    %v4115 = vadd.f32 %v4026, %v4114
    %v4116 = vpop.f32.mrf.mxu0
    %v4117 = vadd.f32 %v4028, %v4116
    %4118 = vmatmul.bf16.gmra.mxu0 %v3358
    %v4119 = vpop.f32.mrf.mxu0
    %v4120 = vadd.f32 %v4031, %v4119
    %v4121 = vpop.f32.mrf.mxu0
    %v4122 = vadd.f32 %v4033, %v4121
    %4123 = vmatmul.bf16.gmra.mxu0 %v3363
    %v4124 = vpop.f32.mrf.mxu0
    %v4125 = vadd.f32 %v4036, %v4124
    %v4126 = vpop.f32.mrf.mxu0
    %v4127 = vadd.f32 %v4038, %v4126
    %4128 = vmatmul.bf16.gmra.mxu0 %v3368
    %v4129 = vpop.f32.mrf.mxu0
    %v4130 = vadd.f32 %v4041, %v4129
    %v4131 = vpop.f32.mrf.mxu0
    %v4132 = vadd.f32 %v4043, %v4131
    %4133 = vmatmul.bf16.gmra.mxu0 %v3373
    %v4134 = vpop.f32.mrf.mxu0
    %v4135 = vadd.f32 %v4046, %v4134
    %v4136 = vpop.f32.mrf.mxu0
    %v4137 = vadd.f32 %v4048, %v4136
    %4138 = vmatmul.bf16.gmra.mxu0 %v3378
    %v4139 = vpop.f32.mrf.mxu0
    %v4140 = vadd.f32 %v4051, %v4139
    %v4141 = vpop.f32.mrf.mxu0
    %v4142 = vadd.f32 %v4053, %v4141
    %4143 = vmatmul.bf16.gmra.mxu0 %v3383
    %v4144 = vpop.f32.mrf.mxu0
    %v4145 = vadd.f32 %v4056, %v4144
    %v4146 = vpop.f32.mrf.mxu0
    %v4147 = vadd.f32 %v4058, %v4146
    %4148 = vmatmul.bf16.gmra.mxu0 %v3388
    %v4149 = vpop.f32.mrf.mxu0
    %v4150 = vadd.f32 %v4061, %v4149
    %v4151 = vpop.f32.mrf.mxu0
    %v4152 = vadd.f32 %v4063, %v4151
    %4153 = vmatmul.bf16.gmra.mxu0 %v3393
    %v4154 = vpop.f32.mrf.mxu0
    %v4155 = vadd.f32 %v4066, %v4154
    %v4156 = vpop.f32.mrf.mxu0
    %v4157 = vadd.f32 %v4068, %v4156
    %4158 = vmatmul.bf16.gmra.mxu0 %v3398
    %v4159 = vpop.f32.mrf.mxu0
    %v4160 = vadd.f32 %v4071, %v4159
    %v4161 = vpop.f32.mrf.mxu0
    %v4162 = vadd.f32 %v4073, %v4161
    %4163 = vmatmul.bf16.gmra.mxu0 %v3403
    %v4164 = vpop.f32.mrf.mxu0
    %v4165 = vadd.f32 %v4076, %v4164
    %v4166 = vpop.f32.mrf.mxu0
    %v4167 = vadd.f32 %v4078, %v4166
    %4168 = vdwg.mxu0
    %v4169 = vtanh.pop %v4090
    %v4170 = vtanh.pop %v4092
    %v4171 = vtanh.pop %v4095
    %v4172 = vtanh.pop %v4097
    %v4173 = vtanh.pop %v4100
    %v4174 = vtanh.pop %v4102
    %v4175 = vtanh.pop %v4105
    %v4176 = vtanh.pop %v4107
    %v4177 = vtanh.pop %v4110
    %v4178 = vtanh.pop %v4112
    %v4179 = vtanh.pop %v4115
    %v4180 = vtanh.pop %v4117
    %v4181 = vtanh.pop %v4120
    %v4182 = vtanh.pop %v4122
    %v4183 = vtanh.pop %v4125
    %v4184 = vtanh.pop %v4127
    %v4185 = vtanh.pop %v4130
    %v4186 = vtanh.pop %v4132
    %v4187 = vtanh.pop %v4135
    %v4188 = vtanh.pop %v4137
    %v4189 = vtanh.pop %v4140
    %v4190 = vtanh.pop %v4142
    %v4191 = vtanh.pop %v4145
    %v4192 = vtanh.pop %v4147
    %v4193 = vtanh.pop %v4150
    %v4194 = vtanh.pop %v4152
    %v4195 = vtanh.pop %v4155
    %v4196 = vtanh.pop %v4157
    %v4197 = vtanh.pop %v4160
    %v4198 = vtanh.pop %v4162
    %v4199 = vtanh.pop %v4165
    %v4200 = vtanh.pop %v4167
    %v4201 = vpack.c.bf16 %v4169, %v4169
    %v4202 = vpack.c.bf16 %v4170, %v4170
    %v4203 = vpack.c.bf16 %v4171, %v4171
    %v4204 = vpack.c.bf16 %v4172, %v4172
    %v4205 = vpack.c.bf16 %v4173, %v4173
    %v4206 = vpack.c.bf16 %v4174, %v4174
    %v4207 = vpack.c.bf16 %v4175, %v4175
    %v4208 = vpack.c.bf16 %v4176, %v4176
    %v4209 = vpack.c.bf16 %v4177, %v4177
    %v4210 = vpack.c.bf16 %v4178, %v4178
    %v4211 = vpack.c.bf16 %v4179, %v4179
    %v4212 = vpack.c.bf16 %v4180, %v4180
    %v4213 = vpack.c.bf16 %v4181, %v4181
    %v4214 = vpack.c.bf16 %v4182, %v4182
    %v4215 = vpack.c.bf16 %v4183, %v4183
    %v4216 = vpack.c.bf16 %v4184, %v4184
    %v4217 = vpack.c.bf16 %v4185, %v4185
    %v4218 = vpack.c.bf16 %v4186, %v4186
    %v4219 = vpack.c.bf16 %v4187, %v4187
    %v4220 = vpack.c.bf16 %v4188, %v4188
    %v4221 = vpack.c.bf16 %v4189, %v4189
    %v4222 = vpack.c.bf16 %v4190, %v4190
    %v4223 = vpack.c.bf16 %v4191, %v4191
    %v4224 = vpack.c.bf16 %v4192, %v4192
    %v4225 = vpack.c.bf16 %v4193, %v4193
    %v4226 = vpack.c.bf16 %v4194, %v4194
    %v4227 = vpack.c.bf16 %v4195, %v4195
    %v4228 = vpack.c.bf16 %v4196, %v4196
    %v4229 = vpack.c.bf16 %v4197, %v4197
    %v4230 = vpack.c.bf16 %v4198, %v4198
    %v4231 = vpack.c.bf16 %v4199, %v4199
    %v4232 = vpack.c.bf16 %v4200, %v4200
    %4233 = vst.msk [vmem:[#allocation4] sm:$0xf] %vm2299, %v4201
    %4234 = vst.msk [vmem:[#allocation4 + $0x8] sm:$0xf] %vm2299, %v4202
    %4235 = vst.msk [vmem:[#allocation4 + $0x10] sm:$0xf] %vm2299, %v4203
    %4236 = vst.msk [vmem:[#allocation4 + $0x18] sm:$0xf] %vm2299, %v4204
    %4237 = vst.msk [vmem:[#allocation4 + $0x20] sm:$0xf] %vm2299, %v4205
    %4238 = vst.msk [vmem:[#allocation4 + $0x28] sm:$0xf] %vm2299, %v4206
    %4239 = vst.msk [vmem:[#allocation4 + $0x30] sm:$0xf] %vm2299, %v4207
    %4240 = vst.msk [vmem:[#allocation4 + $0x38] sm:$0xf] %vm2299, %v4208
    %4241 = vst.msk [vmem:[#allocation4 + $0x40] sm:$0xf] %vm2299, %v4209
    %4242 = vst.msk [vmem:[#allocation4 + $0x48] sm:$0xf] %vm2299, %v4210
    %4243 = vst.msk [vmem:[#allocation4 + $0x50] sm:$0xf] %vm2299, %v4211
    %4244 = vst.msk [vmem:[#allocation4 + $0x58] sm:$0xf] %vm2299, %v4212
    %4245 = vst.msk [vmem:[#allocation4 + $0x60] sm:$0xf] %vm2299, %v4213
    %4246 = vst.msk [vmem:[#allocation4 + $0x68] sm:$0xf] %vm2299, %v4214
    %4247 = vst.msk [vmem:[#allocation4 + $0x70] sm:$0xf] %vm2299, %v4215
    %4248 = vst.msk [vmem:[#allocation4 + $0x78] sm:$0xf] %vm2299, %v4216
    %4249 = vst.msk [vmem:[#allocation4 + $0x80] sm:$0xf] %vm2299, %v4217
    %4250 = vst.msk [vmem:[#allocation4 + $0x88] sm:$0xf] %vm2299, %v4218
    %4251 = vst.msk [vmem:[#allocation4 + $0x90] sm:$0xf] %vm2299, %v4219
    %4252 = vst.msk [vmem:[#allocation4 + $0x98] sm:$0xf] %vm2299, %v4220
    %4253 = vst.msk [vmem:[#allocation4 + $0xa0] sm:$0xf] %vm2299, %v4221
    %4254 = vst.msk [vmem:[#allocation4 + $0xa8] sm:$0xf] %vm2299, %v4222
    %4255 = vst.msk [vmem:[#allocation4 + $0xb0] sm:$0xf] %vm2299, %v4223
    %4256 = vst.msk [vmem:[#allocation4 + $0xb8] sm:$0xf] %vm2299, %v4224
    %4257 = vst.msk [vmem:[#allocation4 + $0xc0] sm:$0xf] %vm2299, %v4225
    %4258 = vst.msk [vmem:[#allocation4 + $0xc8] sm:$0xf] %vm2299, %v4226
    %4259 = vst.msk [vmem:[#allocation4 + $0xd0] sm:$0xf] %vm2299, %v4227
    %4260 = vst.msk [vmem:[#allocation4 + $0xd8] sm:$0xf] %vm2299, %v4228
    %4261 = vst.msk [vmem:[#allocation4 + $0xe0] sm:$0xf] %vm2299, %v4229
    %4262 = vst.msk [vmem:[#allocation4 + $0xe8] sm:$0xf] %vm2299, %v4230
    %4263 = vst.msk [vmem:[#allocation4 + $0xf0] sm:$0xf] %vm2299, %v4231
    %4264 = vst.msk [vmem:[#allocation4 + $0xf8] sm:$0xf] %vm2299, %v4232
    %v4265 = vld [vmem:[#allocation4] sm:$0xf]
    %v4266 = vld [vmem:[#allocation4 + $0x8] sm:$0xf]
    %v4267 = vld [vmem:[#allocation4 + $0x10] sm:$0xf]
    %v4268 = vld [vmem:[#allocation4 + $0x18] sm:$0xf]
    %v4269 = vld [vmem:[#allocation4 + $0x20] sm:$0xf]
    %v4270 = vld [vmem:[#allocation4 + $0x28] sm:$0xf]
    %v4271 = vld [vmem:[#allocation4 + $0x30] sm:$0xf]
    %v4272 = vld [vmem:[#allocation4 + $0x38] sm:$0xf]
    %v4273 = vld [vmem:[#allocation4 + $0x40] sm:$0xf]
    %v4274 = vld [vmem:[#allocation4 + $0x48] sm:$0xf]
    %v4275 = vld [vmem:[#allocation4 + $0x50] sm:$0xf]
    %v4276 = vld [vmem:[#allocation4 + $0x58] sm:$0xf]
    %v4277 = vld [vmem:[#allocation4 + $0x60] sm:$0xf]
    %v4278 = vld [vmem:[#allocation4 + $0x68] sm:$0xf]
    %v4279 = vld [vmem:[#allocation4 + $0x70] sm:$0xf]
    %v4280 = vld [vmem:[#allocation4 + $0x78] sm:$0xf]
    %v4281 = vld [vmem:[#allocation4 + $0x80] sm:$0xf]
    %v4282 = vld [vmem:[#allocation4 + $0x88] sm:$0xf]
    %v4283 = vld [vmem:[#allocation4 + $0x90] sm:$0xf]
    %v4284 = vld [vmem:[#allocation4 + $0x98] sm:$0xf]
    %v4285 = vld [vmem:[#allocation4 + $0xa0] sm:$0xf]
    %v4286 = vld [vmem:[#allocation4 + $0xa8] sm:$0xf]
    %v4287 = vld [vmem:[#allocation4 + $0xb0] sm:$0xf]
    %v4288 = vld [vmem:[#allocation4 + $0xb8] sm:$0xf]
    %v4289 = vld [vmem:[#allocation4 + $0xc0] sm:$0xf]
    %v4290 = vld [vmem:[#allocation4 + $0xc8] sm:$0xf]
    %v4291 = vld [vmem:[#allocation4 + $0xd0] sm:$0xf]
    %v4292 = vld [vmem:[#allocation4 + $0xd8] sm:$0xf]
    %v4293 = vld [vmem:[#allocation4 + $0xe0] sm:$0xf]
    %v4294 = vld [vmem:[#allocation4 + $0xe8] sm:$0xf]
    %v4295 = vld [vmem:[#allocation4 + $0xf0] sm:$0xf]
    %v4296 = vld [vmem:[#allocation4 + $0xf8] sm:$0xf]
    %v4297 = vunpack.c.l.bf16 %v4265
    %v4298 = vunpack.c.l.bf16 %v4266
    %v4299 = vunpack.c.l.bf16 %v4267
    %v4300 = vunpack.c.l.bf16 %v4268
    %v4301 = vunpack.c.l.bf16 %v4269
    %v4302 = vunpack.c.l.bf16 %v4270
    %v4303 = vunpack.c.l.bf16 %v4271
    %v4304 = vunpack.c.l.bf16 %v4272
    %v4305 = vunpack.c.l.bf16 %v4273
    %v4306 = vunpack.c.l.bf16 %v4274
    %v4307 = vunpack.c.l.bf16 %v4275
    %v4308 = vunpack.c.l.bf16 %v4276
    %v4309 = vunpack.c.l.bf16 %v4277
    %v4310 = vunpack.c.l.bf16 %v4278
    %v4311 = vunpack.c.l.bf16 %v4279
    %v4312 = vunpack.c.l.bf16 %v4280
    %v4313 = vunpack.c.l.bf16 %v4281
    %v4314 = vunpack.c.l.bf16 %v4282
    %v4315 = vunpack.c.l.bf16 %v4283
    %v4316 = vunpack.c.l.bf16 %v4284
    %v4317 = vunpack.c.l.bf16 %v4285
    %v4318 = vunpack.c.l.bf16 %v4286
    %v4319 = vunpack.c.l.bf16 %v4287
    %v4320 = vunpack.c.l.bf16 %v4288
    %v4321 = vunpack.c.l.bf16 %v4289
    %v4322 = vunpack.c.l.bf16 %v4290
    %v4323 = vunpack.c.l.bf16 %v4291
    %v4324 = vunpack.c.l.bf16 %v4292
    %v4325 = vunpack.c.l.bf16 %v4293
    %v4326 = vunpack.c.l.bf16 %v4294
    %v4327 = vunpack.c.l.bf16 %v4295
    %v4328 = vunpack.c.l.bf16 %v4296
    %4361 = vrot.lane.b32.xlu0 %v4297, 127
    %v4362 = vpop.permute.xlu0 %4361
    %4363 = vrot.lane.b32.xlu0 %v4298, 127
    %v4364 = vpop.permute.xlu0 %4363
    %4365 = vrot.lane.b32.xlu0 %v4299, 127
    %v4366 = vpop.permute.xlu0 %4365
    %4367 = vrot.lane.b32.xlu0 %v4300, 127
    %v4368 = vpop.permute.xlu0 %4367
    %4369 = vrot.lane.b32.xlu0 %v4301, 127
    %v4370 = vpop.permute.xlu0 %4369
    %4371 = vrot.lane.b32.xlu0 %v4302, 127
    %v4372 = vpop.permute.xlu0 %4371
    %4373 = vrot.lane.b32.xlu0 %v4303, 127
    %v4374 = vpop.permute.xlu0 %4373
    %4375 = vrot.lane.b32.xlu0 %v4304, 127
    %v4376 = vpop.permute.xlu0 %4375
    %4377 = vrot.lane.b32.xlu0 %v4305, 127
    %v4378 = vpop.permute.xlu0 %4377
    %4379 = vrot.lane.b32.xlu0 %v4306, 127
    %v4380 = vpop.permute.xlu0 %4379
    %4381 = vrot.lane.b32.xlu0 %v4307, 127
    %v4382 = vpop.permute.xlu0 %4381
    %4383 = vrot.lane.b32.xlu0 %v4308, 127
    %v4384 = vpop.permute.xlu0 %4383
    %4385 = vrot.lane.b32.xlu0 %v4309, 127
    %v4386 = vpop.permute.xlu0 %4385
    %4387 = vrot.lane.b32.xlu0 %v4310, 127
    %v4388 = vpop.permute.xlu0 %4387
    %4389 = vrot.lane.b32.xlu0 %v4311, 127
    %v4390 = vpop.permute.xlu0 %4389
    %4391 = vrot.lane.b32.xlu0 %v4312, 127
    %v4392 = vpop.permute.xlu0 %4391
    %4393 = vrot.lane.b32.xlu0 %v4313, 127
    %v4394 = vpop.permute.xlu0 %4393
    %4395 = vrot.lane.b32.xlu0 %v4314, 127
    %v4396 = vpop.permute.xlu0 %4395
    %4397 = vrot.lane.b32.xlu0 %v4315, 127
    %v4398 = vpop.permute.xlu0 %4397
    %4399 = vrot.lane.b32.xlu0 %v4316, 127
    %v4400 = vpop.permute.xlu0 %4399
    %4401 = vrot.lane.b32.xlu0 %v4317, 127
    %v4402 = vpop.permute.xlu0 %4401
    %4403 = vrot.lane.b32.xlu0 %v4318, 127
    %v4404 = vpop.permute.xlu0 %4403
    %4405 = vrot.lane.b32.xlu0 %v4319, 127
    %v4406 = vpop.permute.xlu0 %4405
    %4407 = vrot.lane.b32.xlu0 %v4320, 127
    %v4408 = vpop.permute.xlu0 %4407
    %4409 = vrot.lane.b32.xlu0 %v4321, 127
    %v4410 = vpop.permute.xlu0 %4409
    %4411 = vrot.lane.b32.xlu0 %v4322, 127
    %v4412 = vpop.permute.xlu0 %4411
    %4413 = vrot.lane.b32.xlu0 %v4323, 127
    %v4414 = vpop.permute.xlu0 %4413
    %4415 = vrot.lane.b32.xlu0 %v4324, 127
    %v4416 = vpop.permute.xlu0 %4415
    %4417 = vrot.lane.b32.xlu0 %v4325, 127
    %v4418 = vpop.permute.xlu0 %4417
    %4419 = vrot.lane.b32.xlu0 %v4326, 127
    %v4420 = vpop.permute.xlu0 %4419
    %4421 = vrot.lane.b32.xlu0 %v4327, 127
    %v4422 = vpop.permute.xlu0 %4421
    %4423 = vrot.lane.b32.xlu0 %v4328, 127
    %v4424 = vpop.permute.xlu0 %4423
    %v4457 = vmax.f32 %v4297, %v4362
    %v4458 = vmax.f32 %v4298, %v4364
    %v4459 = vmax.f32 %v4299, %v4366
    %v4460 = vmax.f32 %v4300, %v4368
    %v4461 = vmax.f32 %v4301, %v4370
    %v4462 = vmax.f32 %v4302, %v4372
    %v4463 = vmax.f32 %v4303, %v4374
    %v4464 = vmax.f32 %v4304, %v4376
    %v4465 = vmax.f32 %v4305, %v4378
    %v4466 = vmax.f32 %v4306, %v4380
    %v4467 = vmax.f32 %v4307, %v4382
    %v4468 = vmax.f32 %v4308, %v4384
    %v4469 = vmax.f32 %v4309, %v4386
    %v4470 = vmax.f32 %v4310, %v4388
    %v4471 = vmax.f32 %v4311, %v4390
    %v4472 = vmax.f32 %v4312, %v4392
    %v4473 = vmax.f32 %v4313, %v4394
    %v4474 = vmax.f32 %v4314, %v4396
    %v4475 = vmax.f32 %v4315, %v4398
    %v4476 = vmax.f32 %v4316, %v4400
    %v4477 = vmax.f32 %v4317, %v4402
    %v4478 = vmax.f32 %v4318, %v4404
    %v4479 = vmax.f32 %v4319, %v4406
    %v4480 = vmax.f32 %v4320, %v4408
    %v4481 = vmax.f32 %v4321, %v4410
    %v4482 = vmax.f32 %v4322, %v4412
    %v4483 = vmax.f32 %v4323, %v4414
    %v4484 = vmax.f32 %v4324, %v4416
    %v4485 = vmax.f32 %v4325, %v4418
    %v4486 = vmax.f32 %v4326, %v4420
    %v4487 = vmax.f32 %v4327, %v4422
    %v4488 = vmax.f32 %v4328, %v4424
    %v4489 = vpack.c.bf16 %v4457, %v4457
    %v4490 = vpack.c.bf16 %v4458, %v4458
    %v4491 = vpack.c.bf16 %v4459, %v4459
    %v4492 = vpack.c.bf16 %v4460, %v4460
    %v4493 = vpack.c.bf16 %v4461, %v4461
    %v4494 = vpack.c.bf16 %v4462, %v4462
    %v4495 = vpack.c.bf16 %v4463, %v4463
    %v4496 = vpack.c.bf16 %v4464, %v4464
    %v4497 = vpack.c.bf16 %v4465, %v4465
    %v4498 = vpack.c.bf16 %v4466, %v4466
    %v4499 = vpack.c.bf16 %v4467, %v4467
    %v4500 = vpack.c.bf16 %v4468, %v4468
    %v4501 = vpack.c.bf16 %v4469, %v4469
    %v4502 = vpack.c.bf16 %v4470, %v4470
    %v4503 = vpack.c.bf16 %v4471, %v4471
    %v4504 = vpack.c.bf16 %v4472, %v4472
    %v4505 = vpack.c.bf16 %v4473, %v4473
    %v4506 = vpack.c.bf16 %v4474, %v4474
    %v4507 = vpack.c.bf16 %v4475, %v4475
    %v4508 = vpack.c.bf16 %v4476, %v4476
    %v4509 = vpack.c.bf16 %v4477, %v4477
    %v4510 = vpack.c.bf16 %v4478, %v4478
    %v4511 = vpack.c.bf16 %v4479, %v4479
    %v4512 = vpack.c.bf16 %v4480, %v4480
    %v4513 = vpack.c.bf16 %v4481, %v4481
    %v4514 = vpack.c.bf16 %v4482, %v4482
    %v4515 = vpack.c.bf16 %v4483, %v4483
    %v4516 = vpack.c.bf16 %v4484, %v4484
    %v4517 = vpack.c.bf16 %v4485, %v4485
    %v4518 = vpack.c.bf16 %v4486, %v4486
    %v4519 = vpack.c.bf16 %v4487, %v4487
    %v4520 = vpack.c.bf16 %v4488, %v4488
    %v4521 = vunpack.c.l.bf16 %v4489
    %v4522 = vunpack.c.l.bf16 %v4490
    %v4523 = vunpack.c.l.bf16 %v4491
    %v4524 = vunpack.c.l.bf16 %v4492
    %v4525 = vunpack.c.l.bf16 %v4493
    %v4526 = vunpack.c.l.bf16 %v4494
    %v4527 = vunpack.c.l.bf16 %v4495
    %v4528 = vunpack.c.l.bf16 %v4496
    %v4529 = vunpack.c.l.bf16 %v4497
    %v4530 = vunpack.c.l.bf16 %v4498
    %v4531 = vunpack.c.l.bf16 %v4499
    %v4532 = vunpack.c.l.bf16 %v4500
    %v4533 = vunpack.c.l.bf16 %v4501
    %v4534 = vunpack.c.l.bf16 %v4502
    %v4535 = vunpack.c.l.bf16 %v4503
    %v4536 = vunpack.c.l.bf16 %v4504
    %v4537 = vunpack.c.l.bf16 %v4505
    %v4538 = vunpack.c.l.bf16 %v4506
    %v4539 = vunpack.c.l.bf16 %v4507
    %v4540 = vunpack.c.l.bf16 %v4508
    %v4541 = vunpack.c.l.bf16 %v4509
    %v4542 = vunpack.c.l.bf16 %v4510
    %v4543 = vunpack.c.l.bf16 %v4511
    %v4544 = vunpack.c.l.bf16 %v4512
    %v4545 = vunpack.c.l.bf16 %v4513
    %v4546 = vunpack.c.l.bf16 %v4514
    %v4547 = vunpack.c.l.bf16 %v4515
    %v4548 = vunpack.c.l.bf16 %v4516
    %v4549 = vunpack.c.l.bf16 %v4517
    %v4550 = vunpack.c.l.bf16 %v4518
    %v4551 = vunpack.c.l.bf16 %v4519
    %v4552 = vunpack.c.l.bf16 %v4520
    %4553 = vrot.lane.b32.xlu0 %v4297, 126
    %v4554 = vpop.permute.xlu0 %4553
    %4555 = vrot.lane.b32.xlu0 %v4298, 126
    %v4556 = vpop.permute.xlu0 %4555
    %4557 = vrot.lane.b32.xlu0 %v4299, 126
    %v4558 = vpop.permute.xlu0 %4557
    %4559 = vrot.lane.b32.xlu0 %v4300, 126
    %v4560 = vpop.permute.xlu0 %4559
    %4561 = vrot.lane.b32.xlu0 %v4301, 126
    %v4562 = vpop.permute.xlu0 %4561
    %4563 = vrot.lane.b32.xlu0 %v4302, 126
    %v4564 = vpop.permute.xlu0 %4563
    %4565 = vrot.lane.b32.xlu0 %v4303, 126
    %v4566 = vpop.permute.xlu0 %4565
    %4567 = vrot.lane.b32.xlu0 %v4304, 126
    %v4568 = vpop.permute.xlu0 %4567
    %4569 = vrot.lane.b32.xlu0 %v4305, 126
    %v4570 = vpop.permute.xlu0 %4569
    %4571 = vrot.lane.b32.xlu0 %v4306, 126
    %v4572 = vpop.permute.xlu0 %4571
    %4573 = vrot.lane.b32.xlu0 %v4307, 126
    %v4574 = vpop.permute.xlu0 %4573
    %4575 = vrot.lane.b32.xlu0 %v4308, 126
    %v4576 = vpop.permute.xlu0 %4575
    %4577 = vrot.lane.b32.xlu0 %v4309, 126
    %v4578 = vpop.permute.xlu0 %4577
    %4579 = vrot.lane.b32.xlu0 %v4310, 126
    %v4580 = vpop.permute.xlu0 %4579
    %4581 = vrot.lane.b32.xlu0 %v4311, 126
    %v4582 = vpop.permute.xlu0 %4581
    %4583 = vrot.lane.b32.xlu0 %v4312, 126
    %v4584 = vpop.permute.xlu0 %4583
    %4585 = vrot.lane.b32.xlu0 %v4313, 126
    %v4586 = vpop.permute.xlu0 %4585
    %4587 = vrot.lane.b32.xlu0 %v4314, 126
    %v4588 = vpop.permute.xlu0 %4587
    %4589 = vrot.lane.b32.xlu0 %v4315, 126
    %v4590 = vpop.permute.xlu0 %4589
    %4591 = vrot.lane.b32.xlu0 %v4316, 126
    %v4592 = vpop.permute.xlu0 %4591
    %4593 = vrot.lane.b32.xlu0 %v4317, 126
    %v4594 = vpop.permute.xlu0 %4593
    %4595 = vrot.lane.b32.xlu0 %v4318, 126
    %v4596 = vpop.permute.xlu0 %4595
    %4597 = vrot.lane.b32.xlu0 %v4319, 126
    %v4598 = vpop.permute.xlu0 %4597
    %4599 = vrot.lane.b32.xlu0 %v4320, 126
    %v4600 = vpop.permute.xlu0 %4599
    %4601 = vrot.lane.b32.xlu0 %v4321, 126
    %v4602 = vpop.permute.xlu0 %4601
    %4603 = vrot.lane.b32.xlu0 %v4322, 126
    %v4604 = vpop.permute.xlu0 %4603
    %4605 = vrot.lane.b32.xlu0 %v4323, 126
    %v4606 = vpop.permute.xlu0 %4605
    %4607 = vrot.lane.b32.xlu0 %v4324, 126
    %v4608 = vpop.permute.xlu0 %4607
    %4609 = vrot.lane.b32.xlu0 %v4325, 126
    %v4610 = vpop.permute.xlu0 %4609
    %4611 = vrot.lane.b32.xlu0 %v4326, 126
    %v4612 = vpop.permute.xlu0 %4611
    %4613 = vrot.lane.b32.xlu0 %v4327, 126
    %v4614 = vpop.permute.xlu0 %4613
    %4615 = vrot.lane.b32.xlu0 %v4328, 126
    %v4616 = vpop.permute.xlu0 %4615
    %v4649 = vmax.f32 %v4521, %v4554
    %v4650 = vmax.f32 %v4522, %v4556
    %v4651 = vmax.f32 %v4523, %v4558
    %v4652 = vmax.f32 %v4524, %v4560
    %v4653 = vmax.f32 %v4525, %v4562
    %v4654 = vmax.f32 %v4526, %v4564
    %v4655 = vmax.f32 %v4527, %v4566
    %v4656 = vmax.f32 %v4528, %v4568
    %v4657 = vmax.f32 %v4529, %v4570
    %v4658 = vmax.f32 %v4530, %v4572
    %v4659 = vmax.f32 %v4531, %v4574
    %v4660 = vmax.f32 %v4532, %v4576
    %v4661 = vmax.f32 %v4533, %v4578
    %v4662 = vmax.f32 %v4534, %v4580
    %v4663 = vmax.f32 %v4535, %v4582
    %v4664 = vmax.f32 %v4536, %v4584
    %v4665 = vmax.f32 %v4537, %v4586
    %v4666 = vmax.f32 %v4538, %v4588
    %v4667 = vmax.f32 %v4539, %v4590
    %v4668 = vmax.f32 %v4540, %v4592
    %v4669 = vmax.f32 %v4541, %v4594
    %v4670 = vmax.f32 %v4542, %v4596
    %v4671 = vmax.f32 %v4543, %v4598
    %v4672 = vmax.f32 %v4544, %v4600
    %v4673 = vmax.f32 %v4545, %v4602
    %v4674 = vmax.f32 %v4546, %v4604
    %v4675 = vmax.f32 %v4547, %v4606
    %v4676 = vmax.f32 %v4548, %v4608
    %v4677 = vmax.f32 %v4549, %v4610
    %v4678 = vmax.f32 %v4550, %v4612
    %v4679 = vmax.f32 %v4551, %v4614
    %v4680 = vmax.f32 %v4552, %v4616
    %v4681 = vpack.c.bf16 %v4650, %v4649
    %v4682 = vpack.c.bf16 %v4652, %v4651
    %v4683 = vpack.c.bf16 %v4654, %v4653
    %v4684 = vpack.c.bf16 %v4656, %v4655
    %v4685 = vpack.c.bf16 %v4658, %v4657
    %v4686 = vpack.c.bf16 %v4660, %v4659
    %v4687 = vpack.c.bf16 %v4662, %v4661
    %v4688 = vpack.c.bf16 %v4664, %v4663
    %v4689 = vpack.c.bf16 %v4666, %v4665
    %v4690 = vpack.c.bf16 %v4668, %v4667
    %v4691 = vpack.c.bf16 %v4670, %v4669
    %v4692 = vpack.c.bf16 %v4672, %v4671
    %v4693 = vpack.c.bf16 %v4674, %v4673
    %v4694 = vpack.c.bf16 %v4676, %v4675
    %v4695 = vpack.c.bf16 %v4678, %v4677
    %v4696 = vpack.c.bf16 %v4680, %v4679
    %v4697 = vld [vmem:[%s9] sm:$0xf]
    %v4698 = vld [vmem:[%s9 + $0x4] sm:$0xf]
    %v4699 = vld [vmem:[%s9 + $0x8] sm:$0xf]
    %v4700 = vld [vmem:[%s9 + $0xc] sm:$0xf]
    %v4701 = vld [vmem:[%s9 + $0x10] sm:$0xf]
    %v4702 = vld [vmem:[%s9 + $0x14] sm:$0xf]
    %v4703 = vld [vmem:[%s9 + $0x18] sm:$0xf]
    %v4704 = vld [vmem:[%s9 + $0x1c] sm:$0x3]
    %v4713 = vunpack.c.l.b16 %v4697
    %v4714 = vunpack.c.l.b16 %v4698
    %v4715 = vunpack.c.l.b16 %v4699
    %v4716 = vunpack.c.l.b16 %v4700
    %v4717 = vunpack.c.l.b16 %v4701
    %v4718 = vunpack.c.l.b16 %v4702
    %v4719 = vunpack.c.l.b16 %v4703
    %v4720 = vunpack.c.l.b16 %v4704
    %v4721 = vpack.c.b16 %v4714, %v4713
    %v4722 = vpack.c.b16 %v4716, %v4715
    %v4723 = vpack.c.b16 %v4718, %v4717
    %v4724 = vpack.c.b16 %v4720, %v4719
    %vm4728 = vcmask 482304
    %v4730 = vsel %vm4728, %v4681, 0
    %v4733 = vsel %vm4728, %v4682, 0
    %v4736 = vsel %vm4728, %v4683, 0
    %v4739 = vsel %vm4728, %v4684, 0
    %v4742 = vsel %vm4728, %v4685, 0
    %v4745 = vsel %vm4728, %v4686, 0
    %v4748 = vsel %vm4728, %v4687, 0
    %v4751 = vsel %vm4728, %v4688, 0
    %v4754 = vsel %vm4728, %v4689, 0
    %v4757 = vsel %vm4728, %v4690, 0
    %v4760 = vsel %vm4728, %v4691, 0
    %v4763 = vsel %vm4728, %v4692, 0
    %v4766 = vsel %vm4728, %v4693, 0
    %v4769 = vsel %vm4728, %v4694, 0
    %v4772 = vsel %vm4728, %v4695, 0
    %v4775 = vsel %vm4728, %v4696, 0
    %vm4777 = vcmask 1045504
    %v4778 = vsel %vm2100, 4294967295, 65535
    %v4779 = vsel %vm4777, %v4778, 0
    %v4781 = vand.u32 %v4724, %v4779
    %4783 = vmatpush.bf16.msra.mxu0 0
    %4784 = vmatpush.bf16.msra.mxu0 0
    %4785 = vmatpush.bf16.msra.mxu0 0
    %4786 = vmatpush.bf16.msra.mxu0 0
    %4787 = vmatpush.bf16.msra.mxu0 %v4781
    %4788 = vmatpush.bf16.msra.mxu0 %v4723
    %4789 = vmatpush.bf16.msra.mxu0 %v4722
    %4790 = vmatpush.bf16.msra.mxu0 %v4721
    %4791 = vmatmul.bf16.gmra.mxu0 %v4730
    %v4792 = vpop.f32.mrf.mxu0
    %v4793 = vadd.f32 0.0, %v4792
    %v4794 = vpop.f32.mrf.mxu0
    %v4795 = vadd.f32 0.0, %v4794
    %4796 = vmatmul.bf16.gmra.mxu0 %v4733
    %v4797 = vpop.f32.mrf.mxu0
    %v4798 = vadd.f32 0.0, %v4797
    %v4799 = vpop.f32.mrf.mxu0
    %v4800 = vadd.f32 0.0, %v4799
    %4801 = vmatmul.bf16.gmra.mxu0 %v4736
    %v4802 = vpop.f32.mrf.mxu0
    %v4803 = vadd.f32 0.0, %v4802
    %v4804 = vpop.f32.mrf.mxu0
    %v4805 = vadd.f32 0.0, %v4804
    %4806 = vmatmul.bf16.gmra.mxu0 %v4739
    %v4807 = vpop.f32.mrf.mxu0
    %v4808 = vadd.f32 0.0, %v4807
    %v4809 = vpop.f32.mrf.mxu0
    %v4810 = vadd.f32 0.0, %v4809
    %4811 = vmatmul.bf16.gmra.mxu0 %v4742
    %v4812 = vpop.f32.mrf.mxu0
    %v4813 = vadd.f32 0.0, %v4812
    %v4814 = vpop.f32.mrf.mxu0
    %v4815 = vadd.f32 0.0, %v4814
    %4816 = vmatmul.bf16.gmra.mxu0 %v4745
    %v4817 = vpop.f32.mrf.mxu0
    %v4818 = vadd.f32 0.0, %v4817
    %v4819 = vpop.f32.mrf.mxu0
    %v4820 = vadd.f32 0.0, %v4819
    %4821 = vmatmul.bf16.gmra.mxu0 %v4748
    %v4822 = vpop.f32.mrf.mxu0
    %v4823 = vadd.f32 0.0, %v4822
    %v4824 = vpop.f32.mrf.mxu0
    %v4825 = vadd.f32 0.0, %v4824
    %4826 = vmatmul.bf16.gmra.mxu0 %v4751
    %v4827 = vpop.f32.mrf.mxu0
    %v4828 = vadd.f32 0.0, %v4827
    %v4829 = vpop.f32.mrf.mxu0
    %v4830 = vadd.f32 0.0, %v4829
    %4831 = vmatmul.bf16.gmra.mxu0 %v4754
    %v4832 = vpop.f32.mrf.mxu0
    %v4833 = vadd.f32 0.0, %v4832
    %v4834 = vpop.f32.mrf.mxu0
    %v4835 = vadd.f32 0.0, %v4834
    %4836 = vmatmul.bf16.gmra.mxu0 %v4757
    %v4837 = vpop.f32.mrf.mxu0
    %v4838 = vadd.f32 0.0, %v4837
    %v4839 = vpop.f32.mrf.mxu0
    %v4840 = vadd.f32 0.0, %v4839
    %4841 = vmatmul.bf16.gmra.mxu0 %v4760
    %v4842 = vpop.f32.mrf.mxu0
    %v4843 = vadd.f32 0.0, %v4842
    %v4844 = vpop.f32.mrf.mxu0
    %v4845 = vadd.f32 0.0, %v4844
    %4846 = vmatmul.bf16.gmra.mxu0 %v4763
    %v4847 = vpop.f32.mrf.mxu0
    %v4848 = vadd.f32 0.0, %v4847
    %v4849 = vpop.f32.mrf.mxu0
    %v4850 = vadd.f32 0.0, %v4849
    %4851 = vmatmul.bf16.gmra.mxu0 %v4766
    %v4852 = vpop.f32.mrf.mxu0
    %v4853 = vadd.f32 0.0, %v4852
    %v4854 = vpop.f32.mrf.mxu0
    %v4855 = vadd.f32 0.0, %v4854
    %4856 = vmatmul.bf16.gmra.mxu0 %v4769
    %v4857 = vpop.f32.mrf.mxu0
    %v4858 = vadd.f32 0.0, %v4857
    %v4859 = vpop.f32.mrf.mxu0
    %v4860 = vadd.f32 0.0, %v4859
    %4861 = vmatmul.bf16.gmra.mxu0 %v4772
    %v4862 = vpop.f32.mrf.mxu0
    %v4863 = vadd.f32 0.0, %v4862
    %v4864 = vpop.f32.mrf.mxu0
    %v4865 = vadd.f32 0.0, %v4864
    %4866 = vmatmul.bf16.gmra.mxu0 %v4775
    %v4867 = vpop.f32.mrf.mxu0
    %v4868 = vadd.f32 0.0, %v4867
    %v4869 = vpop.f32.mrf.mxu0
    %v4870 = vadd.f32 0.0, %v4869
    %4871 = vdwg.mxu0
    %4872 = vst [vmem:[#allocation5] sm:$0xff] 0
    %4873 = vst [vmem:[#allocation5 + $0x8] sm:$0xff] 0
    %4874 = vst [vmem:[#allocation5 + $0x10] sm:$0xff] 0
    %4875 = vst [vmem:[#allocation5 + $0x18] sm:$0xff] 0
    %v4876 = vpack.c.bf16 %v4793, %v4793
    %v4877 = vpack.c.bf16 %v4795, %v4795
    %v4878 = vpack.c.bf16 %v4798, %v4798
    %v4879 = vpack.c.bf16 %v4800, %v4800
    %v4880 = vpack.c.bf16 %v4803, %v4803
    %v4881 = vpack.c.bf16 %v4805, %v4805
    %v4882 = vpack.c.bf16 %v4808, %v4808
    %v4883 = vpack.c.bf16 %v4810, %v4810
    %v4884 = vpack.c.bf16 %v4813, %v4813
    %v4885 = vpack.c.bf16 %v4815, %v4815
    %v4886 = vpack.c.bf16 %v4818, %v4818
    %v4887 = vpack.c.bf16 %v4820, %v4820
    %v4888 = vpack.c.bf16 %v4823, %v4823
    %v4889 = vpack.c.bf16 %v4825, %v4825
    %v4890 = vpack.c.bf16 %v4828, %v4828
    %v4891 = vpack.c.bf16 %v4830, %v4830
    %v4892 = vpack.c.bf16 %v4833, %v4833
    %v4893 = vpack.c.bf16 %v4835, %v4835
    %v4894 = vpack.c.bf16 %v4838, %v4838
    %v4895 = vpack.c.bf16 %v4840, %v4840
    %v4896 = vpack.c.bf16 %v4843, %v4843
    %v4897 = vpack.c.bf16 %v4845, %v4845
    %v4898 = vpack.c.bf16 %v4848, %v4848
    %v4899 = vpack.c.bf16 %v4850, %v4850
    %v4900 = vpack.c.bf16 %v4853, %v4853
    %v4901 = vpack.c.bf16 %v4855, %v4855
    %v4902 = vpack.c.bf16 %v4858, %v4858
    %v4903 = vpack.c.bf16 %v4860, %v4860
    %v4904 = vpack.c.bf16 %v4863, %v4863
    %v4905 = vpack.c.bf16 %v4865, %v4865
    %v4906 = vpack.c.bf16 %v4868, %v4868
    %v4907 = vpack.c.bf16 %v4870, %v4870
    %vm4908 = vcmask 240640
    %4909 = vst.msk [vmem:[#allocation5] sm:$0xf] %vm4908, %v4876
    %4910 = vst.msk [vmem:[#allocation5 + $0x10] sm:$0xf] %vm4908, %v4877
    %4913 = vrot.lane.b32.xlu0 %v4878, 32
    %v4914 = vpop.permute.xlu0 %4913
    %4915 = vrot.lane.b32.xlu0 %v4879, 32
    %v4916 = vpop.permute.xlu0 %4915
    %vm4919 = vcmask 503040
    %4920 = vst.msk [vmem:[#allocation5] sm:$0xf] %vm4919, %v4914
    %4921 = vst.msk [vmem:[#allocation5 + $0x10] sm:$0xf] %vm4919, %v4916
    %4924 = vrot.lane.b32.xlu0 %v4880, 64
    %v4925 = vpop.permute.xlu0 %4924
    %4926 = vrot.lane.b32.xlu0 %v4881, 64
    %v4927 = vpop.permute.xlu0 %4926
    %vm4930 = vcmask 765440
    %4931 = vst.msk [vmem:[#allocation5] sm:$0xf] %vm4930, %v4925
    %4932 = vst.msk [vmem:[#allocation5 + $0x10] sm:$0xf] %vm4930, %v4927
    %4935 = vrot.lane.b32.xlu0 %v4882, 96
    %v4936 = vpop.permute.xlu0 %4935
    %4937 = vrot.lane.b32.xlu0 %v4883, 96
    %v4938 = vpop.permute.xlu0 %4937
    %vm4941 = vcmask 1027840
    %4942 = vst.msk [vmem:[#allocation5] sm:$0xf] %vm4941, %v4936
    %4943 = vst.msk [vmem:[#allocation5 + $0x10] sm:$0xf] %vm4941, %v4938
    %4944 = vst.msk [vmem:[#allocation5 + $0x4] sm:$0xf] %vm4908, %v4884
    %4945 = vst.msk [vmem:[#allocation5 + $0x14] sm:$0xf] %vm4908, %v4885
    %4948 = vrot.lane.b32.xlu0 %v4886, 32
    %v4949 = vpop.permute.xlu0 %4948
    %4950 = vrot.lane.b32.xlu0 %v4887, 32
    %v4951 = vpop.permute.xlu0 %4950
    %4954 = vst.msk [vmem:[#allocation5 + $0x4] sm:$0xf] %vm4919, %v4949
    %4955 = vst.msk [vmem:[#allocation5 + $0x14] sm:$0xf] %vm4919, %v4951
    %4958 = vrot.lane.b32.xlu0 %v4888, 64
    %v4959 = vpop.permute.xlu0 %4958
    %4960 = vrot.lane.b32.xlu0 %v4889, 64
    %v4961 = vpop.permute.xlu0 %4960
    %4964 = vst.msk [vmem:[#allocation5 + $0x4] sm:$0xf] %vm4930, %v4959
    %4965 = vst.msk [vmem:[#allocation5 + $0x14] sm:$0xf] %vm4930, %v4961
    %4968 = vrot.lane.b32.xlu0 %v4890, 96
    %v4969 = vpop.permute.xlu0 %4968
    %4970 = vrot.lane.b32.xlu0 %v4891, 96
    %v4971 = vpop.permute.xlu0 %4970
    %4974 = vst.msk [vmem:[#allocation5 + $0x4] sm:$0xf] %vm4941, %v4969
    %4975 = vst.msk [vmem:[#allocation5 + $0x14] sm:$0xf] %vm4941, %v4971
    %4976 = vst.msk [vmem:[#allocation5 + $0x8] sm:$0xf] %vm4908, %v4892
    %4977 = vst.msk [vmem:[#allocation5 + $0x18] sm:$0xf] %vm4908, %v4893
    %4980 = vrot.lane.b32.xlu0 %v4894, 32
    %v4981 = vpop.permute.xlu0 %4980
    %4982 = vrot.lane.b32.xlu0 %v4895, 32
    %v4983 = vpop.permute.xlu0 %4982
    %4986 = vst.msk [vmem:[#allocation5 + $0x8] sm:$0xf] %vm4919, %v4981
    %4987 = vst.msk [vmem:[#allocation5 + $0x18] sm:$0xf] %vm4919, %v4983
    %4990 = vrot.lane.b32.xlu0 %v4896, 64
    %v4991 = vpop.permute.xlu0 %4990
    %4992 = vrot.lane.b32.xlu0 %v4897, 64
    %v4993 = vpop.permute.xlu0 %4992
    %4996 = vst.msk [vmem:[#allocation5 + $0x8] sm:$0xf] %vm4930, %v4991
    %4997 = vst.msk [vmem:[#allocation5 + $0x18] sm:$0xf] %vm4930, %v4993
    %5000 = vrot.lane.b32.xlu0 %v4898, 96
    %v5001 = vpop.permute.xlu0 %5000
    %5002 = vrot.lane.b32.xlu0 %v4899, 96
    %v5003 = vpop.permute.xlu0 %5002
    %5006 = vst.msk [vmem:[#allocation5 + $0x8] sm:$0xf] %vm4941, %v5001
    %5007 = vst.msk [vmem:[#allocation5 + $0x18] sm:$0xf] %vm4941, %v5003
    %5008 = vst.msk [vmem:[#allocation5 + $0xc] sm:$0xf] %vm4908, %v4900
    %5009 = vst.msk [vmem:[#allocation5 + $0x1c] sm:$0xf] %vm4908, %v4901
    %5012 = vrot.lane.b32.xlu0 %v4902, 32
    %v5013 = vpop.permute.xlu0 %5012
    %5014 = vrot.lane.b32.xlu0 %v4903, 32
    %v5015 = vpop.permute.xlu0 %5014
    %5018 = vst.msk [vmem:[#allocation5 + $0xc] sm:$0xf] %vm4919, %v5013
    %5019 = vst.msk [vmem:[#allocation5 + $0x1c] sm:$0xf] %vm4919, %v5015
    %5022 = vrot.lane.b32.xlu0 %v4904, 64
    %v5023 = vpop.permute.xlu0 %5022
    %5024 = vrot.lane.b32.xlu0 %v4905, 64
    %v5025 = vpop.permute.xlu0 %5024
    %5028 = vst.msk [vmem:[#allocation5 + $0xc] sm:$0xf] %vm4930, %v5023
    %5029 = vst.msk [vmem:[#allocation5 + $0x1c] sm:$0xf] %vm4930, %v5025
    %5032 = vrot.lane.b32.xlu0 %v4906, 96
    %v5033 = vpop.permute.xlu0 %5032
    %5034 = vrot.lane.b32.xlu0 %v4907, 96
    %v5035 = vpop.permute.xlu0 %5034
    %5038 = vst.msk [vmem:[#allocation5 + $0xc] sm:$0xf] %vm4941, %v5033
    %5039 = vst.msk [vmem:[#allocation5 + $0x1c] sm:$0xf] %vm4941, %v5035
    %v5040 = vld [vmem:[#allocation5] sm:$0xff]
    %v5041 = vld [vmem:[#allocation5 + $0x8] sm:$0xff]
    %v5042 = vld [vmem:[#allocation5 + $0x10] sm:$0xff]
    %v5043 = vld [vmem:[#allocation5 + $0x18] sm:$0xff]
    %v5044 = vld [vmem:[%s10] sm:$0xff]
    %v5045 = vld [vmem:[%s10 + $0x8] sm:$0xff]
    %v5046 = vld [vmem:[%s10 + $0x10] sm:$0xff]
    %v5047 = vld [vmem:[%s10 + $0x18] sm:$0xff]
    %v5048 = vld [vmem:[%s10 + $0x20] sm:$0xff]
    %v5049 = vld [vmem:[%s10 + $0x28] sm:$0xff]
    %v5050 = vld [vmem:[%s10 + $0x30] sm:$0xff]
    %v5051 = vld [vmem:[%s10 + $0x38] sm:$0xff]
    %v5052 = vld [vmem:[%s10 + $0x40] sm:$0xff]
    %v5053 = vld [vmem:[%s10 + $0x48] sm:$0xff]
    %v5054 = vld [vmem:[%s10 + $0x50] sm:$0xff]
    %v5055 = vld [vmem:[%s10 + $0x58] sm:$0xff]
    %v5056 = vld [vmem:[%s10 + $0x60] sm:$0xff]
    %v5057 = vld [vmem:[%s10 + $0x68] sm:$0xff]
    %v5058 = vld [vmem:[%s10 + $0x70] sm:$0xff]
    %v5059 = vld [vmem:[%s10 + $0x78] sm:$0xff]
    %v5060 = vld [vmem:[%s10 + $0x80] sm:$0xff]
    %v5061 = vld [vmem:[%s10 + $0x88] sm:$0xff]
    %v5062 = vld [vmem:[%s10 + $0x90] sm:$0xff]
    %v5063 = vld [vmem:[%s10 + $0x98] sm:$0xff]
    %v5064 = vld [vmem:[%s10 + $0xa0] sm:$0xff]
    %v5065 = vld [vmem:[%s10 + $0xa8] sm:$0xff]
    %v5066 = vld [vmem:[%s10 + $0xb0] sm:$0xff]
    %v5067 = vld [vmem:[%s10 + $0xb8] sm:$0xff]
    %v5068 = vld [vmem:[%s10 + $0xc0] sm:$0xff]
    %v5069 = vld [vmem:[%s10 + $0xc8] sm:$0xff]
    %v5070 = vld [vmem:[%s10 + $0xd0] sm:$0xff]
    %v5071 = vld [vmem:[%s10 + $0xd8] sm:$0xff]
    %v5072 = vld [vmem:[%s10 + $0xe0] sm:$0xff]
    %v5073 = vld [vmem:[%s10 + $0xe8] sm:$0xff]
    %v5074 = vld [vmem:[%s10 + $0xf0] sm:$0xff]
    %v5075 = vld [vmem:[%s10 + $0xf8] sm:$0xff]
    %v5076 = vld [vmem:[%s10 + $0x100] sm:$0xff]
    %v5077 = vld [vmem:[%s10 + $0x108] sm:$0xff]
    %v5078 = vld [vmem:[%s10 + $0x110] sm:$0xff]
    %v5079 = vld [vmem:[%s10 + $0x118] sm:$0xff]
    %v5080 = vld [vmem:[%s10 + $0x120] sm:$0xff]
    %v5081 = vld [vmem:[%s10 + $0x128] sm:$0xff]
    %v5082 = vld [vmem:[%s10 + $0x130] sm:$0xff]
    %v5083 = vld [vmem:[%s10 + $0x138] sm:$0xff]
    %v5084 = vld [vmem:[%s10 + $0x140] sm:$0xff]
    %v5085 = vld [vmem:[%s10 + $0x148] sm:$0xff]
    %v5086 = vld [vmem:[%s10 + $0x150] sm:$0xff]
    %v5087 = vld [vmem:[%s10 + $0x158] sm:$0xff]
    %v5088 = vld [vmem:[%s10 + $0x160] sm:$0xff]
    %v5089 = vld [vmem:[%s10 + $0x168] sm:$0xff]
    %v5090 = vld [vmem:[%s10 + $0x170] sm:$0xff]
    %v5091 = vld [vmem:[%s10 + $0x178] sm:$0xff]
    %v5092 = vld [vmem:[%s10 + $0x180] sm:$0xff]
    %v5093 = vld [vmem:[%s10 + $0x188] sm:$0xff]
    %v5094 = vld [vmem:[%s10 + $0x190] sm:$0xff]
    %v5095 = vld [vmem:[%s10 + $0x198] sm:$0xff]
    %v5096 = vld [vmem:[%s10 + $0x1a0] sm:$0xff]
    %v5097 = vld [vmem:[%s10 + $0x1a8] sm:$0xff]
    %v5098 = vld [vmem:[%s10 + $0x1b0] sm:$0xff]
    %v5099 = vld [vmem:[%s10 + $0x1b8] sm:$0xff]
    %v5100 = vld [vmem:[%s10 + $0x1c0] sm:$0xff]
    %v5101 = vld [vmem:[%s10 + $0x1c8] sm:$0xff]
    %v5102 = vld [vmem:[%s10 + $0x1d0] sm:$0xff]
    %v5103 = vld [vmem:[%s10 + $0x1d8] sm:$0xff]
    %v5104 = vld [vmem:[%s10 + $0x1e0] sm:$0xff]
    %v5105 = vld [vmem:[%s10 + $0x1e8] sm:$0xff]
    %v5106 = vld [vmem:[%s10 + $0x1f0] sm:$0xff]
    %v5107 = vld [vmem:[%s10 + $0x1f8] sm:$0xff]
    %v5108 = vld [vmem:[%s11] sm:$0x3]
    %v5110 = vperm.slane %v5108, 0
    %v5111 = vperm.slane %v5108, 1
    %v5118 = vunpack.c.l.b16 %v5040
    %v5119 = vunpack.c.h.b16 %v5040
    %v5120 = vunpack.c.l.b16 %v5041
    %v5121 = vunpack.c.h.b16 %v5041
    %v5122 = vunpack.c.l.b16 %v5042
    %v5123 = vunpack.c.h.b16 %v5042
    %v5124 = vunpack.c.l.b16 %v5043
    %v5125 = vunpack.c.h.b16 %v5043
    %v5126 = vpack.c.b16 %v5122, %v5118
    %v5127 = vpack.c.b16 %v5123, %v5119
    %v5128 = vpack.c.b16 %v5124, %v5120
    %v5129 = vpack.c.b16 %v5125, %v5121
    %v5198 = vunpack.c.l.b16 %v5044
    %v5199 = vunpack.c.h.b16 %v5044
    %v5200 = vunpack.c.l.b16 %v5045
    %v5201 = vunpack.c.h.b16 %v5045
    %v5202 = vunpack.c.l.b16 %v5046
    %v5203 = vunpack.c.h.b16 %v5046
    %v5204 = vunpack.c.l.b16 %v5047
    %v5205 = vunpack.c.h.b16 %v5047
    %v5206 = vunpack.c.l.b16 %v5048
    %v5207 = vunpack.c.h.b16 %v5048
    %v5208 = vunpack.c.l.b16 %v5049
    %v5209 = vunpack.c.h.b16 %v5049
    %v5210 = vunpack.c.l.b16 %v5050
    %v5211 = vunpack.c.h.b16 %v5050
    %v5212 = vunpack.c.l.b16 %v5051
    %v5213 = vunpack.c.h.b16 %v5051
    %v5214 = vunpack.c.l.b16 %v5052
    %v5215 = vunpack.c.h.b16 %v5052
    %v5216 = vunpack.c.l.b16 %v5053
    %v5217 = vunpack.c.h.b16 %v5053
    %v5218 = vunpack.c.l.b16 %v5054
    %v5219 = vunpack.c.h.b16 %v5054
    %v5220 = vunpack.c.l.b16 %v5055
    %v5221 = vunpack.c.h.b16 %v5055
    %v5222 = vunpack.c.l.b16 %v5056
    %v5223 = vunpack.c.h.b16 %v5056
    %v5224 = vunpack.c.l.b16 %v5057
    %v5225 = vunpack.c.h.b16 %v5057
    %v5226 = vunpack.c.l.b16 %v5058
    %v5227 = vunpack.c.h.b16 %v5058
    %v5228 = vunpack.c.l.b16 %v5059
    %v5229 = vunpack.c.h.b16 %v5059
    %v5230 = vunpack.c.l.b16 %v5060
    %v5231 = vunpack.c.h.b16 %v5060
    %v5232 = vunpack.c.l.b16 %v5061
    %v5233 = vunpack.c.h.b16 %v5061
    %v5234 = vunpack.c.l.b16 %v5062
    %v5235 = vunpack.c.h.b16 %v5062
    %v5236 = vunpack.c.l.b16 %v5063
    %v5237 = vunpack.c.h.b16 %v5063
    %v5238 = vunpack.c.l.b16 %v5064
    %v5239 = vunpack.c.h.b16 %v5064
    %v5240 = vunpack.c.l.b16 %v5065
    %v5241 = vunpack.c.h.b16 %v5065
    %v5242 = vunpack.c.l.b16 %v5066
    %v5243 = vunpack.c.h.b16 %v5066
    %v5244 = vunpack.c.l.b16 %v5067
    %v5245 = vunpack.c.h.b16 %v5067
    %v5246 = vunpack.c.l.b16 %v5068
    %v5247 = vunpack.c.h.b16 %v5068
    %v5248 = vunpack.c.l.b16 %v5069
    %v5249 = vunpack.c.h.b16 %v5069
    %v5250 = vunpack.c.l.b16 %v5070
    %v5251 = vunpack.c.h.b16 %v5070
    %v5252 = vunpack.c.l.b16 %v5071
    %v5253 = vunpack.c.h.b16 %v5071
    %v5254 = vunpack.c.l.b16 %v5072
    %v5255 = vunpack.c.h.b16 %v5072
    %v5256 = vunpack.c.l.b16 %v5073
    %v5257 = vunpack.c.h.b16 %v5073
    %v5258 = vunpack.c.l.b16 %v5074
    %v5259 = vunpack.c.h.b16 %v5074
    %v5260 = vunpack.c.l.b16 %v5075
    %v5261 = vunpack.c.h.b16 %v5075
    %v5262 = vunpack.c.l.b16 %v5076
    %v5263 = vunpack.c.h.b16 %v5076
    %v5264 = vunpack.c.l.b16 %v5077
    %v5265 = vunpack.c.h.b16 %v5077
    %v5266 = vunpack.c.l.b16 %v5078
    %v5267 = vunpack.c.h.b16 %v5078
    %v5268 = vunpack.c.l.b16 %v5079
    %v5269 = vunpack.c.h.b16 %v5079
    %v5270 = vunpack.c.l.b16 %v5080
    %v5271 = vunpack.c.h.b16 %v5080
    %v5272 = vunpack.c.l.b16 %v5081
    %v5273 = vunpack.c.h.b16 %v5081
    %v5274 = vunpack.c.l.b16 %v5082
    %v5275 = vunpack.c.h.b16 %v5082
    %v5276 = vunpack.c.l.b16 %v5083
    %v5277 = vunpack.c.h.b16 %v5083
    %v5278 = vunpack.c.l.b16 %v5084
    %v5279 = vunpack.c.h.b16 %v5084
    %v5280 = vunpack.c.l.b16 %v5085
    %v5281 = vunpack.c.h.b16 %v5085
    %v5282 = vunpack.c.l.b16 %v5086
    %v5283 = vunpack.c.h.b16 %v5086
    %v5284 = vunpack.c.l.b16 %v5087
    %v5285 = vunpack.c.h.b16 %v5087
    %v5286 = vunpack.c.l.b16 %v5088
    %v5287 = vunpack.c.h.b16 %v5088
    %v5288 = vunpack.c.l.b16 %v5089
    %v5289 = vunpack.c.h.b16 %v5089
    %v5290 = vunpack.c.l.b16 %v5090
    %v5291 = vunpack.c.h.b16 %v5090
    %v5292 = vunpack.c.l.b16 %v5091
    %v5293 = vunpack.c.h.b16 %v5091
    %v5294 = vunpack.c.l.b16 %v5092
    %v5295 = vunpack.c.h.b16 %v5092
    %v5296 = vunpack.c.l.b16 %v5093
    %v5297 = vunpack.c.h.b16 %v5093
    %v5298 = vunpack.c.l.b16 %v5094
    %v5299 = vunpack.c.h.b16 %v5094
    %v5300 = vunpack.c.l.b16 %v5095
    %v5301 = vunpack.c.h.b16 %v5095
    %v5302 = vunpack.c.l.b16 %v5096
    %v5303 = vunpack.c.h.b16 %v5096
    %v5304 = vunpack.c.l.b16 %v5097
    %v5305 = vunpack.c.h.b16 %v5097
    %v5306 = vunpack.c.l.b16 %v5098
    %v5307 = vunpack.c.h.b16 %v5098
    %v5308 = vunpack.c.l.b16 %v5099
    %v5309 = vunpack.c.h.b16 %v5099
    %v5310 = vunpack.c.l.b16 %v5100
    %v5311 = vunpack.c.h.b16 %v5100
    %v5312 = vunpack.c.l.b16 %v5101
    %v5313 = vunpack.c.h.b16 %v5101
    %v5314 = vunpack.c.l.b16 %v5102
    %v5315 = vunpack.c.h.b16 %v5102
    %v5316 = vunpack.c.l.b16 %v5103
    %v5317 = vunpack.c.h.b16 %v5103
    %v5318 = vunpack.c.l.b16 %v5104
    %v5319 = vunpack.c.h.b16 %v5104
    %v5320 = vunpack.c.l.b16 %v5105
    %v5321 = vunpack.c.h.b16 %v5105
    %v5322 = vunpack.c.l.b16 %v5106
    %v5323 = vunpack.c.h.b16 %v5106
    %v5324 = vunpack.c.l.b16 %v5107
    %v5325 = vunpack.c.h.b16 %v5107
    %v5326 = vpack.c.b16 %v5200, %v5198
    %v5327 = vpack.c.b16 %v5201, %v5199
    %v5328 = vpack.c.b16 %v5204, %v5202
    %v5329 = vpack.c.b16 %v5205, %v5203
    %v5330 = vpack.c.b16 %v5208, %v5206
    %v5331 = vpack.c.b16 %v5209, %v5207
    %v5332 = vpack.c.b16 %v5212, %v5210
    %v5333 = vpack.c.b16 %v5213, %v5211
    %v5334 = vpack.c.b16 %v5216, %v5214
    %v5335 = vpack.c.b16 %v5217, %v5215
    %v5336 = vpack.c.b16 %v5220, %v5218
    %v5337 = vpack.c.b16 %v5221, %v5219
    %v5338 = vpack.c.b16 %v5224, %v5222
    %v5339 = vpack.c.b16 %v5225, %v5223
    %v5340 = vpack.c.b16 %v5228, %v5226
    %v5341 = vpack.c.b16 %v5229, %v5227
    %v5342 = vpack.c.b16 %v5232, %v5230
    %v5343 = vpack.c.b16 %v5233, %v5231
    %v5344 = vpack.c.b16 %v5236, %v5234
    %v5345 = vpack.c.b16 %v5237, %v5235
    %v5346 = vpack.c.b16 %v5240, %v5238
    %v5347 = vpack.c.b16 %v5241, %v5239
    %v5348 = vpack.c.b16 %v5244, %v5242
    %v5349 = vpack.c.b16 %v5245, %v5243
    %v5350 = vpack.c.b16 %v5248, %v5246
    %v5351 = vpack.c.b16 %v5249, %v5247
    %v5352 = vpack.c.b16 %v5252, %v5250
    %v5353 = vpack.c.b16 %v5253, %v5251
    %v5354 = vpack.c.b16 %v5256, %v5254
    %v5355 = vpack.c.b16 %v5257, %v5255
    %v5356 = vpack.c.b16 %v5260, %v5258
    %v5357 = vpack.c.b16 %v5261, %v5259
    %v5358 = vpack.c.b16 %v5264, %v5262
    %v5359 = vpack.c.b16 %v5265, %v5263
    %v5360 = vpack.c.b16 %v5268, %v5266
    %v5361 = vpack.c.b16 %v5269, %v5267
    %v5362 = vpack.c.b16 %v5272, %v5270
    %v5363 = vpack.c.b16 %v5273, %v5271
    %v5364 = vpack.c.b16 %v5276, %v5274
    %v5365 = vpack.c.b16 %v5277, %v5275
    %v5366 = vpack.c.b16 %v5280, %v5278
    %v5367 = vpack.c.b16 %v5281, %v5279
    %v5368 = vpack.c.b16 %v5284, %v5282
    %v5369 = vpack.c.b16 %v5285, %v5283
    %v5370 = vpack.c.b16 %v5288, %v5286
    %v5371 = vpack.c.b16 %v5289, %v5287
    %v5372 = vpack.c.b16 %v5292, %v5290
    %v5373 = vpack.c.b16 %v5293, %v5291
    %v5374 = vpack.c.b16 %v5296, %v5294
    %v5375 = vpack.c.b16 %v5297, %v5295
    %v5376 = vpack.c.b16 %v5300, %v5298
    %v5377 = vpack.c.b16 %v5301, %v5299
    %v5378 = vpack.c.b16 %v5304, %v5302
    %v5379 = vpack.c.b16 %v5305, %v5303
    %v5380 = vpack.c.b16 %v5308, %v5306
    %v5381 = vpack.c.b16 %v5309, %v5307
    %v5382 = vpack.c.b16 %v5312, %v5310
    %v5383 = vpack.c.b16 %v5313, %v5311
    %v5384 = vpack.c.b16 %v5316, %v5314
    %v5385 = vpack.c.b16 %v5317, %v5315
    %v5386 = vpack.c.b16 %v5320, %v5318
    %v5387 = vpack.c.b16 %v5321, %v5319
    %v5388 = vpack.c.b16 %v5324, %v5322
    %v5389 = vpack.c.b16 %v5325, %v5323
    %5454 = vmatpush.bf16.msra.mxu0 %v5340
    %5455 = vmatpush.bf16.msra.mxu0 %v5338
    %5456 = vmatpush.bf16.msra.mxu0 %v5336
    %5457 = vmatpush.bf16.msra.mxu0 %v5334
    %5458 = vmatpush.bf16.msra.mxu0 %v5332
    %5459 = vmatpush.bf16.msra.mxu0 %v5330
    %5460 = vmatpush.bf16.msra.mxu0 %v5328
    %5461 = vmatpush.bf16.msra.mxu0 %v5326
    %5462 = vmatmul.bf16.gmra.mxu0 %v5126
    %v5463 = vpop.f32.mrf.mxu0
    %v5464 = vadd.f32 %v5110, %v5463
    %v5465 = vpop.f32.mrf.mxu0
    %v5466 = vadd.f32 %v5110, %v5465
    %5467 = vdwg.mxu0
    %5468 = vmatpush.bf16.msra.mxu0 %v5356
    %5469 = vmatpush.bf16.msra.mxu0 %v5354
    %5470 = vmatpush.bf16.msra.mxu0 %v5352
    %5471 = vmatpush.bf16.msra.mxu0 %v5350
    %5472 = vmatpush.bf16.msra.mxu0 %v5348
    %5473 = vmatpush.bf16.msra.mxu0 %v5346
    %5474 = vmatpush.bf16.msra.mxu0 %v5344
    %5475 = vmatpush.bf16.msra.mxu0 %v5342
    %5476 = vmatmul.bf16.gmra.mxu0 %v5127
    %v5477 = vpop.f32.mrf.mxu0
    %v5478 = vadd.f32 %v5464, %v5477
    %v5479 = vpop.f32.mrf.mxu0
    %v5480 = vadd.f32 %v5466, %v5479
    %5481 = vdwg.mxu0
    %5482 = vmatpush.bf16.msra.mxu0 %v5372
    %5483 = vmatpush.bf16.msra.mxu0 %v5370
    %5484 = vmatpush.bf16.msra.mxu0 %v5368
    %5485 = vmatpush.bf16.msra.mxu0 %v5366
    %5486 = vmatpush.bf16.msra.mxu0 %v5364
    %5487 = vmatpush.bf16.msra.mxu0 %v5362
    %5488 = vmatpush.bf16.msra.mxu0 %v5360
    %5489 = vmatpush.bf16.msra.mxu0 %v5358
    %5490 = vmatmul.bf16.gmra.mxu0 %v5128
    %v5491 = vpop.f32.mrf.mxu0
    %v5492 = vadd.f32 %v5478, %v5491
    %v5493 = vpop.f32.mrf.mxu0
    %v5494 = vadd.f32 %v5480, %v5493
    %5495 = vdwg.mxu0
    %5496 = vmatpush.bf16.msra.mxu0 %v5388
    %5497 = vmatpush.bf16.msra.mxu0 %v5386
    %5498 = vmatpush.bf16.msra.mxu0 %v5384
    %5499 = vmatpush.bf16.msra.mxu0 %v5382
    %5500 = vmatpush.bf16.msra.mxu0 %v5380
    %5501 = vmatpush.bf16.msra.mxu0 %v5378
    %5502 = vmatpush.bf16.msra.mxu0 %v5376
    %5503 = vmatpush.bf16.msra.mxu0 %v5374
    %5504 = vmatmul.bf16.gmra.mxu0 %v5129
    %v5505 = vpop.f32.mrf.mxu0
    %v5506 = vadd.f32 %v5492, %v5505
    %v5507 = vpop.f32.mrf.mxu0
    %v5508 = vadd.f32 %v5494, %v5507
    %5509 = vdwg.mxu0
    %5510 = vmatpush.bf16.msra.mxu0 %v5341
    %5511 = vmatpush.bf16.msra.mxu0 %v5339
    %5512 = vmatpush.bf16.msra.mxu0 %v5337
    %5513 = vmatpush.bf16.msra.mxu0 %v5335
    %5514 = vmatpush.bf16.msra.mxu0 %v5333
    %5515 = vmatpush.bf16.msra.mxu0 %v5331
    %5516 = vmatpush.bf16.msra.mxu0 %v5329
    %5517 = vmatpush.bf16.msra.mxu0 %v5327
    %5518 = vmatmul.bf16.gmra.mxu0 %v5126
    %v5519 = vpop.f32.mrf.mxu0
    %v5520 = vadd.f32 %v5111, %v5519
    %v5521 = vpop.f32.mrf.mxu0
    %v5522 = vadd.f32 %v5111, %v5521
    %5523 = vdwg.mxu0
    %5524 = vmatpush.bf16.msra.mxu0 %v5357
    %5525 = vmatpush.bf16.msra.mxu0 %v5355
    %5526 = vmatpush.bf16.msra.mxu0 %v5353
    %5527 = vmatpush.bf16.msra.mxu0 %v5351
    %5528 = vmatpush.bf16.msra.mxu0 %v5349
    %5529 = vmatpush.bf16.msra.mxu0 %v5347
    %5530 = vmatpush.bf16.msra.mxu0 %v5345
    %5531 = vmatpush.bf16.msra.mxu0 %v5343
    %5532 = vmatmul.bf16.gmra.mxu0 %v5127
    %v5533 = vpop.f32.mrf.mxu0
    %v5534 = vadd.f32 %v5520, %v5533
    %v5535 = vpop.f32.mrf.mxu0
    %v5536 = vadd.f32 %v5522, %v5535
    %5537 = vdwg.mxu0
    %5538 = vmatpush.bf16.msra.mxu0 %v5373
    %5539 = vmatpush.bf16.msra.mxu0 %v5371
    %5540 = vmatpush.bf16.msra.mxu0 %v5369
    %5541 = vmatpush.bf16.msra.mxu0 %v5367
    %5542 = vmatpush.bf16.msra.mxu0 %v5365
    %5543 = vmatpush.bf16.msra.mxu0 %v5363
    %5544 = vmatpush.bf16.msra.mxu0 %v5361
    %5545 = vmatpush.bf16.msra.mxu0 %v5359
    %5546 = vmatmul.bf16.gmra.mxu0 %v5128
    %v5547 = vpop.f32.mrf.mxu0
    %v5548 = vadd.f32 %v5534, %v5547
    %v5549 = vpop.f32.mrf.mxu0
    %v5550 = vadd.f32 %v5536, %v5549
    %5551 = vdwg.mxu0
    %5552 = vmatpush.bf16.msra.mxu0 %v5389
    %5553 = vmatpush.bf16.msra.mxu0 %v5387
    %5554 = vmatpush.bf16.msra.mxu0 %v5385
    %5555 = vmatpush.bf16.msra.mxu0 %v5383
    %5556 = vmatpush.bf16.msra.mxu0 %v5381
    %5557 = vmatpush.bf16.msra.mxu0 %v5379
    %5558 = vmatpush.bf16.msra.mxu0 %v5377
    %5559 = vmatpush.bf16.msra.mxu0 %v5375
    %5560 = vmatmul.bf16.gmra.mxu0 %v5129
    %v5561 = vpop.f32.mrf.mxu0
    %v5562 = vadd.f32 %v5548, %v5561
    %v5563 = vpop.f32.mrf.mxu0
    %v5564 = vadd.f32 %v5550, %v5563
    %5565 = vdwg.mxu0
    %v5566 = vtanh.pop %v5506
    %v5567 = vtanh.pop %v5562
    %v5568 = vtanh.pop %v5508
    %v5569 = vtanh.pop %v5564
    %v5570 = vpack.c.bf16 %v5568, %v5566
    %v5571 = vpack.c.bf16 %v5569, %v5567
    %v5572 = vld [vmem:[%s12] sm:$0xf]
    %v5573 = vld [vmem:[%s12 + $0x4] sm:$0xf]
    %v5574 = vld [vmem:[%s12 + $0x8] sm:$0xf]
    %v5575 = vld [vmem:[%s12 + $0xc] sm:$0xf]
    %v5576 = vld [vmem:[%s12 + $0x10] sm:$0xf]
    %v5577 = vld [vmem:[%s12 + $0x14] sm:$0xf]
    %v5578 = vld [vmem:[%s12 + $0x18] sm:$0xf]
    %v5579 = vld [vmem:[%s12 + $0x1c] sm:$0xf]
    %v5580 = vld [vmem:[%s12 + $0x20] sm:$0xf]
    %v5581 = vld [vmem:[%s12 + $0x24] sm:$0xf]
    %v5582 = vld [vmem:[%s12 + $0x28] sm:$0xf]
    %v5583 = vld [vmem:[%s12 + $0x2c] sm:$0xf]
    %v5584 = vld [vmem:[%s12 + $0x30] sm:$0xf]
    %v5585 = vld [vmem:[%s12 + $0x34] sm:$0xf]
    %v5586 = vld [vmem:[%s12 + $0x38] sm:$0xf]
    %v5587 = vld [vmem:[%s12 + $0x3c] sm:$0xf]
    %v5588 = vld [vmem:[%s12 + $0x40] sm:$0xf]
    %v5589 = vld [vmem:[%s12 + $0x44] sm:$0xf]
    %v5590 = vld [vmem:[%s12 + $0x48] sm:$0xf]
    %v5591 = vld [vmem:[%s12 + $0x4c] sm:$0xf]
    %v5592 = vld [vmem:[%s12 + $0x50] sm:$0xf]
    %v5593 = vld [vmem:[%s12 + $0x54] sm:$0xf]
    %v5594 = vld [vmem:[%s12 + $0x58] sm:$0xf]
    %v5595 = vld [vmem:[%s12 + $0x5c] sm:$0xf]
    %v5596 = vld [vmem:[%s12 + $0x60] sm:$0xf]
    %v5597 = vld [vmem:[%s12 + $0x64] sm:$0xf]
    %v5598 = vld [vmem:[%s12 + $0x68] sm:$0xf]
    %v5599 = vld [vmem:[%s12 + $0x6c] sm:$0xf]
    %v5600 = vld [vmem:[%s12 + $0x70] sm:$0xf]
    %v5601 = vld [vmem:[%s12 + $0x74] sm:$0xf]
    %v5602 = vld [vmem:[%s12 + $0x78] sm:$0xf]
    %v5603 = vld [vmem:[%s12 + $0x7c] sm:$0xf]
    %v5604 = vld [vmem:[%s13] sm:$0x1]
    %v5606 = vperm.slane %v5604, 0
    %v5640 = vunpack.c.l.b16 %v5572
    %v5641 = vunpack.c.l.b16 %v5573
    %v5642 = vunpack.c.l.b16 %v5574
    %v5643 = vunpack.c.l.b16 %v5575
    %v5644 = vunpack.c.l.b16 %v5576
    %v5645 = vunpack.c.l.b16 %v5577
    %v5646 = vunpack.c.l.b16 %v5578
    %v5647 = vunpack.c.l.b16 %v5579
    %v5648 = vunpack.c.l.b16 %v5580
    %v5649 = vunpack.c.l.b16 %v5581
    %v5650 = vunpack.c.l.b16 %v5582
    %v5651 = vunpack.c.l.b16 %v5583
    %v5652 = vunpack.c.l.b16 %v5584
    %v5653 = vunpack.c.l.b16 %v5585
    %v5654 = vunpack.c.l.b16 %v5586
    %v5655 = vunpack.c.l.b16 %v5587
    %v5656 = vunpack.c.l.b16 %v5588
    %v5657 = vunpack.c.l.b16 %v5589
    %v5658 = vunpack.c.l.b16 %v5590
    %v5659 = vunpack.c.l.b16 %v5591
    %v5660 = vunpack.c.l.b16 %v5592
    %v5661 = vunpack.c.l.b16 %v5593
    %v5662 = vunpack.c.l.b16 %v5594
    %v5663 = vunpack.c.l.b16 %v5595
    %v5664 = vunpack.c.l.b16 %v5596
    %v5665 = vunpack.c.l.b16 %v5597
    %v5666 = vunpack.c.l.b16 %v5598
    %v5667 = vunpack.c.l.b16 %v5599
    %v5668 = vunpack.c.l.b16 %v5600
    %v5669 = vunpack.c.l.b16 %v5601
    %v5670 = vunpack.c.l.b16 %v5602
    %v5671 = vunpack.c.l.b16 %v5603
    %v5672 = vpack.c.b16 %v5641, %v5640
    %v5673 = vpack.c.b16 %v5643, %v5642
    %v5674 = vpack.c.b16 %v5645, %v5644
    %v5675 = vpack.c.b16 %v5647, %v5646
    %v5676 = vpack.c.b16 %v5649, %v5648
    %v5677 = vpack.c.b16 %v5651, %v5650
    %v5678 = vpack.c.b16 %v5653, %v5652
    %v5679 = vpack.c.b16 %v5655, %v5654
    %v5680 = vpack.c.b16 %v5657, %v5656
    %v5681 = vpack.c.b16 %v5659, %v5658
    %v5682 = vpack.c.b16 %v5661, %v5660
    %v5683 = vpack.c.b16 %v5663, %v5662
    %v5684 = vpack.c.b16 %v5665, %v5664
    %v5685 = vpack.c.b16 %v5667, %v5666
    %v5686 = vpack.c.b16 %v5669, %v5668
    %v5687 = vpack.c.b16 %v5671, %v5670
    %5704 = vmatpush.bf16.msra.mxu0 %v5679
    %5705 = vmatpush.bf16.msra.mxu0 %v5678
    %5706 = vmatpush.bf16.msra.mxu0 %v5677
    %5707 = vmatpush.bf16.msra.mxu0 %v5676
    %5708 = vmatpush.bf16.msra.mxu0 %v5675
    %5709 = vmatpush.bf16.msra.mxu0 %v5674
    %5710 = vmatpush.bf16.msra.mxu0 %v5673
    %5711 = vmatpush.bf16.msra.mxu0 %v5672
    %5712 = vmatmul.bf16.gmra.mxu0 %v5570
    %v5713 = vpop.f32.mrf.mxu0
    %v5714 = vadd.f32 %v5606, %v5713
    %v5715 = vpop.f32.mrf.mxu0
    %v5716 = vadd.f32 %v5606, %v5715
    %5717 = vdwg.mxu0
    %5718 = vmatpush.bf16.msra.mxu0 %v5687
    %5719 = vmatpush.bf16.msra.mxu0 %v5686
    %5720 = vmatpush.bf16.msra.mxu0 %v5685
    %5721 = vmatpush.bf16.msra.mxu0 %v5684
    %5722 = vmatpush.bf16.msra.mxu0 %v5683
    %5723 = vmatpush.bf16.msra.mxu0 %v5682
    %5724 = vmatpush.bf16.msra.mxu0 %v5681
    %5725 = vmatpush.bf16.msra.mxu0 %v5680
    %5726 = vmatmul.bf16.gmra.mxu0 %v5571
    %v5727 = vpop.f32.mrf.mxu0
    %v5728 = vadd.f32 %v5714, %v5727
    %v5729 = vpop.f32.mrf.mxu0
    %v5730 = vadd.f32 %v5716, %v5729
    %5731 = vdwg.mxu0
    %v5732 = vtanh.pop %v5728
    %v5733 = vtanh.pop %v5730
    %v5734 = vpack.c.bf16 %v5733, %v5732
    %v5735 = vld [vmem:[%s14] sm:$0xf]
    %v5736 = vld [vmem:[%s14 + $0x4] sm:$0xf]
    %v5737 = vld [vmem:[%s14 + $0x8] sm:$0xf]
    %v5738 = vld [vmem:[%s14 + $0xc] sm:$0xf]
    %v5739 = vld [vmem:[%s14 + $0x10] sm:$0xf]
    %v5740 = vld [vmem:[%s14 + $0x14] sm:$0xf]
    %v5741 = vld [vmem:[%s14 + $0x18] sm:$0xf]
    %v5742 = vld [vmem:[%s14 + $0x1c] sm:$0xf]
    %v5743 = vld [vmem:[%s14 + $0x20] sm:$0xf]
    %v5744 = vld [vmem:[%s14 + $0x24] sm:$0xf]
    %v5745 = vld [vmem:[%s14 + $0x28] sm:$0xf]
    %v5746 = vld [vmem:[%s14 + $0x2c] sm:$0xf]
    %v5747 = vld [vmem:[%s14 + $0x30] sm:$0xf]
    %v5748 = vld [vmem:[%s14 + $0x34] sm:$0xf]
    %v5749 = vld [vmem:[%s14 + $0x38] sm:$0xf]
    %v5750 = vld [vmem:[%s14 + $0x3c] sm:$0xf]
    %v5751 = vld [vmem:[%s15] sm:$0x1]
    %v5753 = vperm.slane %v5751, 0
    %v5771 = vunpack.c.l.b16 %v5735
    %v5772 = vunpack.c.l.b16 %v5736
    %v5773 = vunpack.c.l.b16 %v5737
    %v5774 = vunpack.c.l.b16 %v5738
    %v5775 = vunpack.c.l.b16 %v5739
    %v5776 = vunpack.c.l.b16 %v5740
    %v5777 = vunpack.c.l.b16 %v5741
    %v5778 = vunpack.c.l.b16 %v5742
    %v5779 = vunpack.c.l.b16 %v5743
    %v5780 = vunpack.c.l.b16 %v5744
    %v5781 = vunpack.c.l.b16 %v5745
    %v5782 = vunpack.c.l.b16 %v5746
    %v5783 = vunpack.c.l.b16 %v5747
    %v5784 = vunpack.c.l.b16 %v5748
    %v5785 = vunpack.c.l.b16 %v5749
    %v5786 = vunpack.c.l.b16 %v5750
    %v5787 = vpack.c.b16 %v5772, %v5771
    %v5788 = vpack.c.b16 %v5774, %v5773
    %v5789 = vpack.c.b16 %v5776, %v5775
    %v5790 = vpack.c.b16 %v5778, %v5777
    %v5791 = vpack.c.b16 %v5780, %v5779
    %v5792 = vpack.c.b16 %v5782, %v5781
    %v5793 = vpack.c.b16 %v5784, %v5783
    %v5794 = vpack.c.b16 %v5786, %v5785
    %5803 = vmatpush.bf16.msra.mxu0 %v5794
    %5804 = vmatpush.bf16.msra.mxu0 %v5793
    %5805 = vmatpush.bf16.msra.mxu0 %v5792
    %5806 = vmatpush.bf16.msra.mxu0 %v5791
    %5807 = vmatpush.bf16.msra.mxu0 %v5790
    %5808 = vmatpush.bf16.msra.mxu0 %v5789
    %5809 = vmatpush.bf16.msra.mxu0 %v5788
    %5810 = vmatpush.bf16.msra.mxu0 %v5787
    %5811 = vmatmul.bf16.gmra.mxu0 %v5734
    %v5812 = vpop.f32.mrf.mxu0
    %v5813 = vadd.f32 %v5753, %v5812
    %v5814 = vpop.f32.mrf.mxu0
    %v5815 = vadd.f32 %v5753, %v5814
    %5816 = vdwg.mxu0
    %v5817 = vtanh.pop %v5813
    %v5818 = vtanh.pop %v5815
    %v5819 = vpack.c.bf16 %v5818, %v5817
    %v5820 = vld [vmem:[%s16] sm:$0xf]
    %v5821 = vld [vmem:[%s16 + $0x4] sm:$0xf]
    %v5822 = vld [vmem:[%s16 + $0x8] sm:$0xf]
    %v5823 = vld [vmem:[%s16 + $0xc] sm:$0xf]
    %v5824 = vld [vmem:[%s16 + $0x10] sm:$0xf]
    %v5825 = vld [vmem:[%s16 + $0x14] sm:$0xf]
    %v5826 = vld [vmem:[%s16 + $0x18] sm:$0xf]
    %v5827 = vld [vmem:[%s16 + $0x1c] sm:$0xf]
    %v5828 = vld [vmem:[%s17] sm:$0x1]
    %v5830 = vperm.slane %v5828, 0
    %v5840 = vunpack.c.l.b16 %v5820
    %v5841 = vunpack.c.l.b16 %v5821
    %v5842 = vunpack.c.l.b16 %v5822
    %v5843 = vunpack.c.l.b16 %v5823
    %v5844 = vunpack.c.l.b16 %v5824
    %v5845 = vunpack.c.l.b16 %v5825
    %v5846 = vunpack.c.l.b16 %v5826
    %v5847 = vunpack.c.l.b16 %v5827
    %v5848 = vpack.c.b16 %v5841, %v5840
    %v5849 = vpack.c.b16 %v5843, %v5842
    %v5850 = vpack.c.b16 %v5845, %v5844
    %v5851 = vpack.c.b16 %v5847, %v5846
    %v5857 = vsel %vm1576, %v5819, 0
    %5859 = vmatpush.bf16.msra.mxu0 0
    %5860 = vmatpush.bf16.msra.mxu0 0
    %5861 = vmatpush.bf16.msra.mxu0 0
    %5862 = vmatpush.bf16.msra.mxu0 0
    %5863 = vmatpush.bf16.msra.mxu0 %v5851
    %5864 = vmatpush.bf16.msra.mxu0 %v5850
    %5865 = vmatpush.bf16.msra.mxu0 %v5849
    %5866 = vmatpush.bf16.msra.mxu0 %v5848
    %5867 = vmatmul.bf16.gmra.mxu0 %v5857
    %v5868 = vpop.f32.mrf.mxu0
    %v5869 = vadd.f32 %v5830, %v5868
    %v5870 = vpop.f32.mrf.mxu0
    %v5871 = vadd.f32 %v5830, %v5870
    %5872 = vdwg.mxu0
    %v5873 = vtanh.pop %v5869
    %v5874 = vtanh.pop %v5871
    %v5875 = vpack.c.bf16 %v5874, %v5873
    %v5876 = vld [vmem:[%s18] sm:$0xf]
    %v5877 = vld [vmem:[%s18 + $0x4] sm:$0xf]
    %v5878 = vld [vmem:[%s18 + $0x8] sm:$0xf]
    %v5879 = vld [vmem:[%s18 + $0xc] sm:$0xf]
    %v5880 = vld [vmem:[%s19] sm:$0x1]
    %v5882 = vperm.slane %v5880, 0
    %v5888 = vunpack.c.l.b16 %v5876
    %v5889 = vunpack.c.l.b16 %v5877
    %v5890 = vunpack.c.l.b16 %v5878
    %v5891 = vunpack.c.l.b16 %v5879
    %v5892 = vpack.c.b16 %v5889, %v5888
    %v5893 = vpack.c.b16 %v5891, %v5890
    %vm5896 = vcmask 261120
    %v5898 = vsel %vm5896, %v5875, 0
    %5900 = vmatpush.bf16.msra.mxu0 0
    %5901 = vmatpush.bf16.msra.mxu0 0
    %5902 = vmatpush.bf16.msra.mxu0 0
    %5903 = vmatpush.bf16.msra.mxu0 0
    %5904 = vmatpush.bf16.msra.mxu0 0
    %5905 = vmatpush.bf16.msra.mxu0 0
    %5906 = vmatpush.bf16.msra.mxu0 %v5893
    %5907 = vmatpush.bf16.msra.mxu0 %v5892
    %5908 = vmatmul.bf16.gmra.mxu0 %v5898
    %v5909 = vpop.f32.mrf.mxu0
    %v5910 = vadd.f32 %v5882, %v5909
    %v5911 = vpop.f32.mrf.mxu0
    %v5912 = vadd.f32 %v5882, %v5911
    %5913 = vdwg.mxu0
    %v5914 = vtanh.pop %v5910
    %v5915 = vtanh.pop %v5912
    %v5916 = vpack.c.bf16 %v5915, %v5914
    %v5917 = vld [vmem:[%s20] sm:$0xf]
    %v5918 = vld [vmem:[%s20 + $0x4] sm:$0xf]
    %v5919 = vld [vmem:[%s21] sm:$0x1]
    %v5921 = vperm.slane %v5919, 0
    %v5925 = vunpack.c.l.b16 %v5917
    %v5926 = vunpack.c.l.b16 %v5918
    %v5927 = vpack.c.b16 %v5926, %v5925
    %vm5929 = vcmask 130048
    %v5931 = vsel %vm5929, %v5916, 0
    %5933 = vmatpush.bf16.msra.mxu0 0
    %5934 = vmatpush.bf16.msra.mxu0 0
    %5935 = vmatpush.bf16.msra.mxu0 0
    %5936 = vmatpush.bf16.msra.mxu0 0
    %5937 = vmatpush.bf16.msra.mxu0 0
    %5938 = vmatpush.bf16.msra.mxu0 0
    %5939 = vmatpush.bf16.msra.mxu0 0
    %5940 = vmatpush.bf16.msra.mxu0 %v5927
    %5941 = vmatmul.bf16.gmra.mxu0 %v5931
    %v5942 = vpop.f32.mrf.mxu0
    %v5943 = vadd.f32 %v5921, %v5942
    %v5944 = vpop.f32.mrf.mxu0
    %v5945 = vadd.f32 %v5921, %v5944
    %5946 = vdwg.mxu0
    %vm5947 = vcmask 48128
    %v5948 = vsel %vm5947, %v5943, -inf
    %5949 = vmax.xlane.f32.xlu0 %v5948
    %v5950 = vpop.xlane.xlu0 %5949
    %v5951 = vsel %vm5947, %v5945, -inf
    %5952 = vmax.xlane.f32.xlu0 %v5951
    %v5953 = vpop.xlane.xlu0 %5952
    %v5954 = vsub.f32 %v5943, %v5950
    %v5955 = vsub.f32 %v5945, %v5953
    %v5956 = vmul.f32 %v5954, 1.442695
    %v5957 = vpow.pop %v5956
    %v5958 = vmul.f32 %v5955, 1.442695
    %v5959 = vpow.pop %v5958
    %v5960 = vsel %vm5947, %v5957, 0.0
    %5961 = vadd.xlane.f32.xlu0 %v5960
    %v5962 = vpop.xlane.xlu0 %5961
    %v5963 = vsel %vm5947, %v5959, 0.0
    %5964 = vadd.xlane.f32.xlu0 %v5963
    %v5965 = vpop.xlane.xlu0 %5964
    %v5966 = vrcp.pop %v5962
    %v5967 = vrcp.pop %v5965
    %v5968 = vmul.f32 %v5957, %v5966
    %v5969 = vmul.f32 %v5959, %v5967
    %5970 = vst.msk [vmem:[%s22] sm:$0xff] %vm5947, %v5968
    %5971 = vst.msk [vmem:[%s22 + $0x8] sm:$0xff] %vm5947, %v5969
    // Predicated region
    $region94: #{tpu_custom_call.1} parent=1 // pred_check
      _
    $region95: #{tpu_custom_call.1} parent=1 // pred_check_branch
      %5973 = sbr.rel (0) target = $region97
    $region96: #{tpu_custom_call.1} parent=1 // pred_region
      _
    $region97: #{tpu_custom_call.1} parent=1 // pred_fallthru
      _
    // Predicated region
    $region98: #{tpu_custom_call.1} parent=1 // pred_check
      _
    $region99: #{tpu_custom_call.1} parent=1 // pred_check_branch
      %5975 = sbr.rel (0) target = $region101
    $region100: #{tpu_custom_call.1} parent=1 // pred_region
      _
    $region101: #{tpu_custom_call.1} parent=1 // pred_fallthru
      _
    %5976 = vsyncpa [#allocation7], 1

</llo_original>
